<compile_context>
chip_gen: v5e
topology: v5e:2x2
jax: 0.10.0
libtpu: 0.0.40
codegen_flags: <defaults>
</compile_context>

<pallas_src>
import jax
import jax.numpy as jnp
from jax.experimental import pallas as pl
from jax.experimental.pallas import tpu as pltpu


def _double_conv_kernel(x_ref, mask_ref, w1_ref, b1_ref, w2_ref, b2_ref,
                        o_ref, xpad_ref, mid_ref):
    # x_ref   : (1, H, W, Cin)    unpadded NHWC input block (one batch element)
    # mask_ref: (H*Wp, 1) f32     1.0 where flat-slab column < W, else 0.0
    # w1_ref  : (9, Cin,  Cmid)   conv1 weights, taps flattened as t = kh*3 + kw
    # b1_ref  : (1, Cmid)
    # w2_ref  : (9, Cmid, Cout)   conv2 weights
    # b2_ref  : (1, Cout)
    # o_ref   : (1, H, W, Cout)
    # xpad_ref: VMEM (Npad, Cin)  f32, flattened zero-padded input  (Hp*Wp + slack rows)
    # mid_ref : VMEM (Npad, Cmid) f32, flattened zero-padded conv1+ReLU output
    H, W = o_ref.shape[1], o_ref.shape[2]
    Cmid = w1_ref.shape[2]
    Cout = w2_ref.shape[2]
    Wp = W + 2
    Nout = H * Wp  # flat-slab rows: p = i*Wp + j ; columns j >= W are don't-care

    # Zero both padded scratches: the halo / slack rows must be exactly 0 so the
    # conv "padding=1" is correct.  Done every grid step (scratch is per-core;
    # with a "parallel" batch axis a core may never execute program_id == 0, so
    # a zero-once guard would be unsafe).  Cost is a small VMEM memset.
    xpad_ref[...] = jnp.zeros_like(xpad_ref)
    mid_ref[...] = jnp.zeros_like(mid_ref)

    # ---- in-kernel padding: scatter input rows into the flat padded scratch ----
    # input row i goes to flat offset (i+1)*Wp + 1  (interior of the halo).
    for i in range(H):
        xpad_ref[pl.ds((i + 1) * Wp + 1, W), :] = (
            x_ref[0, i, :, :].astype(jnp.float32))

    valid = mask_ref[...]  # (Nout, 1)

    # ---- conv1 + ReLU ------------------------------------------------------
    # Output row p of the flat slab needs xpad[p + kh*Wp + kw] for each tap, so
    # every tap is a plain contiguous slice of the flat scratch (no relayout).
    acc1 = jnp.zeros((Nout, Cmid), jnp.float32)
    for t in range(9):
        off = (t // 3) * Wp + (t % 3)
        acc1 = acc1 + jnp.dot(xpad_ref[pl.ds(off, Nout), :], w1_ref[t],
                              preferred_element_type=jnp.float32)
    h = jnp.maximum(acc1 + b1_ref[...], 0.0)
    # The don't-care columns (j >= W) of the slab land exactly on the halo
    # positions of `mid`; they must be 0 so conv2's padding stays correct.
    h = h * valid
    # Re-base the slab into `mid`'s padded coordinates: flat shift by Wp + 1.
    mid_ref[pl.ds(Wp + 1, Nout), :] = h

    # ---- conv2 + ReLU ------------------------------------------------------
    acc2 = jnp.zeros((Nout, Cout), jnp.float32)
    for t in range(9):
        off = (t // 3) * Wp + (t % 3)
        acc2 = acc2 + jnp.dot(mid_ref[pl.ds(off, Nout), :], w2_ref[t],
                              preferred_element_type=jnp.float32)
    out = jnp.maximum(acc2 + b2_ref[...], 0.0).astype(o_ref.dtype)

    # Compact the flat slab (stride Wp per image row) back to dense (H, W) rows.
    for i in range(H):
        o_ref[0, i, :, :] = out[i * Wp:i * Wp + W, :]


def double_conv_nhwc(x_nhwc, w1, b1, w2, b2):
    """Fused DoubleConv on NHWC input. x: (B,H,W,Cin) -> (B,H,W,Cout)."""
    B, H, W, Cin = x_nhwc.shape
    Cmid = w1.shape[-1]
    Cout = w2.shape[-1]
    Wp, Hp = W + 2, H + 2
    Nout = H * Wp
    n_alloc = Hp * Wp + 8  # padded image + slack so every tap slice stays in bounds

    # Weight/bias reshapes are free XLA reshapes (contiguous dim merges).
    w1r = w1.reshape(9, Cin, Cmid)
    w2r = w2.reshape(9, Cmid, Cout)
    b1r = b1.reshape(1, Cmid)
    b2r = b2.reshape(1, Cout)
    # Validity mask for flat-slab columns (precomputed; tiny constant input).
    p = jnp.arange(Nout, dtype=jnp.int32)
    colmask = ((p % Wp) < W).astype(jnp.float32).reshape(Nout, 1)

    return pl.pallas_call(
        _double_conv_kernel,
        out_shape=jax.ShapeDtypeStruct((B, H, W, Cout), x_nhwc.dtype),
        grid_spec=pltpu.PrefetchScalarGridSpec(
            num_scalar_prefetch=0,
            grid=(B,),
            in_specs=[
                pl.BlockSpec((1, H, W, Cin), lambda b: (b, 0, 0, 0)),
                pl.BlockSpec((Nout, 1), lambda b: (0, 0)),
                pl.BlockSpec((9, Cin, Cmid), lambda b: (0, 0, 0)),
                pl.BlockSpec((1, Cmid), lambda b: (0, 0)),
                pl.BlockSpec((9, Cmid, Cout), lambda b: (0, 0, 0)),
                pl.BlockSpec((1, Cout), lambda b: (0, 0)),
            ],
            out_specs=pl.BlockSpec((1, H, W, Cout), lambda b: (b, 0, 0, 0)),
            scratch_shapes=[
                pltpu.VMEM((n_alloc, Cin), jnp.float32),   # padded input (flat)
                pltpu.VMEM((n_alloc, Cmid), jnp.float32),  # padded conv1 output (flat)
            ],
        ),
        compiler_params=pltpu.CompilerParams(
            dimension_semantics=("parallel",),   # batch can shard across v7x's 2 TCs
            vmem_limit_bytes=64 * 1024 * 1024,   # explicit scoped-VMEM budget
        ),
    )(x_nhwc, colmask, w1r, b1r, w2r, b2r)


def double_conv_forward(x_nchw, params):
    """PyTorch-compatible entry: NCHW in / NCHW out.

    Prefer double_conv_nhwc end-to-end in a UNet to avoid these two transposes
    (each is a full HBM pass around a memory-bound kernel)."""
    w1, b1, w2, b2 = params
    x = jnp.transpose(x_nchw, (0, 2, 3, 1))        # NCHW -> NHWC
    y = double_conv_nhwc(x, w1, b1, w2, b2)
    return jnp.transpose(y, (0, 3, 1, 2))          # NHWC -> NCHW


def init_double_conv_params(key, in_channels, out_channels, dtype=jnp.float32):
    """Deterministic synthetic init. PyTorch weight (O, I, 3, 3) stored as HWIO (3, 3, I, O)."""
    k1, k2, k3, k4 = jax.random.split(key, 4)
    scale1 = 1.0 / jnp.sqrt(in_channels * 9.0)
    scale2 = 1.0 / jnp.sqrt(out_channels * 9.0)
    w1_oihw = jax.random.uniform(k1, (out_channels, in_channels, 3, 3), dtype,
                                 minval=-scale1, maxval=scale1)
    b1 = jax.random.uniform(k2, (out_channels,), dtype, minval=-scale1, maxval=scale1)
    w2_oihw = jax.random.uniform(k3, (out_channels, out_channels, 3, 3), dtype,
                                 minval=-scale2, maxval=scale2)
    b2 = jax.random.uniform(k4, (out_channels,), dtype, minval=-scale2, maxval=scale2)
    w1 = jnp.transpose(w1_oihw, (2, 3, 1, 0))      # OIHW -> HWIO
    w2 = jnp.transpose(w2_oihw, (2, 3, 1, 0))
    return (w1, b1, w2, b2)


def _reference_double_conv(x_nchw, params):
    """Pure-JAX reference (lax.conv) for correctness check."""
    w1, b1, w2, b2 = params
    dn = ("NHWC", "HWIO", "NHWC")
    x = jnp.transpose(x_nchw, (0, 2, 3, 1))
    y = jax.lax.conv_general_dilated(x, w1, (1, 1), "SAME", dimension_numbers=dn,
                                     precision=jax.lax.Precision.HIGHEST)
    y = jnp.maximum(y + b1, 0.0)
    y = jax.lax.conv_general_dilated(y, w2, (1, 1), "SAME", dimension_numbers=dn,
                                     precision=jax.lax.Precision.HIGHEST)
    y = jnp.maximum(y + b2, 0.0)
    return jnp.transpose(y, (0, 3, 1, 2))


if __name__ == "__main__":
    B, Cin, Cout, H, W = 2, 4, 8, 16, 16
    key = jax.random.PRNGKey(0)
    kx, kp = jax.random.split(key)
    x = jax.random.normal(kx, (B, Cin, H, W), jnp.float32)
    params = init_double_conv_params(kp, Cin, Cout)

    out = jax.jit(double_conv_forward)(x, params)
    out = jax.block_until_ready(out)

    ref = _reference_double_conv(x, params)
    assert out.shape == (B, Cout, H, W), out.shape
    assert jnp.allclose(out, ref, atol=1e-3, rtol=1e-3), float(jnp.max(jnp.abs(out - ref)))

    print("KERNEL_OK")
</pallas_src>

<mosaic_0001>
module attributes {stable_mosaic.version = 11 : i64} {
  func.func @_double_conv_kernel(%arg0: i32, %arg1: memref<1x16x16x4xf32, #tpu.memory_space<vmem>>, %arg2: memref<288x1xf32, #tpu.memory_space<vmem>>, %arg3: memref<9x4x8xf32, #tpu.memory_space<vmem>>, %arg4: memref<1x8xf32, #tpu.memory_space<vmem>>, %arg5: memref<9x8x8xf32, #tpu.memory_space<vmem>>, %arg6: memref<1x8xf32, #tpu.memory_space<vmem>>, %arg7: memref<1x16x16x8xf32, #tpu.memory_space<vmem>>, %arg8: memref<332x4xf32, #tpu.memory_space<vmem>>, %arg9: memref<332x8xf32, #tpu.memory_space<vmem>>) attributes {dimension_semantics = [#tpu.dimension_semantics<parallel>], iteration_bounds = array<i64: 2>, scalar_prefetch = 0 : i64, scratch_operands = 2 : i64, tpu.core_type = #tpu.core_type<tc>, window_params = [{transform_indices = @transform_0, window_bounds = array<i64: 1, 16, 16, 4>}, {pipeline_mode = #tpu.pipeline_mode<synchronous>, transform_indices = @transform_1, window_bounds = array<i64: 288, 1>}, {pipeline_mode = #tpu.pipeline_mode<synchronous>, transform_indices = @transform_2, window_bounds = array<i64: 9, 4, 8>}, {pipeline_mode = #tpu.pipeline_mode<synchronous>, transform_indices = @transform_3, window_bounds = array<i64: 1, 8>}, {pipeline_mode = #tpu.pipeline_mode<synchronous>, transform_indices = @transform_4, window_bounds = array<i64: 9, 8, 8>}, {pipeline_mode = #tpu.pipeline_mode<synchronous>, transform_indices = @transform_5, window_bounds = array<i64: 1, 8>}, {transform_indices = @transform_6, window_bounds = array<i64: 1, 16, 16, 8>}]} {
    %cst = arith.constant 0.000000e+00 : f32
    %0 = vector.broadcast %cst : f32 to vector<332x4xf32>
    %c0 = arith.constant 0 : index
    %c0_0 = arith.constant 0 : index
    %1 = vector.load %arg8[%c0, %c0_0] : memref<332x4xf32, #tpu.memory_space<vmem>>, vector<332x4xf32>
    tpu.vector_store %arg8[%c0, %c0_0], %0 {strides = array<i32>} : memref<332x4xf32, #tpu.memory_space<vmem>>, vector<332x4xf32>,
    %cst_1 = arith.constant 0.000000e+00 : f32
    %2 = vector.broadcast %cst_1 : f32 to vector<332x8xf32>
    %c0_2 = arith.constant 0 : index
    %c0_3 = arith.constant 0 : index
    %3 = vector.load %arg9[%c0_2, %c0_3] : memref<332x8xf32, #tpu.memory_space<vmem>>, vector<332x8xf32>
    tpu.vector_store %arg9[%c0_2, %c0_3], %2 {strides = array<i32>} : memref<332x8xf32, #tpu.memory_space<vmem>>, vector<332x8xf32>,
    %c0_4 = arith.constant 0 : index
    %c0_5 = arith.constant 0 : index
    %c0_6 = arith.constant 0 : index
    %c0_7 = arith.constant 0 : index
    %4 = vector.load %arg1[%c0_4, %c0_5, %c0_6, %c0_7] : memref<1x16x16x4xf32, #tpu.memory_space<vmem>>, vector<1x1x16x4xf32>
    %5 = vector.shape_cast %4 : vector<1x1x16x4xf32> to vector<16x4xf32>
    %c19 = arith.constant 19 : index
    %c0_8 = arith.constant 0 : index
    %6 = vector.load %arg8[%c19, %c0_8] : memref<332x4xf32, #tpu.memory_space<vmem>>, vector<16x4xf32>
    tpu.vector_store %arg8[%c19, %c0_8], %5 {strides = array<i32>} : memref<332x4xf32, #tpu.memory_space<vmem>>, vector<16x4xf32>,
    %c0_9 = arith.constant 0 : index
    %c1 = arith.constant 1 : index
    %c0_10 = arith.constant 0 : index
    %c0_11 = arith.constant 0 : index
    %7 = vector.load %arg1[%c0_9, %c1, %c0_10, %c0_11] : memref<1x16x16x4xf32, #tpu.memory_space<vmem>>, vector<1x1x16x4xf32>
    %8 = vector.shape_cast %7 : vector<1x1x16x4xf32> to vector<16x4xf32>
    %c37 = arith.constant 37 : index
    %c0_12 = arith.constant 0 : index
    %9 = vector.load %arg8[%c37, %c0_12] : memref<332x4xf32, #tpu.memory_space<vmem>>, vector<16x4xf32>
    tpu.vector_store %arg8[%c37, %c0_12], %8 {strides = array<i32>} : memref<332x4xf32, #tpu.memory_space<vmem>>, vector<16x4xf32>,
    %c0_13 = arith.constant 0 : index
    %c2 = arith.constant 2 : index
    %c0_14 = arith.constant 0 : index
    %c0_15 = arith.constant 0 : index
    %10 = vector.load %arg1[%c0_13, %c2, %c0_14, %c0_15] : memref<1x16x16x4xf32, #tpu.memory_space<vmem>>, vector<1x1x16x4xf32>
    %11 = vector.shape_cast %10 : vector<1x1x16x4xf32> to vector<16x4xf32>
    %c55 = arith.constant 55 : index
    %c0_16 = arith.constant 0 : index
    %12 = vector.load %arg8[%c55, %c0_16] : memref<332x4xf32, #tpu.memory_space<vmem>>, vector<16x4xf32>
    tpu.vector_store %arg8[%c55, %c0_16], %11 {strides = array<i32>} : memref<332x4xf32, #tpu.memory_space<vmem>>, vector<16x4xf32>,
    %c0_17 = arith.constant 0 : index
    %c3 = arith.constant 3 : index
    %c0_18 = arith.constant 0 : index
    %c0_19 = arith.constant 0 : index
    %13 = vector.load %arg1[%c0_17, %c3, %c0_18, %c0_19] : memref<1x16x16x4xf32, #tpu.memory_space<vmem>>, vector<1x1x16x4xf32>
    %14 = vector.shape_cast %13 : vector<1x1x16x4xf32> to vector<16x4xf32>
    %c73 = arith.constant 73 : index
    %c0_20 = arith.constant 0 : index
    %15 = vector.load %arg8[%c73, %c0_20] : memref<332x4xf32, #tpu.memory_space<vmem>>, vector<16x4xf32>
    tpu.vector_store %arg8[%c73, %c0_20], %14 {strides = array<i32>} : memref<332x4xf32, #tpu.memory_space<vmem>>, vector<16x4xf32>,
    %c0_21 = arith.constant 0 : index
    %c4 = arith.constant 4 : index
    %c0_22 = arith.constant 0 : index
    %c0_23 = arith.constant 0 : index
    %16 = vector.load %arg1[%c0_21, %c4, %c0_22, %c0_23] : memref<1x16x16x4xf32, #tpu.memory_space<vmem>>, vector<1x1x16x4xf32>
    %17 = vector.shape_cast %16 : vector<1x1x16x4xf32> to vector<16x4xf32>
    %c91 = arith.constant 91 : index
    %c0_24 = arith.constant 0 : index
    %18 = vector.load %arg8[%c91, %c0_24] : memref<332x4xf32, #tpu.memory_space<vmem>>, vector<16x4xf32>
    tpu.vector_store %arg8[%c91, %c0_24], %17 {strides = array<i32>} : memref<332x4xf32, #tpu.memory_space<vmem>>, vector<16x4xf32>,
    %c0_25 = arith.constant 0 : index
    %c5 = arith.constant 5 : index
    %c0_26 = arith.constant 0 : index
    %c0_27 = arith.constant 0 : index
    %19 = vector.load %arg1[%c0_25, %c5, %c0_26, %c0_27] : memref<1x16x16x4xf32, #tpu.memory_space<vmem>>, vector<1x1x16x4xf32>
    %20 = vector.shape_cast %19 : vector<1x1x16x4xf32> to vector<16x4xf32>
    %c109 = arith.constant 109 : index
    %c0_28 = arith.constant 0 : index
    %21 = vector.load %arg8[%c109, %c0_28] : memref<332x4xf32, #tpu.memory_space<vmem>>, vector<16x4xf32>
    tpu.vector_store %arg8[%c109, %c0_28], %20 {strides = array<i32>} : memref<332x4xf32, #tpu.memory_space<vmem>>, vector<16x4xf32>,
    %c0_29 = arith.constant 0 : index
    %c6 = arith.constant 6 : index
    %c0_30 = arith.constant 0 : index
    %c0_31 = arith.constant 0 : index
    %22 = vector.load %arg1[%c0_29, %c6, %c0_30, %c0_31] : memref<1x16x16x4xf32, #tpu.memory_space<vmem>>, vector<1x1x16x4xf32>
    %23 = vector.shape_cast %22 : vector<1x1x16x4xf32> to vector<16x4xf32>
    %c127 = arith.constant 127 : index
    %c0_32 = arith.constant 0 : index
    %24 = vector.load %arg8[%c127, %c0_32] : memref<332x4xf32, #tpu.memory_space<vmem>>, vector<16x4xf32>
    tpu.vector_store %arg8[%c127, %c0_32], %23 {strides = array<i32>} : memref<332x4xf32, #tpu.memory_space<vmem>>, vector<16x4xf32>,
    %c0_33 = arith.constant 0 : index
    %c7 = arith.constant 7 : index
    %c0_34 = arith.constant 0 : index
    %c0_35 = arith.constant 0 : index
    %25 = vector.load %arg1[%c0_33, %c7, %c0_34, %c0_35] : memref<1x16x16x4xf32, #tpu.memory_space<vmem>>, vector<1x1x16x4xf32>
    %26 = vector.shape_cast %25 : vector<1x1x16x4xf32> to vector<16x4xf32>
    %c145 = arith.constant 145 : index
    %c0_36 = arith.constant 0 : index
    %27 = vector.load %arg8[%c145, %c0_36] : memref<332x4xf32, #tpu.memory_space<vmem>>, vector<16x4xf32>
    tpu.vector_store %arg8[%c145, %c0_36], %26 {strides = array<i32>} : memref<332x4xf32, #tpu.memory_space<vmem>>, vector<16x4xf32>,
    %c0_37 = arith.constant 0 : index
    %c8 = arith.constant 8 : index
    %c0_38 = arith.constant 0 : index
    %c0_39 = arith.constant 0 : index
    %28 = vector.load %arg1[%c0_37, %c8, %c0_38, %c0_39] : memref<1x16x16x4xf32, #tpu.memory_space<vmem>>, vector<1x1x16x4xf32>
    %29 = vector.shape_cast %28 : vector<1x1x16x4xf32> to vector<16x4xf32>
    %c163 = arith.constant 163 : index
    %c0_40 = arith.constant 0 : index
    %30 = vector.load %arg8[%c163, %c0_40] : memref<332x4xf32, #tpu.memory_space<vmem>>, vector<16x4xf32>
    tpu.vector_store %arg8[%c163, %c0_40], %29 {strides = array<i32>} : memref<332x4xf32, #tpu.memory_space<vmem>>, vector<16x4xf32>,
    %c0_41 = arith.constant 0 : index
    %c9 = arith.constant 9 : index
    %c0_42 = arith.constant 0 : index
    %c0_43 = arith.constant 0 : index
    %31 = vector.load %arg1[%c0_41, %c9, %c0_42, %c0_43] : memref<1x16x16x4xf32, #tpu.memory_space<vmem>>, vector<1x1x16x4xf32>
    %32 = vector.shape_cast %31 : vector<1x1x16x4xf32> to vector<16x4xf32>
    %c181 = arith.constant 181 : index
    %c0_44 = arith.constant 0 : index
    %33 = vector.load %arg8[%c181, %c0_44] : memref<332x4xf32, #tpu.memory_space<vmem>>, vector<16x4xf32>
    tpu.vector_store %arg8[%c181, %c0_44], %32 {strides = array<i32>} : memref<332x4xf32, #tpu.memory_space<vmem>>, vector<16x4xf32>,
    %c0_45 = arith.constant 0 : index
    %c10 = arith.constant 10 : index
    %c0_46 = arith.constant 0 : index
    %c0_47 = arith.constant 0 : index
    %34 = vector.load %arg1[%c0_45, %c10, %c0_46, %c0_47] : memref<1x16x16x4xf32, #tpu.memory_space<vmem>>, vector<1x1x16x4xf32>
    %35 = vector.shape_cast %34 : vector<1x1x16x4xf32> to vector<16x4xf32>
    %c199 = arith.constant 199 : index
    %c0_48 = arith.constant 0 : index
    %36 = vector.load %arg8[%c199, %c0_48] : memref<332x4xf32, #tpu.memory_space<vmem>>, vector<16x4xf32>
    tpu.vector_store %arg8[%c199, %c0_48], %35 {strides = array<i32>} : memref<332x4xf32, #tpu.memory_space<vmem>>, vector<16x4xf32>,
    %c0_49 = arith.constant 0 : index
    %c11 = arith.constant 11 : index
    %c0_50 = arith.constant 0 : index
    %c0_51 = arith.constant 0 : index
    %37 = vector.load %arg1[%c0_49, %c11, %c0_50, %c0_51] : memref<1x16x16x4xf32, #tpu.memory_space<vmem>>, vector<1x1x16x4xf32>
    %38 = vector.shape_cast %37 : vector<1x1x16x4xf32> to vector<16x4xf32>
    %c217 = arith.constant 217 : index
    %c0_52 = arith.constant 0 : index
    %39 = vector.load %arg8[%c217, %c0_52] : memref<332x4xf32, #tpu.memory_space<vmem>>, vector<16x4xf32>
    tpu.vector_store %arg8[%c217, %c0_52], %38 {strides = array<i32>} : memref<332x4xf32, #tpu.memory_space<vmem>>, vector<16x4xf32>,
    %c0_53 = arith.constant 0 : index
    %c12 = arith.constant 12 : index
    %c0_54 = arith.constant 0 : index
    %c0_55 = arith.constant 0 : index
    %40 = vector.load %arg1[%c0_53, %c12, %c0_54, %c0_55] : memref<1x16x16x4xf32, #tpu.memory_space<vmem>>, vector<1x1x16x4xf32>
    %41 = vector.shape_cast %40 : vector<1x1x16x4xf32> to vector<16x4xf32>
    %c235 = arith.constant 235 : index
    %c0_56 = arith.constant 0 : index
    %42 = vector.load %arg8[%c235, %c0_56] : memref<332x4xf32, #tpu.memory_space<vmem>>, vector<16x4xf32>
    tpu.vector_store %arg8[%c235, %c0_56], %41 {strides = array<i32>} : memref<332x4xf32, #tpu.memory_space<vmem>>, vector<16x4xf32>,
    %c0_57 = arith.constant 0 : index
    %c13 = arith.constant 13 : index
    %c0_58 = arith.constant 0 : index
    %c0_59 = arith.constant 0 : index
    %43 = vector.load %arg1[%c0_57, %c13, %c0_58, %c0_59] : memref<1x16x16x4xf32, #tpu.memory_space<vmem>>, vector<1x1x16x4xf32>
    %44 = vector.shape_cast %43 : vector<1x1x16x4xf32> to vector<16x4xf32>
    %c253 = arith.constant 253 : index
    %c0_60 = arith.constant 0 : index
    %45 = vector.load %arg8[%c253, %c0_60] : memref<332x4xf32, #tpu.memory_space<vmem>>, vector<16x4xf32>
    tpu.vector_store %arg8[%c253, %c0_60], %44 {strides = array<i32>} : memref<332x4xf32, #tpu.memory_space<vmem>>, vector<16x4xf32>,
    %c0_61 = arith.constant 0 : index
    %c14 = arith.constant 14 : index
    %c0_62 = arith.constant 0 : index
    %c0_63 = arith.constant 0 : index
    %46 = vector.load %arg1[%c0_61, %c14, %c0_62, %c0_63] : memref<1x16x16x4xf32, #tpu.memory_space<vmem>>, vector<1x1x16x4xf32>
    %47 = vector.shape_cast %46 : vector<1x1x16x4xf32> to vector<16x4xf32>
    %c271 = arith.constant 271 : index
    %c0_64 = arith.constant 0 : index
    %48 = vector.load %arg8[%c271, %c0_64] : memref<332x4xf32, #tpu.memory_space<vmem>>, vector<16x4xf32>
    tpu.vector_store %arg8[%c271, %c0_64], %47 {strides = array<i32>} : memref<332x4xf32, #tpu.memory_space<vmem>>, vector<16x4xf32>,
    %c0_65 = arith.constant 0 : index
    %c15 = arith.constant 15 : index
    %c0_66 = arith.constant 0 : index
    %c0_67 = arith.constant 0 : index
    %49 = vector.load %arg1[%c0_65, %c15, %c0_66, %c0_67] : memref<1x16x16x4xf32, #tpu.memory_space<vmem>>, vector<1x1x16x4xf32>
    %50 = vector.shape_cast %49 : vector<1x1x16x4xf32> to vector<16x4xf32>
    %c289 = arith.constant 289 : index
    %c0_68 = arith.constant 0 : index
    %51 = vector.load %arg8[%c289, %c0_68] : memref<332x4xf32, #tpu.memory_space<vmem>>, vector<16x4xf32>
    tpu.vector_store %arg8[%c289, %c0_68], %50 {strides = array<i32>} : memref<332x4xf32, #tpu.memory_space<vmem>>, vector<16x4xf32>,
    %c0_69 = arith.constant 0 : index
    %c0_70 = arith.constant 0 : index
    %52 = vector.load %arg2[%c0_69, %c0_70] : memref<288x1xf32, #tpu.memory_space<vmem>>, vector<288x1xf32>
    %cst_71 = arith.constant 0.000000e+00 : f32
    %53 = vector.broadcast %cst_71 : f32 to vector<288x8xf32>
    %c0_72 = arith.constant 0 : index
    %c0_73 = arith.constant 0 : index
    %54 = vector.load %arg8[%c0_72, %c0_73] : memref<332x4xf32, #tpu.memory_space<vmem>>, vector<288x4xf32>
    %c0_74 = arith.constant 0 : index
    %c0_75 = arith.constant 0 : index
    %c0_76 = arith.constant 0 : index
    %55 = vector.load %arg3[%c0_74, %c0_75, %c0_76] : memref<9x4x8xf32, #tpu.memory_space<vmem>>, vector<1x4x8xf32>
    %56 = vector.shape_cast %55 : vector<1x4x8xf32> to vector<4x8xf32>
    %cst_77 = arith.constant dense<0.000000e+00> : vector<288x8xf32>
    %57 = tpu.matmul %54, %56, %cst_77 {dimension_numbers = #tpu.dot_dimension_numbers<[1], [0], [0], [1], [0, 0, 1, 1], [], []>} : vector<288x4xf32>, vector<4x8xf32>, vector<288x8xf32> -> vector<288x8xf32>
    %58 = arith.addf %53, %57 : vector<288x8xf32>
    %c1_78 = arith.constant 1 : index
    %c0_79 = arith.constant 0 : index
    %59 = vector.load %arg8[%c1_78, %c0_79] : memref<332x4xf32, #tpu.memory_space<vmem>>, vector<288x4xf32>
    %c1_80 = arith.constant 1 : index
    %c0_81 = arith.constant 0 : index
    %c0_82 = arith.constant 0 : index
    %60 = vector.load %arg3[%c1_80, %c0_81, %c0_82] : memref<9x4x8xf32, #tpu.memory_space<vmem>>, vector<1x4x8xf32>
    %61 = vector.shape_cast %60 : vector<1x4x8xf32> to vector<4x8xf32>
    %cst_83 = arith.constant dense<0.000000e+00> : vector<288x8xf32>
    %62 = tpu.matmul %59, %61, %cst_83 {dimension_numbers = #tpu.dot_dimension_numbers<[1], [0], [0], [1], [0, 0, 1, 1], [], []>} : vector<288x4xf32>, vector<4x8xf32>, vector<288x8xf32> -> vector<288x8xf32>
    %63 = arith.addf %58, %62 : vector<288x8xf32>
    %c2_84 = arith.constant 2 : index
    %c0_85 = arith.constant 0 : index
    %64 = vector.load %arg8[%c2_84, %c0_85] : memref<332x4xf32, #tpu.memory_space<vmem>>, vector<288x4xf32>
    %c2_86 = arith.constant 2 : index
    %c0_87 = arith.constant 0 : index
    %c0_88 = arith.constant 0 : index
    %65 = vector.load %arg3[%c2_86, %c0_87, %c0_88] : memref<9x4x8xf32, #tpu.memory_space<vmem>>, vector<1x4x8xf32>
    %66 = vector.shape_cast %65 : vector<1x4x8xf32> to vector<4x8xf32>
    %cst_89 = arith.constant dense<0.000000e+00> : vector<288x8xf32>
    %67 = tpu.matmul %64, %66, %cst_89 {dimension_numbers = #tpu.dot_dimension_numbers<[1], [0], [0], [1], [0, 0, 1, 1], [], []>} : vector<288x4xf32>, vector<4x8xf32>, vector<288x8xf32> -> vector<288x8xf32>
    %68 = arith.addf %63, %67 : vector<288x8xf32>
    %c18 = arith.constant 18 : index
    %c0_90 = arith.constant 0 : index
    %69 = vector.load %arg8[%c18, %c0_90] : memref<332x4xf32, #tpu.memory_space<vmem>>, vector<288x4xf32>
    %c3_91 = arith.constant 3 : index
    %c0_92 = arith.constant 0 : index
    %c0_93 = arith.constant 0 : index
    %70 = vector.load %arg3[%c3_91, %c0_92, %c0_93] : memref<9x4x8xf32, #tpu.memory_space<vmem>>, vector<1x4x8xf32>
    %71 = vector.shape_cast %70 : vector<1x4x8xf32> to vector<4x8xf32>
    %cst_94 = arith.constant dense<0.000000e+00> : vector<288x8xf32>
    %72 = tpu.matmul %69, %71, %cst_94 {dimension_numbers = #tpu.dot_dimension_numbers<[1], [0], [0], [1], [0, 0, 1, 1], [], []>} : vector<288x4xf32>, vector<4x8xf32>, vector<288x8xf32> -> vector<288x8xf32>
    %73 = arith.addf %68, %72 : vector<288x8xf32>
    %c19_95 = arith.constant 19 : index
    %c0_96 = arith.constant 0 : index
    %74 = vector.load %arg8[%c19_95, %c0_96] : memref<332x4xf32, #tpu.memory_space<vmem>>, vector<288x4xf32>
    %c4_97 = arith.constant 4 : index
    %c0_98 = arith.constant 0 : index
    %c0_99 = arith.constant 0 : index
    %75 = vector.load %arg3[%c4_97, %c0_98, %c0_99] : memref<9x4x8xf32, #tpu.memory_space<vmem>>, vector<1x4x8xf32>
    %76 = vector.shape_cast %75 : vector<1x4x8xf32> to vector<4x8xf32>
    %cst_100 = arith.constant dense<0.000000e+00> : vector<288x8xf32>
    %77 = tpu.matmul %74, %76, %cst_100 {dimension_numbers = #tpu.dot_dimension_numbers<[1], [0], [0], [1], [0, 0, 1, 1], [], []>} : vector<288x4xf32>, vector<4x8xf32>, vector<288x8xf32> -> vector<288x8xf32>
    %78 = arith.addf %73, %77 : vector<288x8xf32>
    %c20 = arith.constant 20 : index
    %c0_101 = arith.constant 0 : index
    %79 = vector.load %arg8[%c20, %c0_101] : memref<332x4xf32, #tpu.memory_space<vmem>>, vector<288x4xf32>
    %c5_102 = arith.constant 5 : index
    %c0_103 = arith.constant 0 : index
    %c0_104 = arith.constant 0 : index
    %80 = vector.load %arg3[%c5_102, %c0_103, %c0_104] : memref<9x4x8xf32, #tpu.memory_space<vmem>>, vector<1x4x8xf32>
    %81 = vector.shape_cast %80 : vector<1x4x8xf32> to vector<4x8xf32>
    %cst_105 = arith.constant dense<0.000000e+00> : vector<288x8xf32>
    %82 = tpu.matmul %79, %81, %cst_105 {dimension_numbers = #tpu.dot_dimension_numbers<[1], [0], [0], [1], [0, 0, 1, 1], [], []>} : vector<288x4xf32>, vector<4x8xf32>, vector<288x8xf32> -> vector<288x8xf32>
    %83 = arith.addf %78, %82 : vector<288x8xf32>
    %c36 = arith.constant 36 : index
    %c0_106 = arith.constant 0 : index
    %84 = vector.load %arg8[%c36, %c0_106] : memref<332x4xf32, #tpu.memory_space<vmem>>, vector<288x4xf32>
    %c6_107 = arith.constant 6 : index
    %c0_108 = arith.constant 0 : index
    %c0_109 = arith.constant 0 : index
    %85 = vector.load %arg3[%c6_107, %c0_108, %c0_109] : memref<9x4x8xf32, #tpu.memory_space<vmem>>, vector<1x4x8xf32>
    %86 = vector.shape_cast %85 : vector<1x4x8xf32> to vector<4x8xf32>
    %cst_110 = arith.constant dense<0.000000e+00> : vector<288x8xf32>
    %87 = tpu.matmul %84, %86, %cst_110 {dimension_numbers = #tpu.dot_dimension_numbers<[1], [0], [0], [1], [0, 0, 1, 1], [], []>} : vector<288x4xf32>, vector<4x8xf32>, vector<288x8xf32> -> vector<288x8xf32>
    %88 = arith.addf %83, %87 : vector<288x8xf32>
    %c37_111 = arith.constant 37 : index
    %c0_112 = arith.constant 0 : index
    %89 = vector.load %arg8[%c37_111, %c0_112] : memref<332x4xf32, #tpu.memory_space<vmem>>, vector<288x4xf32>
    %c7_113 = arith.constant 7 : index
    %c0_114 = arith.constant 0 : index
    %c0_115 = arith.constant 0 : index
    %90 = vector.load %arg3[%c7_113, %c0_114, %c0_115] : memref<9x4x8xf32, #tpu.memory_space<vmem>>, vector<1x4x8xf32>
    %91 = vector.shape_cast %90 : vector<1x4x8xf32> to vector<4x8xf32>
    %cst_116 = arith.constant dense<0.000000e+00> : vector<288x8xf32>
    %92 = tpu.matmul %89, %91, %cst_116 {dimension_numbers = #tpu.dot_dimension_numbers<[1], [0], [0], [1], [0, 0, 1, 1], [], []>} : vector<288x4xf32>, vector<4x8xf32>, vector<288x8xf32> -> vector<288x8xf32>
    %93 = arith.addf %88, %92 : vector<288x8xf32>
    %c38 = arith.constant 38 : index
    %c0_117 = arith.constant 0 : index
    %94 = vector.load %arg8[%c38, %c0_117] : memref<332x4xf32, #tpu.memory_space<vmem>>, vector<288x4xf32>
    %c8_118 = arith.constant 8 : index
    %c0_119 = arith.constant 0 : index
    %c0_120 = arith.constant 0 : index
    %95 = vector.load %arg3[%c8_118, %c0_119, %c0_120] : memref<9x4x8xf32, #tpu.memory_space<vmem>>, vector<1x4x8xf32>
    %96 = vector.shape_cast %95 : vector<1x4x8xf32> to vector<4x8xf32>
    %cst_121 = arith.constant dense<0.000000e+00> : vector<288x8xf32>
    %97 = tpu.matmul %94, %96, %cst_121 {dimension_numbers = #tpu.dot_dimension_numbers<[1], [0], [0], [1], [0, 0, 1, 1], [], []>} : vector<288x4xf32>, vector<4x8xf32>, vector<288x8xf32> -> vector<288x8xf32>
    %98 = arith.addf %93, %97 : vector<288x8xf32>
    %c0_122 = arith.constant 0 : index
    %c0_123 = arith.constant 0 : index
    %99 = vector.load %arg4[%c0_122, %c0_123] : memref<1x8xf32, #tpu.memory_space<vmem>>, vector<1x8xf32>
    %100 = vector.broadcast %99 : vector<1x8xf32> to vector<288x8xf32>
    %101 = arith.addf %98, %100 : vector<288x8xf32>
    %cst_124 = arith.constant 0.000000e+00 : f32
    %102 = vector.broadcast %cst_124 : f32 to vector<288x8xf32>
    %103 = arith.maximumf %101, %102 : vector<288x8xf32>
    %104 = vector.broadcast %52 : vector<288x1xf32> to vector<288x8xf32>
    %105 = arith.mulf %103, %104 : vector<288x8xf32>
    %c19_125 = arith.constant 19 : index
    %c0_126 = arith.constant 0 : index
    %106 = vector.load %arg9[%c19_125, %c0_126] : memref<332x8xf32, #tpu.memory_space<vmem>>, vector<288x8xf32>
    tpu.vector_store %arg9[%c19_125, %c0_126], %105 {strides = array<i32>} : memref<332x8xf32, #tpu.memory_space<vmem>>, vector<288x8xf32>,
    %cst_127 = arith.constant 0.000000e+00 : f32
    %107 = vector.broadcast %cst_127 : f32 to vector<288x8xf32>
    %c0_128 = arith.constant 0 : index
    %c0_129 = arith.constant 0 : index
    %108 = vector.load %arg9[%c0_128, %c0_129] : memref<332x8xf32, #tpu.memory_space<vmem>>, vector<288x8xf32>
    %c0_130 = arith.constant 0 : index
    %c0_131 = arith.constant 0 : index
    %c0_132 = arith.constant 0 : index
    %109 = vector.load %arg5[%c0_130, %c0_131, %c0_132] : memref<9x8x8xf32, #tpu.memory_space<vmem>>, vector<1x8x8xf32>
    %110 = vector.shape_cast %109 : vector<1x8x8xf32> to vector<8x8xf32>
    %cst_133 = arith.constant dense<0.000000e+00> : vector<288x8xf32>
    %111 = tpu.matmul %108, %110, %cst_133 {dimension_numbers = #tpu.dot_dimension_numbers<[1], [0], [0], [1], [0, 0, 1, 1], [], []>} : vector<288x8xf32>, vector<8x8xf32>, vector<288x8xf32> -> vector<288x8xf32>
    %112 = arith.addf %107, %111 : vector<288x8xf32>
    %c1_134 = arith.constant 1 : index
    %c0_135 = arith.constant 0 : index
    %113 = vector.load %arg9[%c1_134, %c0_135] : memref<332x8xf32, #tpu.memory_space<vmem>>, vector<288x8xf32>
    %c1_136 = arith.constant 1 : index
    %c0_137 = arith.constant 0 : index
    %c0_138 = arith.constant 0 : index
    %114 = vector.load %arg5[%c1_136, %c0_137, %c0_138] : memref<9x8x8xf32, #tpu.memory_space<vmem>>, vector<1x8x8xf32>
    %115 = vector.shape_cast %114 : vector<1x8x8xf32> to vector<8x8xf32>
    %cst_139 = arith.constant dense<0.000000e+00> : vector<288x8xf32>
    %116 = tpu.matmul %113, %115, %cst_139 {dimension_numbers = #tpu.dot_dimension_numbers<[1], [0], [0], [1], [0, 0, 1, 1], [], []>} : vector<288x8xf32>, vector<8x8xf32>, vector<288x8xf32> -> vector<288x8xf32>
    %117 = arith.addf %112, %116 : vector<288x8xf32>
    %c2_140 = arith.constant 2 : index
    %c0_141 = arith.constant 0 : index
    %118 = vector.load %arg9[%c2_140, %c0_141] : memref<332x8xf32, #tpu.memory_space<vmem>>, vector<288x8xf32>
    %c2_142 = arith.constant 2 : index
    %c0_143 = arith.constant 0 : index
    %c0_144 = arith.constant 0 : index
    %119 = vector.load %arg5[%c2_142, %c0_143, %c0_144] : memref<9x8x8xf32, #tpu.memory_space<vmem>>, vector<1x8x8xf32>
    %120 = vector.shape_cast %119 : vector<1x8x8xf32> to vector<8x8xf32>
    %cst_145 = arith.constant dense<0.000000e+00> : vector<288x8xf32>
    %121 = tpu.matmul %118, %120, %cst_145 {dimension_numbers = #tpu.dot_dimension_numbers<[1], [0], [0], [1], [0, 0, 1, 1], [], []>} : vector<288x8xf32>, vector<8x8xf32>, vector<288x8xf32> -> vector<288x8xf32>
    %122 = arith.addf %117, %121 : vector<288x8xf32>
    %c18_146 = arith.constant 18 : index
    %c0_147 = arith.constant 0 : index
    %123 = vector.load %arg9[%c18_146, %c0_147] : memref<332x8xf32, #tpu.memory_space<vmem>>, vector<288x8xf32>
    %c3_148 = arith.constant 3 : index
    %c0_149 = arith.constant 0 : index
    %c0_150 = arith.constant 0 : index
    %124 = vector.load %arg5[%c3_148, %c0_149, %c0_150] : memref<9x8x8xf32, #tpu.memory_space<vmem>>, vector<1x8x8xf32>
    %125 = vector.shape_cast %124 : vector<1x8x8xf32> to vector<8x8xf32>
    %cst_151 = arith.constant dense<0.000000e+00> : vector<288x8xf32>
    %126 = tpu.matmul %123, %125, %cst_151 {dimension_numbers = #tpu.dot_dimension_numbers<[1], [0], [0], [1], [0, 0, 1, 1], [], []>} : vector<288x8xf32>, vector<8x8xf32>, vector<288x8xf32> -> vector<288x8xf32>
    %127 = arith.addf %122, %126 : vector<288x8xf32>
    %c19_152 = arith.constant 19 : index
    %c0_153 = arith.constant 0 : index
    %128 = vector.load %arg9[%c19_152, %c0_153] : memref<332x8xf32, #tpu.memory_space<vmem>>, vector<288x8xf32>
    %c4_154 = arith.constant 4 : index
    %c0_155 = arith.constant 0 : index
    %c0_156 = arith.constant 0 : index
    %129 = vector.load %arg5[%c4_154, %c0_155, %c0_156] : memref<9x8x8xf32, #tpu.memory_space<vmem>>, vector<1x8x8xf32>
    %130 = vector.shape_cast %129 : vector<1x8x8xf32> to vector<8x8xf32>
    %cst_157 = arith.constant dense<0.000000e+00> : vector<288x8xf32>
    %131 = tpu.matmul %128, %130, %cst_157 {dimension_numbers = #tpu.dot_dimension_numbers<[1], [0], [0], [1], [0, 0, 1, 1], [], []>} : vector<288x8xf32>, vector<8x8xf32>, vector<288x8xf32> -> vector<288x8xf32>
    %132 = arith.addf %127, %131 : vector<288x8xf32>
    %c20_158 = arith.constant 20 : index
    %c0_159 = arith.constant 0 : index
    %133 = vector.load %arg9[%c20_158, %c0_159] : memref<332x8xf32, #tpu.memory_space<vmem>>, vector<288x8xf32>
    %c5_160 = arith.constant 5 : index
    %c0_161 = arith.constant 0 : index
    %c0_162 = arith.constant 0 : index
    %134 = vector.load %arg5[%c5_160, %c0_161, %c0_162] : memref<9x8x8xf32, #tpu.memory_space<vmem>>, vector<1x8x8xf32>
    %135 = vector.shape_cast %134 : vector<1x8x8xf32> to vector<8x8xf32>
    %cst_163 = arith.constant dense<0.000000e+00> : vector<288x8xf32>
    %136 = tpu.matmul %133, %135, %cst_163 {dimension_numbers = #tpu.dot_dimension_numbers<[1], [0], [0], [1], [0, 0, 1, 1], [], []>} : vector<288x8xf32>, vector<8x8xf32>, vector<288x8xf32> -> vector<288x8xf32>
    %137 = arith.addf %132, %136 : vector<288x8xf32>
    %c36_164 = arith.constant 36 : index
    %c0_165 = arith.constant 0 : index
    %138 = vector.load %arg9[%c36_164, %c0_165] : memref<332x8xf32, #tpu.memory_space<vmem>>, vector<288x8xf32>
    %c6_166 = arith.constant 6 : index
    %c0_167 = arith.constant 0 : index
    %c0_168 = arith.constant 0 : index
    %139 = vector.load %arg5[%c6_166, %c0_167, %c0_168] : memref<9x8x8xf32, #tpu.memory_space<vmem>>, vector<1x8x8xf32>
    %140 = vector.shape_cast %139 : vector<1x8x8xf32> to vector<8x8xf32>
    %cst_169 = arith.constant dense<0.000000e+00> : vector<288x8xf32>
    %141 = tpu.matmul %138, %140, %cst_169 {dimension_numbers = #tpu.dot_dimension_numbers<[1], [0], [0], [1], [0, 0, 1, 1], [], []>} : vector<288x8xf32>, vector<8x8xf32>, vector<288x8xf32> -> vector<288x8xf32>
    %142 = arith.addf %137, %141 : vector<288x8xf32>
    %c37_170 = arith.constant 37 : index
    %c0_171 = arith.constant 0 : index
    %143 = vector.load %arg9[%c37_170, %c0_171] : memref<332x8xf32, #tpu.memory_space<vmem>>, vector<288x8xf32>
    %c7_172 = arith.constant 7 : index
    %c0_173 = arith.constant 0 : index
    %c0_174 = arith.constant 0 : index
    %144 = vector.load %arg5[%c7_172, %c0_173, %c0_174] : memref<9x8x8xf32, #tpu.memory_space<vmem>>, vector<1x8x8xf32>
    %145 = vector.shape_cast %144 : vector<1x8x8xf32> to vector<8x8xf32>
    %cst_175 = arith.constant dense<0.000000e+00> : vector<288x8xf32>
    %146 = tpu.matmul %143, %145, %cst_175 {dimension_numbers = #tpu.dot_dimension_numbers<[1], [0], [0], [1], [0, 0, 1, 1], [], []>} : vector<288x8xf32>, vector<8x8xf32>, vector<288x8xf32> -> vector<288x8xf32>
    %147 = arith.addf %142, %146 : vector<288x8xf32>
    %c38_176 = arith.constant 38 : index
    %c0_177 = arith.constant 0 : index
    %148 = vector.load %arg9[%c38_176, %c0_177] : memref<332x8xf32, #tpu.memory_space<vmem>>, vector<288x8xf32>
    %c8_178 = arith.constant 8 : index
    %c0_179 = arith.constant 0 : index
    %c0_180 = arith.constant 0 : index
    %149 = vector.load %arg5[%c8_178, %c0_179, %c0_180] : memref<9x8x8xf32, #tpu.memory_space<vmem>>, vector<1x8x8xf32>
    %150 = vector.shape_cast %149 : vector<1x8x8xf32> to vector<8x8xf32>
    %cst_181 = arith.constant dense<0.000000e+00> : vector<288x8xf32>
    %151 = tpu.matmul %148, %150, %cst_181 {dimension_numbers = #tpu.dot_dimension_numbers<[1], [0], [0], [1], [0, 0, 1, 1], [], []>} : vector<288x8xf32>, vector<8x8xf32>, vector<288x8xf32> -> vector<288x8xf32>
    %152 = arith.addf %147, %151 : vector<288x8xf32>
    %c0_182 = arith.constant 0 : index
    %c0_183 = arith.constant 0 : index
    %153 = vector.load %arg6[%c0_182, %c0_183] : memref<1x8xf32, #tpu.memory_space<vmem>>, vector<1x8xf32>
    %154 = vector.broadcast %153 : vector<1x8xf32> to vector<288x8xf32>
    %155 = arith.addf %152, %154 : vector<288x8xf32>
    %cst_184 = arith.constant 0.000000e+00 : f32
    %156 = vector.broadcast %cst_184 : f32 to vector<288x8xf32>
    %157 = arith.maximumf %155, %156 : vector<288x8xf32>
    %158 = vector.extract_strided_slice %157 {offsets = [0, 0], sizes = [16, 8], strides = [1, 1]} : vector<288x8xf32> to vector<16x8xf32>
    %c0_185 = arith.constant 0 : index
    %c0_186 = arith.constant 0 : index
    %c0_187 = arith.constant 0 : index
    %c0_188 = arith.constant 0 : index
    %159 = vector.load %arg7[%c0_185, %c0_186, %c0_187, %c0_188] : memref<1x16x16x8xf32, #tpu.memory_space<vmem>>, vector<1x1x16x8xf32>
    %160 = vector.shape_cast %159 : vector<1x1x16x8xf32> to vector<16x8xf32>
    %161 = vector.shape_cast %158 : vector<16x8xf32> to vector<1x1x16x8xf32>
    tpu.vector_store %arg7[%c0_185, %c0_186, %c0_187, %c0_188], %161 {strides = array<i32>} : memref<1x16x16x8xf32, #tpu.memory_space<vmem>>, vector<1x1x16x8xf32>,
    %162 = vector.extract_strided_slice %157 {offsets = [18, 0], sizes = [16, 8], strides = [1, 1]} : vector<288x8xf32> to vector<16x8xf32>
    %c0_189 = arith.constant 0 : index
    %c1_190 = arith.constant 1 : index
    %c0_191 = arith.constant 0 : index
    %c0_192 = arith.constant 0 : index
    %163 = vector.load %arg7[%c0_189, %c1_190, %c0_191, %c0_192] : memref<1x16x16x8xf32, #tpu.memory_space<vmem>>, vector<1x1x16x8xf32>
    %164 = vector.shape_cast %163 : vector<1x1x16x8xf32> to vector<16x8xf32>
    %165 = vector.shape_cast %162 : vector<16x8xf32> to vector<1x1x16x8xf32>
    tpu.vector_store %arg7[%c0_189, %c1_190, %c0_191, %c0_192], %165 {strides = array<i32>} : memref<1x16x16x8xf32, #tpu.memory_space<vmem>>, vector<1x1x16x8xf32>,
    %166 = vector.extract_strided_slice %157 {offsets = [36, 0], sizes = [16, 8], strides = [1, 1]} : vector<288x8xf32> to vector<16x8xf32>
    %c0_193 = arith.constant 0 : index
    %c2_194 = arith.constant 2 : index
    %c0_195 = arith.constant 0 : index
    %c0_196 = arith.constant 0 : index
    %167 = vector.load %arg7[%c0_193, %c2_194, %c0_195, %c0_196] : memref<1x16x16x8xf32, #tpu.memory_space<vmem>>, vector<1x1x16x8xf32>
    %168 = vector.shape_cast %167 : vector<1x1x16x8xf32> to vector<16x8xf32>
    %169 = vector.shape_cast %166 : vector<16x8xf32> to vector<1x1x16x8xf32>
    tpu.vector_store %arg7[%c0_193, %c2_194, %c0_195, %c0_196], %169 {strides = array<i32>} : memref<1x16x16x8xf32, #tpu.memory_space<vmem>>, vector<1x1x16x8xf32>,
    %170 = vector.extract_strided_slice %157 {offsets = [54, 0], sizes = [16, 8], strides = [1, 1]} : vector<288x8xf32> to vector<16x8xf32>
    %c0_197 = arith.constant 0 : index
    %c3_198 = arith.constant 3 : index
    %c0_199 = arith.constant 0 : index
    %c0_200 = arith.constant 0 : index
    %171 = vector.load %arg7[%c0_197, %c3_198, %c0_199, %c0_200] : memref<1x16x16x8xf32, #tpu.memory_space<vmem>>, vector<1x1x16x8xf32>
    %172 = vector.shape_cast %171 : vector<1x1x16x8xf32> to vector<16x8xf32>
    %173 = vector.shape_cast %170 : vector<16x8xf32> to vector<1x1x16x8xf32>
    tpu.vector_store %arg7[%c0_197, %c3_198, %c0_199, %c0_200], %173 {strides = array<i32>} : memref<1x16x16x8xf32, #tpu.memory_space<vmem>>, vector<1x1x16x8xf32>,
    %174 = vector.extract_strided_slice %157 {offsets = [72, 0], sizes = [16, 8], strides = [1, 1]} : vector<288x8xf32> to vector<16x8xf32>
    %c0_201 = arith.constant 0 : index
    %c4_202 = arith.constant 4 : index
    %c0_203 = arith.constant 0 : index
    %c0_204 = arith.constant 0 : index
    %175 = vector.load %arg7[%c0_201, %c4_202, %c0_203, %c0_204] : memref<1x16x16x8xf32, #tpu.memory_space<vmem>>, vector<1x1x16x8xf32>
    %176 = vector.shape_cast %175 : vector<1x1x16x8xf32> to vector<16x8xf32>
    %177 = vector.shape_cast %174 : vector<16x8xf32> to vector<1x1x16x8xf32>
    tpu.vector_store %arg7[%c0_201, %c4_202, %c0_203, %c0_204], %177 {strides = array<i32>} : memref<1x16x16x8xf32, #tpu.memory_space<vmem>>, vector<1x1x16x8xf32>,
    %178 = vector.extract_strided_slice %157 {offsets = [90, 0], sizes = [16, 8], strides = [1, 1]} : vector<288x8xf32> to vector<16x8xf32>
    %c0_205 = arith.constant 0 : index
    %c5_206 = arith.constant 5 : index
    %c0_207 = arith.constant 0 : index
    %c0_208 = arith.constant 0 : index
    %179 = vector.load %arg7[%c0_205, %c5_206, %c0_207, %c0_208] : memref<1x16x16x8xf32, #tpu.memory_space<vmem>>, vector<1x1x16x8xf32>
    %180 = vector.shape_cast %179 : vector<1x1x16x8xf32> to vector<16x8xf32>
    %181 = vector.shape_cast %178 : vector<16x8xf32> to vector<1x1x16x8xf32>
    tpu.vector_store %arg7[%c0_205, %c5_206, %c0_207, %c0_208], %181 {strides = array<i32>} : memref<1x16x16x8xf32, #tpu.memory_space<vmem>>, vector<1x1x16x8xf32>,
    %182 = vector.extract_strided_slice %157 {offsets = [108, 0], sizes = [16, 8], strides = [1, 1]} : vector<288x8xf32> to vector<16x8xf32>
    %c0_209 = arith.constant 0 : index
    %c6_210 = arith.constant 6 : index
    %c0_211 = arith.constant 0 : index
    %c0_212 = arith.constant 0 : index
    %183 = vector.load %arg7[%c0_209, %c6_210, %c0_211, %c0_212] : memref<1x16x16x8xf32, #tpu.memory_space<vmem>>, vector<1x1x16x8xf32>
    %184 = vector.shape_cast %183 : vector<1x1x16x8xf32> to vector<16x8xf32>
    %185 = vector.shape_cast %182 : vector<16x8xf32> to vector<1x1x16x8xf32>
    tpu.vector_store %arg7[%c0_209, %c6_210, %c0_211, %c0_212], %185 {strides = array<i32>} : memref<1x16x16x8xf32, #tpu.memory_space<vmem>>, vector<1x1x16x8xf32>,
    %186 = vector.extract_strided_slice %157 {offsets = [126, 0], sizes = [16, 8], strides = [1, 1]} : vector<288x8xf32> to vector<16x8xf32>
    %c0_213 = arith.constant 0 : index
    %c7_214 = arith.constant 7 : index
    %c0_215 = arith.constant 0 : index
    %c0_216 = arith.constant 0 : index
    %187 = vector.load %arg7[%c0_213, %c7_214, %c0_215, %c0_216] : memref<1x16x16x8xf32, #tpu.memory_space<vmem>>, vector<1x1x16x8xf32>
    %188 = vector.shape_cast %187 : vector<1x1x16x8xf32> to vector<16x8xf32>
    %189 = vector.shape_cast %186 : vector<16x8xf32> to vector<1x1x16x8xf32>
    tpu.vector_store %arg7[%c0_213, %c7_214, %c0_215, %c0_216], %189 {strides = array<i32>} : memref<1x16x16x8xf32, #tpu.memory_space<vmem>>, vector<1x1x16x8xf32>,
    %190 = vector.extract_strided_slice %157 {offsets = [144, 0], sizes = [16, 8], strides = [1, 1]} : vector<288x8xf32> to vector<16x8xf32>
    %c0_217 = arith.constant 0 : index
    %c8_218 = arith.constant 8 : index
    %c0_219 = arith.constant 0 : index
    %c0_220 = arith.constant 0 : index
    %191 = vector.load %arg7[%c0_217, %c8_218, %c0_219, %c0_220] : memref<1x16x16x8xf32, #tpu.memory_space<vmem>>, vector<1x1x16x8xf32>
    %192 = vector.shape_cast %191 : vector<1x1x16x8xf32> to vector<16x8xf32>
    %193 = vector.shape_cast %190 : vector<16x8xf32> to vector<1x1x16x8xf32>
    tpu.vector_store %arg7[%c0_217, %c8_218, %c0_219, %c0_220], %193 {strides = array<i32>} : memref<1x16x16x8xf32, #tpu.memory_space<vmem>>, vector<1x1x16x8xf32>,
    %194 = vector.extract_strided_slice %157 {offsets = [162, 0], sizes = [16, 8], strides = [1, 1]} : vector<288x8xf32> to vector<16x8xf32>
    %c0_221 = arith.constant 0 : index
    %c9_222 = arith.constant 9 : index
    %c0_223 = arith.constant 0 : index
    %c0_224 = arith.constant 0 : index
    %195 = vector.load %arg7[%c0_221, %c9_222, %c0_223, %c0_224] : memref<1x16x16x8xf32, #tpu.memory_space<vmem>>, vector<1x1x16x8xf32>
    %196 = vector.shape_cast %195 : vector<1x1x16x8xf32> to vector<16x8xf32>
    %197 = vector.shape_cast %194 : vector<16x8xf32> to vector<1x1x16x8xf32>
    tpu.vector_store %arg7[%c0_221, %c9_222, %c0_223, %c0_224], %197 {strides = array<i32>} : memref<1x16x16x8xf32, #tpu.memory_space<vmem>>, vector<1x1x16x8xf32>,
    %198 = vector.extract_strided_slice %157 {offsets = [180, 0], sizes = [16, 8], strides = [1, 1]} : vector<288x8xf32> to vector<16x8xf32>
    %c0_225 = arith.constant 0 : index
    %c10_226 = arith.constant 10 : index
    %c0_227 = arith.constant 0 : index
    %c0_228 = arith.constant 0 : index
    %199 = vector.load %arg7[%c0_225, %c10_226, %c0_227, %c0_228] : memref<1x16x16x8xf32, #tpu.memory_space<vmem>>, vector<1x1x16x8xf32>
    %200 = vector.shape_cast %199 : vector<1x1x16x8xf32> to vector<16x8xf32>
    %201 = vector.shape_cast %198 : vector<16x8xf32> to vector<1x1x16x8xf32>
    tpu.vector_store %arg7[%c0_225, %c10_226, %c0_227, %c0_228], %201 {strides = array<i32>} : memref<1x16x16x8xf32, #tpu.memory_space<vmem>>, vector<1x1x16x8xf32>,
    %202 = vector.extract_strided_slice %157 {offsets = [198, 0], sizes = [16, 8], strides = [1, 1]} : vector<288x8xf32> to vector<16x8xf32>
    %c0_229 = arith.constant 0 : index
    %c11_230 = arith.constant 11 : index
    %c0_231 = arith.constant 0 : index
    %c0_232 = arith.constant 0 : index
    %203 = vector.load %arg7[%c0_229, %c11_230, %c0_231, %c0_232] : memref<1x16x16x8xf32, #tpu.memory_space<vmem>>, vector<1x1x16x8xf32>
    %204 = vector.shape_cast %203 : vector<1x1x16x8xf32> to vector<16x8xf32>
    %205 = vector.shape_cast %202 : vector<16x8xf32> to vector<1x1x16x8xf32>
    tpu.vector_store %arg7[%c0_229, %c11_230, %c0_231, %c0_232], %205 {strides = array<i32>} : memref<1x16x16x8xf32, #tpu.memory_space<vmem>>, vector<1x1x16x8xf32>,
    %206 = vector.extract_strided_slice %157 {offsets = [216, 0], sizes = [16, 8], strides = [1, 1]} : vector<288x8xf32> to vector<16x8xf32>
    %c0_233 = arith.constant 0 : index
    %c12_234 = arith.constant 12 : index
    %c0_235 = arith.constant 0 : index
    %c0_236 = arith.constant 0 : index
    %207 = vector.load %arg7[%c0_233, %c12_234, %c0_235, %c0_236] : memref<1x16x16x8xf32, #tpu.memory_space<vmem>>, vector<1x1x16x8xf32>
    %208 = vector.shape_cast %207 : vector<1x1x16x8xf32> to vector<16x8xf32>
    %209 = vector.shape_cast %206 : vector<16x8xf32> to vector<1x1x16x8xf32>
    tpu.vector_store %arg7[%c0_233, %c12_234, %c0_235, %c0_236], %209 {strides = array<i32>} : memref<1x16x16x8xf32, #tpu.memory_space<vmem>>, vector<1x1x16x8xf32>,
    %210 = vector.extract_strided_slice %157 {offsets = [234, 0], sizes = [16, 8], strides = [1, 1]} : vector<288x8xf32> to vector<16x8xf32>
    %c0_237 = arith.constant 0 : index
    %c13_238 = arith.constant 13 : index
    %c0_239 = arith.constant 0 : index
    %c0_240 = arith.constant 0 : index
    %211 = vector.load %arg7[%c0_237, %c13_238, %c0_239, %c0_240] : memref<1x16x16x8xf32, #tpu.memory_space<vmem>>, vector<1x1x16x8xf32>
    %212 = vector.shape_cast %211 : vector<1x1x16x8xf32> to vector<16x8xf32>
    %213 = vector.shape_cast %210 : vector<16x8xf32> to vector<1x1x16x8xf32>
    tpu.vector_store %arg7[%c0_237, %c13_238, %c0_239, %c0_240], %213 {strides = array<i32>} : memref<1x16x16x8xf32, #tpu.memory_space<vmem>>, vector<1x1x16x8xf32>,
    %214 = vector.extract_strided_slice %157 {offsets = [252, 0], sizes = [16, 8], strides = [1, 1]} : vector<288x8xf32> to vector<16x8xf32>
    %c0_241 = arith.constant 0 : index
    %c14_242 = arith.constant 14 : index
    %c0_243 = arith.constant 0 : index
    %c0_244 = arith.constant 0 : index
    %215 = vector.load %arg7[%c0_241, %c14_242, %c0_243, %c0_244] : memref<1x16x16x8xf32, #tpu.memory_space<vmem>>, vector<1x1x16x8xf32>
    %216 = vector.shape_cast %215 : vector<1x1x16x8xf32> to vector<16x8xf32>
    %217 = vector.shape_cast %214 : vector<16x8xf32> to vector<1x1x16x8xf32>
    tpu.vector_store %arg7[%c0_241, %c14_242, %c0_243, %c0_244], %217 {strides = array<i32>} : memref<1x16x16x8xf32, #tpu.memory_space<vmem>>, vector<1x1x16x8xf32>,
    %218 = vector.extract_strided_slice %157 {offsets = [270, 0], sizes = [16, 8], strides = [1, 1]} : vector<288x8xf32> to vector<16x8xf32>
    %c0_245 = arith.constant 0 : index
    %c15_246 = arith.constant 15 : index
    %c0_247 = arith.constant 0 : index
    %c0_248 = arith.constant 0 : index
    %219 = vector.load %arg7[%c0_245, %c15_246, %c0_247, %c0_248] : memref<1x16x16x8xf32, #tpu.memory_space<vmem>>, vector<1x1x16x8xf32>
    %220 = vector.shape_cast %219 : vector<1x1x16x8xf32> to vector<16x8xf32>
    %221 = vector.shape_cast %218 : vector<16x8xf32> to vector<1x1x16x8xf32>
    tpu.vector_store %arg7[%c0_245, %c15_246, %c0_247, %c0_248], %221 {strides = array<i32>} : memref<1x16x16x8xf32, #tpu.memory_space<vmem>>, vector<1x1x16x8xf32>,
    return
  }
  func.func @transform_0(%arg0: i32) -> (i32, i32, i32, i32) {
    %c0_i32 = arith.constant 0 : i32
    %c0_i32_0 = arith.constant 0 : i32
    %c0_i32_1 = arith.constant 0 : i32
    %c0_i32_2 = arith.constant 0 : i32
    return %arg0, %c0_i32, %c0_i32_0, %c0_i32_1 : i32, i32, i32, i32
  }
  func.func @transform_1(%arg0: i32) -> (i32, i32) {
    %c0_i32 = arith.constant 0 : i32
    %c0_i32_0 = arith.constant 0 : i32
    %c0_i32_1 = arith.constant 0 : i32
    return %c0_i32, %c0_i32_0 : i32, i32
  }
  func.func @transform_2(%arg0: i32) -> (i32, i32, i32) {
    %c0_i32 = arith.constant 0 : i32
    %c0_i32_0 = arith.constant 0 : i32
    %c0_i32_1 = arith.constant 0 : i32
    %c0_i32_2 = arith.constant 0 : i32
    return %c0_i32, %c0_i32_0, %c0_i32_1 : i32, i32, i32
  }
  func.func @transform_3(%arg0: i32) -> (i32, i32) {
    %c0_i32 = arith.constant 0 : i32
    %c0_i32_0 = arith.constant 0 : i32
    %c0_i32_1 = arith.constant 0 : i32
    return %c0_i32, %c0_i32_0 : i32, i32
  }
  func.func @transform_4(%arg0: i32) -> (i32, i32, i32) {
    %c0_i32 = arith.constant 0 : i32
    %c0_i32_0 = arith.constant 0 : i32
    %c0_i32_1 = arith.constant 0 : i32
    %c0_i32_2 = arith.constant 0 : i32
    return %c0_i32, %c0_i32_0, %c0_i32_1 : i32, i32, i32
  }
  func.func @transform_5(%arg0: i32) -> (i32, i32) {
    %c0_i32 = arith.constant 0 : i32
    %c0_i32_0 = arith.constant 0 : i32
    %c0_i32_1 = arith.constant 0 : i32
    return %c0_i32, %c0_i32_0 : i32, i32
  }
  func.func @transform_6(%arg0: i32) -> (i32, i32, i32, i32) {
    %c0_i32 = arith.constant 0 : i32
    %c0_i32_0 = arith.constant 0 : i32
    %c0_i32_1 = arith.constant 0 : i32
    %c0_i32_2 = arith.constant 0 : i32
    return %arg0, %c0_i32, %c0_i32_0, %c0_i32_1 : i32, i32, i32, i32
  }
}

</mosaic_0001>

<llo_original>
// kernel: double_conv_forward.1
$region0: #{double_conv_forward.1}
  #allocation0 [shape = 'u32[]', space=smem, size = 0x4, offset = 0x4, fixed_abs, tag = 'smem constant byte address 0x4 - core index']
  #allocation1 [shape = 'u32[72,128]{1,0:T(1,128)}', space=vmem, size = 0x9000, scoped, tag = 'internal scratch']
  #allocation2 [shape = 'f32[332,4]{1,0:T(8,128)}', space=vmem, size = 0x2a000, scoped, tag = 'scratch operand']
  #allocation3 [shape = 'f32[332,8]{1,0:T(8,128)}', space=vmem, size = 0x2a000, scoped, tag = 'scratch operand']
  %s0 = inlined_call_operand.vmem [shape: f32[2,16,16,4], index: 0, kind: input, shape index: {}]
  %s1 = inlined_call_operand.vmem [shape: f32[288,1], index: 1, kind: input, shape index: {}]
  %s2 = inlined_call_operand.vmem [shape: f32[9,4,8], index: 2, kind: input, shape index: {}]
  %s3 = inlined_call_operand.vmem [shape: f32[1,8], index: 3, kind: input, shape index: {}]
  %s4 = inlined_call_operand.vmem [shape: f32[9,8,8], index: 4, kind: input, shape index: {}]
  %s5 = inlined_call_operand.vmem [shape: f32[1,8], index: 5, kind: input, shape index: {}]
  %s6 = inlined_call_operand.vmem [shape: f32[2,16,16,8], index: 6, kind: output, shape index: {}]
  %s7 = sld [smem:[#allocation0]]
  $region57: #{double_conv_forward.1} parent=0
    _
  %s9 = ssub.s32 1, %s7
  %s10 = scalar_select 0, %s9, %s7
  loop: start=0, step=1, limit=4
  $region2: #{double_conv_forward.1} parent=0 // loop_pre_header
    _
  $region3: #{double_conv_forward.1} parent=0 // loop_header
    %s12 = sphi 0, %s16
    %p13 = scmp.ge.s32.totalorder %s12, 4
    %s22 = sphi 0, %s24
    %s25 = sphi 0, %s22
    %s26 = sphi 0, %s25
    %s42 = sphi 0, %s26
    %s46 = sphi 0, %s46
    %s48 = sphi 0, %s46
    %s49 = sphi 0, %s48
    %s63 = sphi 0, %s49
    %s67 = sphi 0, %s67
    %s69 = sphi 0, %s67
    %s70 = sphi 0, %s69
    %s84 = sphi 0, %s70
    %s88 = sphi 0, %s88
    %s90 = sphi 0, %s88
    %s91 = sphi 0, %s90
    %s105 = sphi 0, %s91
    %s109 = sphi 0, %s109
    %s111 = sphi 0, %s109
    %s112 = sphi 0, %s111
    %s126 = sphi 0, %s112
    %s130 = sphi 0, %s130
    %s132 = sphi 0, %s130
    %s133 = sphi 0, %s132
    %s147 = sphi 0, %s133
    %s153 = sphi 0, %s155
    %s156 = sphi 0, %s153
    %s157 = sphi 0, %s156
    %s173 = sphi 0, %s157
  $region4: #{double_conv_forward.1} parent=0 // loop_header_branch
    %15 = sbr.rel (%p13) target = $region8
  $region5: #{double_conv_forward.1} parent=0 // loop_body
    %s17 = ssub.s32 %s12, 1
    %s18 = ssub.s32 %s12, 2
    %s19 = sadd.s32 %s12, 1
    %s20 = ssub.s32 %s12, %s19
    %p21 = scmp.eq.s32.totalorder %s20, 0
    %s23 = sadd.s32 %s22, 1
    %s24 = scalar_select %p21, %s22, %s23
    %p27 = pneg %p21
    %p28 = scmp.eq.s32.totalorder %s12, 1
    %p29 = por %p27, %p28
    %p30 = scmp.ne.s32.totalorder %s22, %s25
    %p31 = scmp.eq.s32.totalorder %s12, 0
    %p32 = por %p30, %p31
    %p33 = scmp.ne.s32.totalorder %s22, %s25
    %p34 = scmp.eq.s32.totalorder %s17, 1
    %p35 = por %p33, %p34
    %p36 = scmp.ne.s32.totalorder %s25, %s26
    %p37 = scmp.eq.s32.totalorder %s17, 0
    %p38 = por %p36, %p37
    %p39 = scmp.ne.s32.totalorder %s25, %s26
    %p40 = scmp.eq.s32.totalorder %s18, 1
    %p41 = por %p39, %p40
    %p43 = scmp.ne.s32.totalorder %s26, %s42
    %p44 = scmp.eq.s32.totalorder %s18, 0
    %p45 = por %p43, %p44
    %s47 = sadd.s32 %s46, 1
    %p50 = scmp.eq.s32.totalorder %s12, 1
    %p51 = scmp.ne.s32.totalorder %s46, %s48
    %p52 = scmp.eq.s32.totalorder %s12, 0
    %p53 = por %p51, %p52
    %p54 = scmp.ne.s32.totalorder %s46, %s48
    %p55 = scmp.eq.s32.totalorder %s17, 1
    %p56 = por %p54, %p55
    %p57 = scmp.ne.s32.totalorder %s48, %s49
    %p58 = scmp.eq.s32.totalorder %s17, 0
    %p59 = por %p57, %p58
    %p60 = scmp.ne.s32.totalorder %s48, %s49
    %p61 = scmp.eq.s32.totalorder %s18, 1
    %p62 = por %p60, %p61
    %p64 = scmp.ne.s32.totalorder %s49, %s63
    %p65 = scmp.eq.s32.totalorder %s18, 0
    %p66 = por %p64, %p65
    %s68 = sadd.s32 %s67, 1
    %p71 = scmp.eq.s32.totalorder %s12, 1
    %p72 = scmp.ne.s32.totalorder %s67, %s69
    %p73 = scmp.eq.s32.totalorder %s12, 0
    %p74 = por %p72, %p73
    %p75 = scmp.ne.s32.totalorder %s67, %s69
    %p76 = scmp.eq.s32.totalorder %s17, 1
    %p77 = por %p75, %p76
    %p78 = scmp.ne.s32.totalorder %s69, %s70
    %p79 = scmp.eq.s32.totalorder %s17, 0
    %p80 = por %p78, %p79
    %p81 = scmp.ne.s32.totalorder %s69, %s70
    %p82 = scmp.eq.s32.totalorder %s18, 1
    %p83 = por %p81, %p82
    %p85 = scmp.ne.s32.totalorder %s70, %s84
    %p86 = scmp.eq.s32.totalorder %s18, 0
    %p87 = por %p85, %p86
    %s89 = sadd.s32 %s88, 1
    %p92 = scmp.eq.s32.totalorder %s12, 1
    %p93 = scmp.ne.s32.totalorder %s88, %s90
    %p94 = scmp.eq.s32.totalorder %s12, 0
    %p95 = por %p93, %p94
    %p96 = scmp.ne.s32.totalorder %s88, %s90
    %p97 = scmp.eq.s32.totalorder %s17, 1
    %p98 = por %p96, %p97
    %p99 = scmp.ne.s32.totalorder %s90, %s91
    %p100 = scmp.eq.s32.totalorder %s17, 0
    %p101 = por %p99, %p100
    %p102 = scmp.ne.s32.totalorder %s90, %s91
    %p103 = scmp.eq.s32.totalorder %s18, 1
    %p104 = por %p102, %p103
    %p106 = scmp.ne.s32.totalorder %s91, %s105
    %p107 = scmp.eq.s32.totalorder %s18, 0
    %p108 = por %p106, %p107
    %s110 = sadd.s32 %s109, 1
    %p113 = scmp.eq.s32.totalorder %s12, 1
    %p114 = scmp.ne.s32.totalorder %s109, %s111
    %p115 = scmp.eq.s32.totalorder %s12, 0
    %p116 = por %p114, %p115
    %p117 = scmp.ne.s32.totalorder %s109, %s111
    %p118 = scmp.eq.s32.totalorder %s17, 1
    %p119 = por %p117, %p118
    %p120 = scmp.ne.s32.totalorder %s111, %s112
    %p121 = scmp.eq.s32.totalorder %s17, 0
    %p122 = por %p120, %p121
    %p123 = scmp.ne.s32.totalorder %s111, %s112
    %p124 = scmp.eq.s32.totalorder %s18, 1
    %p125 = por %p123, %p124
    %p127 = scmp.ne.s32.totalorder %s112, %s126
    %p128 = scmp.eq.s32.totalorder %s18, 0
    %p129 = por %p127, %p128
    %s131 = sadd.s32 %s130, 1
    %p134 = scmp.eq.s32.totalorder %s12, 1
    %p135 = scmp.ne.s32.totalorder %s130, %s132
    %p136 = scmp.eq.s32.totalorder %s12, 0
    %p137 = por %p135, %p136
    %p138 = scmp.ne.s32.totalorder %s130, %s132
    %p139 = scmp.eq.s32.totalorder %s17, 1
    %p140 = por %p138, %p139
    %p141 = scmp.ne.s32.totalorder %s132, %s133
    %p142 = scmp.eq.s32.totalorder %s17, 0
    %p143 = por %p141, %p142
    %p144 = scmp.ne.s32.totalorder %s132, %s133
    %p145 = scmp.eq.s32.totalorder %s18, 1
    %p146 = por %p144, %p145
    %p148 = scmp.ne.s32.totalorder %s133, %s147
    %p149 = scmp.eq.s32.totalorder %s18, 0
    %p150 = por %p148, %p149
    %s151 = ssub.s32 %s12, %s19
    %p152 = scmp.eq.s32.totalorder %s151, 0
    %s154 = sadd.s32 %s153, 1
    %s155 = scalar_select %p152, %s153, %s154
    %p158 = pneg %p152
    %p159 = scmp.eq.s32.totalorder %s12, 1
    %p160 = por %p158, %p159
    %p161 = scmp.ne.s32.totalorder %s153, %s156
    %p162 = scmp.eq.s32.totalorder %s12, 0
    %p163 = por %p161, %p162
    %p164 = scmp.ne.s32.totalorder %s153, %s156
    %p165 = scmp.eq.s32.totalorder %s17, 1
    %p166 = por %p164, %p165
    %p167 = scmp.ne.s32.totalorder %s156, %s157
    %p168 = scmp.eq.s32.totalorder %s17, 0
    %p169 = por %p167, %p168
    %p170 = scmp.ne.s32.totalorder %s156, %s157
    %p171 = scmp.eq.s32.totalorder %s18, 1
    %p172 = por %p170, %p171
    %p174 = scmp.ne.s32.totalorder %s157, %s173
    %p175 = scmp.eq.s32.totalorder %s18, 0
    %p176 = por %p174, %p175
    %p177 = scmp.le.s32.totalorder 1, %s12
    %p178 = scmp.lt.s32.totalorder %s12, 3
    %p179 = pnand %p177, %p178
    %p180 = pneg %p179
    // Predicated region
    $region9: #{double_conv_forward.1} parent=5 // pred_check
      _
    $region10: #{double_conv_forward.1} parent=5 // pred_check_branch
      %182 = sbr.rel (%p179) target = $region12
    $region11: #{double_conv_forward.1} parent=5 // pred_region
      %s183 = ssub.s32 %s12, 1
      // Predicated region
      $region13: #{double_conv_forward.1} parent=11 // pred_check
        %p184 = pneg %p59
      $region14: #{double_conv_forward.1} parent=11 // pred_check_branch
        %186 = sbr.rel (%p184) target = $region16
      $region15: #{double_conv_forward.1} parent=11 // pred_region
        _
      $region16: #{double_conv_forward.1} parent=11 // pred_fallthru
        _
      // Predicated region
      $region17: #{double_conv_forward.1} parent=11 // pred_check
        %p187 = pneg %p80
      $region18: #{double_conv_forward.1} parent=11 // pred_check_branch
        %189 = sbr.rel (%p187) target = $region20
      $region19: #{double_conv_forward.1} parent=11 // pred_region
        _
      $region20: #{double_conv_forward.1} parent=11 // pred_fallthru
        _
      // Predicated region
      $region21: #{double_conv_forward.1} parent=11 // pred_check
        %p190 = pneg %p101
      $region22: #{double_conv_forward.1} parent=11 // pred_check_branch
        %192 = sbr.rel (%p190) target = $region24
      $region23: #{double_conv_forward.1} parent=11 // pred_region
        _
      $region24: #{double_conv_forward.1} parent=11 // pred_fallthru
        _
      // Predicated region
      $region25: #{double_conv_forward.1} parent=11 // pred_check
        %p193 = pneg %p122
      $region26: #{double_conv_forward.1} parent=11 // pred_check_branch
        %195 = sbr.rel (%p193) target = $region28
      $region27: #{double_conv_forward.1} parent=11 // pred_region
        _
      $region28: #{double_conv_forward.1} parent=11 // pred_fallthru
        _
      // Predicated region
      $region29: #{double_conv_forward.1} parent=11 // pred_check
        %p196 = pneg %p143
      $region30: #{double_conv_forward.1} parent=11 // pred_check_branch
        %198 = sbr.rel (%p196) target = $region32
      $region31: #{double_conv_forward.1} parent=11 // pred_region
        _
      $region32: #{double_conv_forward.1} parent=11 // pred_fallthru
        _
    $region12: #{double_conv_forward.1} parent=5 // pred_fallthru
      _
    %p199 = scmp.lt.s32.totalorder %s12, 2
    // Predicated region
    $region33: #{double_conv_forward.1} parent=5 // pred_check
      %p200 = pneg %p199
    $region34: #{double_conv_forward.1} parent=5 // pred_check_branch
      %202 = sbr.rel (%p200) target = $region36
    $region35: #{double_conv_forward.1} parent=5 // pred_region
      // Predicated region
      $region37: #{double_conv_forward.1} parent=35 // pred_check
        %p203 = pneg %p32
      $region38: #{double_conv_forward.1} parent=35 // pred_check_branch
        %205 = sbr.rel (%p203) target = $region40
      $region39: #{double_conv_forward.1} parent=35 // pred_region
        %p206 = scmp.lt.s32.totalorder %s12, 1
        %s207 = scalar_select %p206, %s12, 1
        %s208 = smul.addr %s207, 32
        %s209 = smul.addr %s208, 8
        %s210 = scalar_lea.vmem %s0, %s209
      $region40: #{double_conv_forward.1} parent=35 // pred_fallthru
        _
    $region36: #{double_conv_forward.1} parent=5 // pred_fallthru
      _
    %p211 = scmp.le.s32.totalorder 1, %s12
    %p212 = scmp.lt.s32.totalorder %s12, 3
    %p213 = pnand %p211, %p212
    %p214 = pneg %p213
    // Predicated region
    $region41: #{double_conv_forward.1} parent=5 // pred_check
      _
    $region42: #{double_conv_forward.1} parent=5 // pred_check_branch
      %216 = sbr.rel (%p213) target = $region44
    $region43: #{double_conv_forward.1} parent=5 // pred_region
      %s217 = ssub.s32 %s12, 1
      %p218 = scmp.lt.s32.totalorder %s17, 1
      %s219 = scalar_select %p218, %s17, 1
      %s220 = smul.addr %s219, 32
      %s221 = smul.addr %s220, 8
      %s222 = scalar_lea.vmem %s0, %s221
      %p223 = pneg %p38
      %p224 = pneg %p35
      %p225 = pneg %p59
      %p226 = pneg %p56
      %p227 = pneg %p80
      %p228 = pneg %p77
      %p229 = pneg %p101
      %p230 = pneg %p98
      %p231 = pneg %p122
      %p232 = pneg %p119
      %p233 = pneg %p143
      %p234 = pneg %p140
      %p235 = pneg %p169
      %p236 = pneg %p166
      %p237 = scmp.lt.s32.totalorder %s17, 1
      %s238 = scalar_select %p237, %s17, 1
      %s239 = smul.addr %s238, 32
      %s240 = smul.addr %s239, 8
      %s241 = scalar_lea.vmem %s6, %s240
      %p242 = scmp.lt.s32.totalorder %s17, 1
      %s243 = scalar_select %p242, %s17, 1
      %s244 = smul.addr %s243, 32
      %s245 = smul.addr %s244, 8
      %s246 = scalar_lea.vmem %s0, %s245
      %p247 = scmp.lt.s32.totalorder %s17, 1
      %s248 = scalar_select %p247, %s17, 1
      %s249 = smul.addr %s248, 32
      %s250 = smul.addr %s249, 8
      %s251 = scalar_lea.vmem %s6, %s250
      %vm252 = vcmask 31744
      %253 = vst.msk [vmem:[#allocation2] sm:$0xff] %vm252, 0.0
      %254 = vst.msk [vmem:[#allocation2 + $0x8] sm:$0xff] %vm252, 0.0
      %255 = vst.msk [vmem:[#allocation2 + $0x10] sm:$0xff] %vm252, 0.0
      %256 = vst.msk [vmem:[#allocation2 + $0x18] sm:$0xff] %vm252, 0.0
      %257 = vst.msk [vmem:[#allocation2 + $0x20] sm:$0xff] %vm252, 0.0
      %258 = vst.msk [vmem:[#allocation2 + $0x28] sm:$0xff] %vm252, 0.0
      %259 = vst.msk [vmem:[#allocation2 + $0x30] sm:$0xff] %vm252, 0.0
      %260 = vst.msk [vmem:[#allocation2 + $0x38] sm:$0xff] %vm252, 0.0
      %261 = vst.msk [vmem:[#allocation2 + $0x40] sm:$0xff] %vm252, 0.0
      %262 = vst.msk [vmem:[#allocation2 + $0x48] sm:$0xff] %vm252, 0.0
      %263 = vst.msk [vmem:[#allocation2 + $0x50] sm:$0xff] %vm252, 0.0
      %264 = vst.msk [vmem:[#allocation2 + $0x58] sm:$0xff] %vm252, 0.0
      %265 = vst.msk [vmem:[#allocation2 + $0x60] sm:$0xff] %vm252, 0.0
      %266 = vst.msk [vmem:[#allocation2 + $0x68] sm:$0xff] %vm252, 0.0
      %267 = vst.msk [vmem:[#allocation2 + $0x70] sm:$0xff] %vm252, 0.0
      %268 = vst.msk [vmem:[#allocation2 + $0x78] sm:$0xff] %vm252, 0.0
      %269 = vst.msk [vmem:[#allocation2 + $0x80] sm:$0xff] %vm252, 0.0
      %270 = vst.msk [vmem:[#allocation2 + $0x88] sm:$0xff] %vm252, 0.0
      %271 = vst.msk [vmem:[#allocation2 + $0x90] sm:$0xff] %vm252, 0.0
      %272 = vst.msk [vmem:[#allocation2 + $0x98] sm:$0xff] %vm252, 0.0
      %273 = vst.msk [vmem:[#allocation2 + $0xa0] sm:$0xff] %vm252, 0.0
      %274 = vst.msk [vmem:[#allocation2 + $0xa8] sm:$0xff] %vm252, 0.0
      %275 = vst.msk [vmem:[#allocation2 + $0xb0] sm:$0xff] %vm252, 0.0
      %276 = vst.msk [vmem:[#allocation2 + $0xb8] sm:$0xff] %vm252, 0.0
      %277 = vst.msk [vmem:[#allocation2 + $0xc0] sm:$0xff] %vm252, 0.0
      %278 = vst.msk [vmem:[#allocation2 + $0xc8] sm:$0xff] %vm252, 0.0
      %279 = vst.msk [vmem:[#allocation2 + $0xd0] sm:$0xff] %vm252, 0.0
      %280 = vst.msk [vmem:[#allocation2 + $0xd8] sm:$0xff] %vm252, 0.0
      %281 = vst.msk [vmem:[#allocation2 + $0xe0] sm:$0xff] %vm252, 0.0
      %282 = vst.msk [vmem:[#allocation2 + $0xe8] sm:$0xff] %vm252, 0.0
      %283 = vst.msk [vmem:[#allocation2 + $0xf0] sm:$0xff] %vm252, 0.0
      %284 = vst.msk [vmem:[#allocation2 + $0xf8] sm:$0xff] %vm252, 0.0
      %285 = vst.msk [vmem:[#allocation2 + $0x100] sm:$0xff] %vm252, 0.0
      %286 = vst.msk [vmem:[#allocation2 + $0x108] sm:$0xff] %vm252, 0.0
      %287 = vst.msk [vmem:[#allocation2 + $0x110] sm:$0xff] %vm252, 0.0
      %288 = vst.msk [vmem:[#allocation2 + $0x118] sm:$0xff] %vm252, 0.0
      %289 = vst.msk [vmem:[#allocation2 + $0x120] sm:$0xff] %vm252, 0.0
      %290 = vst.msk [vmem:[#allocation2 + $0x128] sm:$0xff] %vm252, 0.0
      %291 = vst.msk [vmem:[#allocation2 + $0x130] sm:$0xff] %vm252, 0.0
      %292 = vst.msk [vmem:[#allocation2 + $0x138] sm:$0xff] %vm252, 0.0
      %293 = vst.msk [vmem:[#allocation2 + $0x140] sm:$0xff] %vm252, 0.0
      %vm294 = vcmask 27648
      %295 = vst.msk [vmem:[#allocation2 + $0x148] sm:$0xf] %vm294, 0.0
      %vm296 = vcmask 64512
      %297 = vst.msk [vmem:[#allocation3] sm:$0xff] %vm296, 0.0
      %298 = vst.msk [vmem:[#allocation3 + $0x8] sm:$0xff] %vm296, 0.0
      %299 = vst.msk [vmem:[#allocation3 + $0x10] sm:$0xff] %vm296, 0.0
      %300 = vst.msk [vmem:[#allocation3 + $0x18] sm:$0xff] %vm296, 0.0
      %301 = vst.msk [vmem:[#allocation3 + $0x20] sm:$0xff] %vm296, 0.0
      %302 = vst.msk [vmem:[#allocation3 + $0x28] sm:$0xff] %vm296, 0.0
      %303 = vst.msk [vmem:[#allocation3 + $0x30] sm:$0xff] %vm296, 0.0
      %304 = vst.msk [vmem:[#allocation3 + $0x38] sm:$0xff] %vm296, 0.0
      %305 = vst.msk [vmem:[#allocation3 + $0x40] sm:$0xff] %vm296, 0.0
      %306 = vst.msk [vmem:[#allocation3 + $0x48] sm:$0xff] %vm296, 0.0
      %307 = vst.msk [vmem:[#allocation3 + $0x50] sm:$0xff] %vm296, 0.0
      %308 = vst.msk [vmem:[#allocation3 + $0x58] sm:$0xff] %vm296, 0.0
      %309 = vst.msk [vmem:[#allocation3 + $0x60] sm:$0xff] %vm296, 0.0
      %310 = vst.msk [vmem:[#allocation3 + $0x68] sm:$0xff] %vm296, 0.0
      %311 = vst.msk [vmem:[#allocation3 + $0x70] sm:$0xff] %vm296, 0.0
      %312 = vst.msk [vmem:[#allocation3 + $0x78] sm:$0xff] %vm296, 0.0
      %313 = vst.msk [vmem:[#allocation3 + $0x80] sm:$0xff] %vm296, 0.0
      %314 = vst.msk [vmem:[#allocation3 + $0x88] sm:$0xff] %vm296, 0.0
      %315 = vst.msk [vmem:[#allocation3 + $0x90] sm:$0xff] %vm296, 0.0
      %316 = vst.msk [vmem:[#allocation3 + $0x98] sm:$0xff] %vm296, 0.0
      %317 = vst.msk [vmem:[#allocation3 + $0xa0] sm:$0xff] %vm296, 0.0
      %318 = vst.msk [vmem:[#allocation3 + $0xa8] sm:$0xff] %vm296, 0.0
      %319 = vst.msk [vmem:[#allocation3 + $0xb0] sm:$0xff] %vm296, 0.0
      %320 = vst.msk [vmem:[#allocation3 + $0xb8] sm:$0xff] %vm296, 0.0
      %321 = vst.msk [vmem:[#allocation3 + $0xc0] sm:$0xff] %vm296, 0.0
      %322 = vst.msk [vmem:[#allocation3 + $0xc8] sm:$0xff] %vm296, 0.0
      %323 = vst.msk [vmem:[#allocation3 + $0xd0] sm:$0xff] %vm296, 0.0
      %324 = vst.msk [vmem:[#allocation3 + $0xd8] sm:$0xff] %vm296, 0.0
      %325 = vst.msk [vmem:[#allocation3 + $0xe0] sm:$0xff] %vm296, 0.0
      %326 = vst.msk [vmem:[#allocation3 + $0xe8] sm:$0xff] %vm296, 0.0
      %327 = vst.msk [vmem:[#allocation3 + $0xf0] sm:$0xff] %vm296, 0.0
      %328 = vst.msk [vmem:[#allocation3 + $0xf8] sm:$0xff] %vm296, 0.0
      %329 = vst.msk [vmem:[#allocation3 + $0x100] sm:$0xff] %vm296, 0.0
      %330 = vst.msk [vmem:[#allocation3 + $0x108] sm:$0xff] %vm296, 0.0
      %331 = vst.msk [vmem:[#allocation3 + $0x110] sm:$0xff] %vm296, 0.0
      %332 = vst.msk [vmem:[#allocation3 + $0x118] sm:$0xff] %vm296, 0.0
      %333 = vst.msk [vmem:[#allocation3 + $0x120] sm:$0xff] %vm296, 0.0
      %334 = vst.msk [vmem:[#allocation3 + $0x128] sm:$0xff] %vm296, 0.0
      %335 = vst.msk [vmem:[#allocation3 + $0x130] sm:$0xff] %vm296, 0.0
      %336 = vst.msk [vmem:[#allocation3 + $0x138] sm:$0xff] %vm296, 0.0
      %337 = vst.msk [vmem:[#allocation3 + $0x140] sm:$0xff] %vm296, 0.0
      %vm338 = vcmask 60416
      %339 = vst.msk [vmem:[#allocation3 + $0x148] sm:$0xf] %vm338, 0.0
      %v340 = vld [vmem:[%s246] sm:$0xff]
      %v341 = vld [vmem:[%s246 + $0x8] sm:$0xff]
      %342 = vst.msk [vmem:[#allocation2 + $0x13] sm:$0xff] %vm252, %v340
      %343 = vst.msk [vmem:[#allocation2 + $0x1b] sm:$0xff] %vm252, %v341
      %s344 = scalar_lea.vmem %s246, 16
      %v345 = vld [vmem:[%s344] sm:$0xff]
      %v346 = vld [vmem:[%s344 + $0x8] sm:$0xff]
      %347 = vst.msk [vmem:[#allocation2 + $0x25] sm:$0xff] %vm252, %v345
      %348 = vst.msk [vmem:[#allocation2 + $0x2d] sm:$0xff] %vm252, %v346
      %s349 = scalar_lea.vmem %s246, 32
      %v350 = vld [vmem:[%s349] sm:$0xff]
      %v351 = vld [vmem:[%s349 + $0x8] sm:$0xff]
      %352 = vst.msk [vmem:[#allocation2 + $0x37] sm:$0xff] %vm252, %v350
      %353 = vst.msk [vmem:[#allocation2 + $0x3f] sm:$0xff] %vm252, %v351
      %s354 = scalar_lea.vmem %s246, 48
      %v355 = vld [vmem:[%s354] sm:$0xff]
      %v356 = vld [vmem:[%s354 + $0x8] sm:$0xff]
      %357 = vst.msk [vmem:[#allocation2 + $0x49] sm:$0xff] %vm252, %v355
      %358 = vst.msk [vmem:[#allocation2 + $0x51] sm:$0xff] %vm252, %v356
      %s359 = scalar_lea.vmem %s246, 64
      %v360 = vld [vmem:[%s359] sm:$0xff]
      %v361 = vld [vmem:[%s359 + $0x8] sm:$0xff]
      %362 = vst.msk [vmem:[#allocation2 + $0x5b] sm:$0xff] %vm252, %v360
      %363 = vst.msk [vmem:[#allocation2 + $0x63] sm:$0xff] %vm252, %v361
      %s364 = scalar_lea.vmem %s246, 80
      %v365 = vld [vmem:[%s364] sm:$0xff]
      %v366 = vld [vmem:[%s364 + $0x8] sm:$0xff]
      %367 = vst.msk [vmem:[#allocation2 + $0x6d] sm:$0xff] %vm252, %v365
      %368 = vst.msk [vmem:[#allocation2 + $0x75] sm:$0xff] %vm252, %v366
      %s369 = scalar_lea.vmem %s246, 96
      %v370 = vld [vmem:[%s369] sm:$0xff]
      %v371 = vld [vmem:[%s369 + $0x8] sm:$0xff]
      %372 = vst.msk [vmem:[#allocation2 + $0x7f] sm:$0xff] %vm252, %v370
      %373 = vst.msk [vmem:[#allocation2 + $0x87] sm:$0xff] %vm252, %v371
      %s374 = scalar_lea.vmem %s246, 112
      %v375 = vld [vmem:[%s374] sm:$0xff]
      %v376 = vld [vmem:[%s374 + $0x8] sm:$0xff]
      %377 = vst.msk [vmem:[#allocation2 + $0x91] sm:$0xff] %vm252, %v375
      %378 = vst.msk [vmem:[#allocation2 + $0x99] sm:$0xff] %vm252, %v376
      %s379 = scalar_lea.vmem %s246, 128
      %v380 = vld [vmem:[%s379] sm:$0xff]
      %v381 = vld [vmem:[%s379 + $0x8] sm:$0xff]
      %382 = vst.msk [vmem:[#allocation2 + $0xa3] sm:$0xff] %vm252, %v380
      %383 = vst.msk [vmem:[#allocation2 + $0xab] sm:$0xff] %vm252, %v381
      %s384 = scalar_lea.vmem %s246, 144
      %v385 = vld [vmem:[%s384] sm:$0xff]
      %v386 = vld [vmem:[%s384 + $0x8] sm:$0xff]
      %387 = vst.msk [vmem:[#allocation2 + $0xb5] sm:$0xff] %vm252, %v385
      %388 = vst.msk [vmem:[#allocation2 + $0xbd] sm:$0xff] %vm252, %v386
      %s389 = scalar_lea.vmem %s246, 160
      %v390 = vld [vmem:[%s389] sm:$0xff]
      %v391 = vld [vmem:[%s389 + $0x8] sm:$0xff]
      %392 = vst.msk [vmem:[#allocation2 + $0xc7] sm:$0xff] %vm252, %v390
      %393 = vst.msk [vmem:[#allocation2 + $0xcf] sm:$0xff] %vm252, %v391
      %s394 = scalar_lea.vmem %s246, 176
      %v395 = vld [vmem:[%s394] sm:$0xff]
      %v396 = vld [vmem:[%s394 + $0x8] sm:$0xff]
      %397 = vst.msk [vmem:[#allocation2 + $0xd9] sm:$0xff] %vm252, %v395
      %398 = vst.msk [vmem:[#allocation2 + $0xe1] sm:$0xff] %vm252, %v396
      %s399 = scalar_lea.vmem %s246, 192
      %v400 = vld [vmem:[%s399] sm:$0xff]
      %v401 = vld [vmem:[%s399 + $0x8] sm:$0xff]
      %402 = vst.msk [vmem:[#allocation2 + $0xeb] sm:$0xff] %vm252, %v400
      %403 = vst.msk [vmem:[#allocation2 + $0xf3] sm:$0xff] %vm252, %v401
      %s404 = scalar_lea.vmem %s246, 208
      %v405 = vld [vmem:[%s404] sm:$0xff]
      %v406 = vld [vmem:[%s404 + $0x8] sm:$0xff]
      %407 = vst.msk [vmem:[#allocation2 + $0xfd] sm:$0xff] %vm252, %v405
      %408 = vst.msk [vmem:[#allocation2 + $0x105] sm:$0xff] %vm252, %v406
      %s409 = scalar_lea.vmem %s246, 224
      %v410 = vld [vmem:[%s409] sm:$0xff]
      %v411 = vld [vmem:[%s409 + $0x8] sm:$0xff]
      %412 = vst.msk [vmem:[#allocation2 + $0x10f] sm:$0xff] %vm252, %v410
      %413 = vst.msk [vmem:[#allocation2 + $0x117] sm:$0xff] %vm252, %v411
      %s414 = scalar_lea.vmem %s246, 240
      %v415 = vld [vmem:[%s414] sm:$0xff]
      %v416 = vld [vmem:[%s414 + $0x8] sm:$0xff]
      %417 = vst.msk [vmem:[#allocation2 + $0x121] sm:$0xff] %vm252, %v415
      %418 = vst.msk [vmem:[#allocation2 + $0x129] sm:$0xff] %vm252, %v416
      %v419 = vld [vmem:[%s1] sm:$0xff]
      %v420 = vld [vmem:[%s1 + $0x8] sm:$0xff]
      %v421 = vld [vmem:[%s1 + $0x10] sm:$0xff]
      %v422 = vld [vmem:[%s1 + $0x18] sm:$0xff]
      %v423 = vld [vmem:[%s1 + $0x20] sm:$0xff]
      %v424 = vld [vmem:[%s1 + $0x28] sm:$0xff]
      %v425 = vld [vmem:[%s1 + $0x30] sm:$0xff]
      %v426 = vld [vmem:[%s1 + $0x38] sm:$0xff]
      %v427 = vld [vmem:[%s1 + $0x40] sm:$0xff]
      %v428 = vld [vmem:[%s1 + $0x48] sm:$0xff]
      %v429 = vld [vmem:[%s1 + $0x50] sm:$0xff]
      %v430 = vld [vmem:[%s1 + $0x58] sm:$0xff]
      %v431 = vld [vmem:[%s1 + $0x60] sm:$0xff]
      %v432 = vld [vmem:[%s1 + $0x68] sm:$0xff]
      %v433 = vld [vmem:[%s1 + $0x70] sm:$0xff]
      %v434 = vld [vmem:[%s1 + $0x78] sm:$0xff]
      %v435 = vld [vmem:[%s1 + $0x80] sm:$0xff]
      %v436 = vld [vmem:[%s1 + $0x88] sm:$0xff]
      %v437 = vld [vmem:[%s1 + $0x90] sm:$0xff]
      %v438 = vld [vmem:[%s1 + $0x98] sm:$0xff]
      %v439 = vld [vmem:[%s1 + $0xa0] sm:$0xff]
      %v440 = vld [vmem:[%s1 + $0xa8] sm:$0xff]
      %v441 = vld [vmem:[%s1 + $0xb0] sm:$0xff]
      %v442 = vld [vmem:[%s1 + $0xb8] sm:$0xff]
      %v443 = vld [vmem:[%s1 + $0xc0] sm:$0xff]
      %v444 = vld [vmem:[%s1 + $0xc8] sm:$0xff]
      %v445 = vld [vmem:[%s1 + $0xd0] sm:$0xff]
      %v446 = vld [vmem:[%s1 + $0xd8] sm:$0xff]
      %v447 = vld [vmem:[%s1 + $0xe0] sm:$0xff]
      %v448 = vld [vmem:[%s1 + $0xe8] sm:$0xff]
      %v449 = vld [vmem:[%s1 + $0xf0] sm:$0xff]
      %v450 = vld [vmem:[%s1 + $0xf8] sm:$0xff]
      %v451 = vld [vmem:[%s1 + $0x100] sm:$0xff]
      %v452 = vld [vmem:[%s1 + $0x108] sm:$0xff]
      %v453 = vld [vmem:[%s1 + $0x110] sm:$0xff]
      %v454 = vld [vmem:[%s1 + $0x118] sm:$0xff]
      %v455 = vld [vmem:[#allocation2] sm:$0xff]
      %v456 = vld [vmem:[#allocation2 + $0x8] sm:$0xff]
      %v457 = vld [vmem:[#allocation2 + $0x10] sm:$0xff]
      %v458 = vld [vmem:[#allocation2 + $0x18] sm:$0xff]
      %v459 = vld [vmem:[#allocation2 + $0x20] sm:$0xff]
      %v460 = vld [vmem:[#allocation2 + $0x28] sm:$0xff]
      %v461 = vld [vmem:[#allocation2 + $0x30] sm:$0xff]
      %v462 = vld [vmem:[#allocation2 + $0x38] sm:$0xff]
      %v463 = vld [vmem:[#allocation2 + $0x40] sm:$0xff]
      %v464 = vld [vmem:[#allocation2 + $0x48] sm:$0xff]
      %v465 = vld [vmem:[#allocation2 + $0x50] sm:$0xff]
      %v466 = vld [vmem:[#allocation2 + $0x58] sm:$0xff]
      %v467 = vld [vmem:[#allocation2 + $0x60] sm:$0xff]
      %v468 = vld [vmem:[#allocation2 + $0x68] sm:$0xff]
      %v469 = vld [vmem:[#allocation2 + $0x70] sm:$0xff]
      %v470 = vld [vmem:[#allocation2 + $0x78] sm:$0xff]
      %v471 = vld [vmem:[#allocation2 + $0x80] sm:$0xff]
      %v472 = vld [vmem:[#allocation2 + $0x88] sm:$0xff]
      %v473 = vld [vmem:[#allocation2 + $0x90] sm:$0xff]
      %v474 = vld [vmem:[#allocation2 + $0x98] sm:$0xff]
      %v475 = vld [vmem:[#allocation2 + $0xa0] sm:$0xff]
      %v476 = vld [vmem:[#allocation2 + $0xa8] sm:$0xff]
      %v477 = vld [vmem:[#allocation2 + $0xb0] sm:$0xff]
      %v478 = vld [vmem:[#allocation2 + $0xb8] sm:$0xff]
      %v479 = vld [vmem:[#allocation2 + $0xc0] sm:$0xff]
      %v480 = vld [vmem:[#allocation2 + $0xc8] sm:$0xff]
      %v481 = vld [vmem:[#allocation2 + $0xd0] sm:$0xff]
      %v482 = vld [vmem:[#allocation2 + $0xd8] sm:$0xff]
      %v483 = vld [vmem:[#allocation2 + $0xe0] sm:$0xff]
      %v484 = vld [vmem:[#allocation2 + $0xe8] sm:$0xff]
      %v485 = vld [vmem:[#allocation2 + $0xf0] sm:$0xff]
      %v486 = vld [vmem:[#allocation2 + $0xf8] sm:$0xff]
      %v487 = vld [vmem:[#allocation2 + $0x100] sm:$0xff]
      %v488 = vld [vmem:[#allocation2 + $0x108] sm:$0xff]
      %v489 = vld [vmem:[#allocation2 + $0x110] sm:$0xff]
      %v490 = vld [vmem:[#allocation2 + $0x118] sm:$0xff]
      %v491 = vld [vmem:[%s2] sm:$0xf]
      %v492 = vld [vmem:[#allocation2 + $0x1] sm:$0xff]
      %v493 = vld [vmem:[#allocation2 + $0x9] sm:$0xff]
      %v494 = vld [vmem:[#allocation2 + $0x11] sm:$0xff]
      %v495 = vld [vmem:[#allocation2 + $0x19] sm:$0xff]
      %v496 = vld [vmem:[#allocation2 + $0x21] sm:$0xff]
      %v497 = vld [vmem:[#allocation2 + $0x29] sm:$0xff]
      %v498 = vld [vmem:[#allocation2 + $0x31] sm:$0xff]
      %v499 = vld [vmem:[#allocation2 + $0x39] sm:$0xff]
      %v500 = vld [vmem:[#allocation2 + $0x41] sm:$0xff]
      %v501 = vld [vmem:[#allocation2 + $0x49] sm:$0xff]
      %v502 = vld [vmem:[#allocation2 + $0x51] sm:$0xff]
      %v503 = vld [vmem:[#allocation2 + $0x59] sm:$0xff]
      %v504 = vld [vmem:[#allocation2 + $0x61] sm:$0xff]
      %v505 = vld [vmem:[#allocation2 + $0x69] sm:$0xff]
      %v506 = vld [vmem:[#allocation2 + $0x71] sm:$0xff]
      %v507 = vld [vmem:[#allocation2 + $0x79] sm:$0xff]
      %v508 = vld [vmem:[#allocation2 + $0x81] sm:$0xff]
      %v509 = vld [vmem:[#allocation2 + $0x89] sm:$0xff]
      %v510 = vld [vmem:[#allocation2 + $0x91] sm:$0xff]
      %v511 = vld [vmem:[#allocation2 + $0x99] sm:$0xff]
      %v512 = vld [vmem:[#allocation2 + $0xa1] sm:$0xff]
      %v513 = vld [vmem:[#allocation2 + $0xa9] sm:$0xff]
      %v514 = vld [vmem:[#allocation2 + $0xb1] sm:$0xff]
      %v515 = vld [vmem:[#allocation2 + $0xb9] sm:$0xff]
      %v516 = vld [vmem:[#allocation2 + $0xc1] sm:$0xff]
      %v517 = vld [vmem:[#allocation2 + $0xc9] sm:$0xff]
      %v518 = vld [vmem:[#allocation2 + $0xd1] sm:$0xff]
      %v519 = vld [vmem:[#allocation2 + $0xd9] sm:$0xff]
      %v520 = vld [vmem:[#allocation2 + $0xe1] sm:$0xff]
      %v521 = vld [vmem:[#allocation2 + $0xe9] sm:$0xff]
      %v522 = vld [vmem:[#allocation2 + $0xf1] sm:$0xff]
      %v523 = vld [vmem:[#allocation2 + $0xf9] sm:$0xff]
      %v524 = vld [vmem:[#allocation2 + $0x101] sm:$0xff]
      %v525 = vld [vmem:[#allocation2 + $0x109] sm:$0xff]
      %v526 = vld [vmem:[#allocation2 + $0x111] sm:$0xff]
      %v527 = vld [vmem:[#allocation2 + $0x119] sm:$0xff]
      %s528 = scalar_lea.vmem %s2, 4
      %v529 = vld [vmem:[%s528] sm:$0xf]
      %v531 = vsel %vm252, %v492, 0
      %v534 = vsel %vm252, %v493, 0
      %v537 = vsel %vm252, %v494, 0
      %v540 = vsel %vm252, %v495, 0
      %v543 = vsel %vm252, %v496, 0
      %v546 = vsel %vm252, %v497, 0
      %v549 = vsel %vm252, %v498, 0
      %v552 = vsel %vm252, %v499, 0
      %v555 = vsel %vm252, %v500, 0
      %v558 = vsel %vm252, %v501, 0
      %v561 = vsel %vm252, %v502, 0
      %v564 = vsel %vm252, %v503, 0
      %v567 = vsel %vm252, %v504, 0
      %v570 = vsel %vm252, %v505, 0
      %v573 = vsel %vm252, %v506, 0
      %v576 = vsel %vm252, %v507, 0
      %v579 = vsel %vm252, %v508, 0
      %v582 = vsel %vm252, %v509, 0
      %v585 = vsel %vm252, %v510, 0
      %v588 = vsel %vm252, %v511, 0
      %v591 = vsel %vm252, %v512, 0
      %v594 = vsel %vm252, %v513, 0
      %v597 = vsel %vm252, %v514, 0
      %v600 = vsel %vm252, %v515, 0
      %v603 = vsel %vm252, %v516, 0
      %v606 = vsel %vm252, %v517, 0
      %v609 = vsel %vm252, %v518, 0
      %v612 = vsel %vm252, %v519, 0
      %v615 = vsel %vm252, %v520, 0
      %v618 = vsel %vm252, %v521, 0
      %v621 = vsel %vm252, %v522, 0
      %v624 = vsel %vm252, %v523, 0
      %v627 = vsel %vm252, %v524, 0
      %v630 = vsel %vm252, %v525, 0
      %v633 = vsel %vm252, %v526, 0
      %v636 = vsel %vm252, %v527, 0
      %vm638 = vcmask 1043456
      %v640 = vsel %vm638, %v529, 0
      %642 = vmatpush.msra.mxu0 0.0
      %643 = vmatpush.msra.mxu0 0.0
      %644 = vmatpush.msra.mxu0 0.0
      %645 = vmatpush.msra.mxu0 0.0
      %646 = vmatpush.msra.mxu0 0.0
      %647 = vmatpush.msra.mxu0 0.0
      %648 = vmatpush.msra.mxu0 0.0
      %649 = vmatpush.msra.mxu0 0.0
      %650 = vmatpush.msra.mxu0 0.0
      %651 = vmatpush.msra.mxu0 0.0
      %652 = vmatpush.msra.mxu0 0.0
      %653 = vmatpush.msra.mxu0 0.0
      %654 = vmatpush.msra.mxu0 0.0
      %655 = vmatpush.msra.mxu0 0.0
      %656 = vmatpush.msra.mxu0 0.0
      %657 = vmatpush.msra.mxu0 %v640
      %658 = vmatmul.f32.gmra.mxu0 %v531
      %v659 = vpop.f32.mrf.mxu0
      %v660 = vadd.f32 0.0, %v659
      %661 = vmatmul.f32.gmra.mxu0 %v534
      %v662 = vpop.f32.mrf.mxu0
      %v663 = vadd.f32 0.0, %v662
      %664 = vmatmul.f32.gmra.mxu0 %v537
      %v665 = vpop.f32.mrf.mxu0
      %v666 = vadd.f32 0.0, %v665
      %667 = vmatmul.f32.gmra.mxu0 %v540
      %v668 = vpop.f32.mrf.mxu0
      %v669 = vadd.f32 0.0, %v668
      %670 = vmatmul.f32.gmra.mxu0 %v543
      %v671 = vpop.f32.mrf.mxu0
      %v672 = vadd.f32 0.0, %v671
      %673 = vmatmul.f32.gmra.mxu0 %v546
      %v674 = vpop.f32.mrf.mxu0
      %v675 = vadd.f32 0.0, %v674
      %676 = vmatmul.f32.gmra.mxu0 %v549
      %v677 = vpop.f32.mrf.mxu0
      %v678 = vadd.f32 0.0, %v677
      %679 = vmatmul.f32.gmra.mxu0 %v552
      %v680 = vpop.f32.mrf.mxu0
      %v681 = vadd.f32 0.0, %v680
      %682 = vmatmul.f32.gmra.mxu0 %v555
      %v683 = vpop.f32.mrf.mxu0
      %v684 = vadd.f32 0.0, %v683
      %685 = vmatmul.f32.gmra.mxu0 %v558
      %v686 = vpop.f32.mrf.mxu0
      %v687 = vadd.f32 0.0, %v686
      %688 = vmatmul.f32.gmra.mxu0 %v561
      %v689 = vpop.f32.mrf.mxu0
      %v690 = vadd.f32 0.0, %v689
      %691 = vmatmul.f32.gmra.mxu0 %v564
      %v692 = vpop.f32.mrf.mxu0
      %v693 = vadd.f32 0.0, %v692
      %694 = vmatmul.f32.gmra.mxu0 %v567
      %v695 = vpop.f32.mrf.mxu0
      %v696 = vadd.f32 0.0, %v695
      %697 = vmatmul.f32.gmra.mxu0 %v570
      %v698 = vpop.f32.mrf.mxu0
      %v699 = vadd.f32 0.0, %v698
      %700 = vmatmul.f32.gmra.mxu0 %v573
      %v701 = vpop.f32.mrf.mxu0
      %v702 = vadd.f32 0.0, %v701
      %703 = vmatmul.f32.gmra.mxu0 %v576
      %v704 = vpop.f32.mrf.mxu0
      %v705 = vadd.f32 0.0, %v704
      %706 = vmatmul.f32.gmra.mxu0 %v579
      %v707 = vpop.f32.mrf.mxu0
      %v708 = vadd.f32 0.0, %v707
      %709 = vmatmul.f32.gmra.mxu0 %v582
      %v710 = vpop.f32.mrf.mxu0
      %v711 = vadd.f32 0.0, %v710
      %712 = vmatmul.f32.gmra.mxu0 %v585
      %v713 = vpop.f32.mrf.mxu0
      %v714 = vadd.f32 0.0, %v713
      %715 = vmatmul.f32.gmra.mxu0 %v588
      %v716 = vpop.f32.mrf.mxu0
      %v717 = vadd.f32 0.0, %v716
      %718 = vmatmul.f32.gmra.mxu0 %v591
      %v719 = vpop.f32.mrf.mxu0
      %v720 = vadd.f32 0.0, %v719
      %721 = vmatmul.f32.gmra.mxu0 %v594
      %v722 = vpop.f32.mrf.mxu0
      %v723 = vadd.f32 0.0, %v722
      %724 = vmatmul.f32.gmra.mxu0 %v597
      %v725 = vpop.f32.mrf.mxu0
      %v726 = vadd.f32 0.0, %v725
      %727 = vmatmul.f32.gmra.mxu0 %v600
      %v728 = vpop.f32.mrf.mxu0
      %v729 = vadd.f32 0.0, %v728
      %730 = vmatmul.f32.gmra.mxu0 %v603
      %v731 = vpop.f32.mrf.mxu0
      %v732 = vadd.f32 0.0, %v731
      %733 = vmatmul.f32.gmra.mxu0 %v606
      %v734 = vpop.f32.mrf.mxu0
      %v735 = vadd.f32 0.0, %v734
      %736 = vmatmul.f32.gmra.mxu0 %v609
      %v737 = vpop.f32.mrf.mxu0
      %v738 = vadd.f32 0.0, %v737
      %739 = vmatmul.f32.gmra.mxu0 %v612
      %v740 = vpop.f32.mrf.mxu0
      %v741 = vadd.f32 0.0, %v740
      %742 = vmatmul.f32.gmra.mxu0 %v615
      %v743 = vpop.f32.mrf.mxu0
      %v744 = vadd.f32 0.0, %v743
      %745 = vmatmul.f32.gmra.mxu0 %v618
      %v746 = vpop.f32.mrf.mxu0
      %v747 = vadd.f32 0.0, %v746
      %748 = vmatmul.f32.gmra.mxu0 %v621
      %v749 = vpop.f32.mrf.mxu0
      %v750 = vadd.f32 0.0, %v749
      %751 = vmatmul.f32.gmra.mxu0 %v624
      %v752 = vpop.f32.mrf.mxu0
      %v753 = vadd.f32 0.0, %v752
      %754 = vmatmul.f32.gmra.mxu0 %v627
      %v755 = vpop.f32.mrf.mxu0
      %v756 = vadd.f32 0.0, %v755
      %757 = vmatmul.f32.gmra.mxu0 %v630
      %v758 = vpop.f32.mrf.mxu0
      %v759 = vadd.f32 0.0, %v758
      %760 = vmatmul.f32.gmra.mxu0 %v633
      %v761 = vpop.f32.mrf.mxu0
      %v762 = vadd.f32 0.0, %v761
      %763 = vmatmul.f32.gmra.mxu0 %v636
      %v764 = vpop.f32.mrf.mxu0
      %v765 = vadd.f32 0.0, %v764
      %766 = vdwg.mxu0
      %v768 = vsel %vm252, %v455, 0
      %v771 = vsel %vm252, %v456, 0
      %v774 = vsel %vm252, %v457, 0
      %v777 = vsel %vm252, %v458, 0
      %v780 = vsel %vm252, %v459, 0
      %v783 = vsel %vm252, %v460, 0
      %v786 = vsel %vm252, %v461, 0
      %v789 = vsel %vm252, %v462, 0
      %v792 = vsel %vm252, %v463, 0
      %v795 = vsel %vm252, %v464, 0
      %v798 = vsel %vm252, %v465, 0
      %v801 = vsel %vm252, %v466, 0
      %v804 = vsel %vm252, %v467, 0
      %v807 = vsel %vm252, %v468, 0
      %v810 = vsel %vm252, %v469, 0
      %v813 = vsel %vm252, %v470, 0
      %v816 = vsel %vm252, %v471, 0
      %v819 = vsel %vm252, %v472, 0
      %v822 = vsel %vm252, %v473, 0
      %v825 = vsel %vm252, %v474, 0
      %v828 = vsel %vm252, %v475, 0
      %v831 = vsel %vm252, %v476, 0
      %v834 = vsel %vm252, %v477, 0
      %v837 = vsel %vm252, %v478, 0
      %v840 = vsel %vm252, %v479, 0
      %v843 = vsel %vm252, %v480, 0
      %v846 = vsel %vm252, %v481, 0
      %v849 = vsel %vm252, %v482, 0
      %v852 = vsel %vm252, %v483, 0
      %v855 = vsel %vm252, %v484, 0
      %v858 = vsel %vm252, %v485, 0
      %v861 = vsel %vm252, %v486, 0
      %v864 = vsel %vm252, %v487, 0
      %v867 = vsel %vm252, %v488, 0
      %v870 = vsel %vm252, %v489, 0
      %v873 = vsel %vm252, %v490, 0
      %v876 = vsel %vm638, %v491, 0
      %878 = vmatpush.msra.mxu0 0.0
      %879 = vmatpush.msra.mxu0 0.0
      %880 = vmatpush.msra.mxu0 0.0
      %881 = vmatpush.msra.mxu0 0.0
      %882 = vmatpush.msra.mxu0 0.0
      %883 = vmatpush.msra.mxu0 0.0
      %884 = vmatpush.msra.mxu0 0.0
      %885 = vmatpush.msra.mxu0 0.0
      %886 = vmatpush.msra.mxu0 0.0
      %887 = vmatpush.msra.mxu0 0.0
      %888 = vmatpush.msra.mxu0 0.0
      %889 = vmatpush.msra.mxu0 0.0
      %890 = vmatpush.msra.mxu0 0.0
      %891 = vmatpush.msra.mxu0 0.0
      %892 = vmatpush.msra.mxu0 0.0
      %893 = vmatpush.msra.mxu0 %v876
      %894 = vmatmul.f32.gmra.mxu0 %v768
      %v895 = vpop.f32.mrf.mxu0
      %v896 = vadd.f32 %v660, %v895
      %897 = vmatmul.f32.gmra.mxu0 %v771
      %v898 = vpop.f32.mrf.mxu0
      %v899 = vadd.f32 %v663, %v898
      %900 = vmatmul.f32.gmra.mxu0 %v774
      %v901 = vpop.f32.mrf.mxu0
      %v902 = vadd.f32 %v666, %v901
      %903 = vmatmul.f32.gmra.mxu0 %v777
      %v904 = vpop.f32.mrf.mxu0
      %v905 = vadd.f32 %v669, %v904
      %906 = vmatmul.f32.gmra.mxu0 %v780
      %v907 = vpop.f32.mrf.mxu0
      %v908 = vadd.f32 %v672, %v907
      %909 = vmatmul.f32.gmra.mxu0 %v783
      %v910 = vpop.f32.mrf.mxu0
      %v911 = vadd.f32 %v675, %v910
      %912 = vmatmul.f32.gmra.mxu0 %v786
      %v913 = vpop.f32.mrf.mxu0
      %v914 = vadd.f32 %v678, %v913
      %915 = vmatmul.f32.gmra.mxu0 %v789
      %v916 = vpop.f32.mrf.mxu0
      %v917 = vadd.f32 %v681, %v916
      %918 = vmatmul.f32.gmra.mxu0 %v792
      %v919 = vpop.f32.mrf.mxu0
      %v920 = vadd.f32 %v684, %v919
      %921 = vmatmul.f32.gmra.mxu0 %v795
      %v922 = vpop.f32.mrf.mxu0
      %v923 = vadd.f32 %v687, %v922
      %924 = vmatmul.f32.gmra.mxu0 %v798
      %v925 = vpop.f32.mrf.mxu0
      %v926 = vadd.f32 %v690, %v925
      %927 = vmatmul.f32.gmra.mxu0 %v801
      %v928 = vpop.f32.mrf.mxu0
      %v929 = vadd.f32 %v693, %v928
      %930 = vmatmul.f32.gmra.mxu0 %v804
      %v931 = vpop.f32.mrf.mxu0
      %v932 = vadd.f32 %v696, %v931
      %933 = vmatmul.f32.gmra.mxu0 %v807
      %v934 = vpop.f32.mrf.mxu0
      %v935 = vadd.f32 %v699, %v934
      %936 = vmatmul.f32.gmra.mxu0 %v810
      %v937 = vpop.f32.mrf.mxu0
      %v938 = vadd.f32 %v702, %v937
      %939 = vmatmul.f32.gmra.mxu0 %v813
      %v940 = vpop.f32.mrf.mxu0
      %v941 = vadd.f32 %v705, %v940
      %942 = vmatmul.f32.gmra.mxu0 %v816
      %v943 = vpop.f32.mrf.mxu0
      %v944 = vadd.f32 %v708, %v943
      %945 = vmatmul.f32.gmra.mxu0 %v819
      %v946 = vpop.f32.mrf.mxu0
      %v947 = vadd.f32 %v711, %v946
      %948 = vmatmul.f32.gmra.mxu0 %v822
      %v949 = vpop.f32.mrf.mxu0
      %v950 = vadd.f32 %v714, %v949
      %951 = vmatmul.f32.gmra.mxu0 %v825
      %v952 = vpop.f32.mrf.mxu0
      %v953 = vadd.f32 %v717, %v952
      %954 = vmatmul.f32.gmra.mxu0 %v828
      %v955 = vpop.f32.mrf.mxu0
      %v956 = vadd.f32 %v720, %v955
      %957 = vmatmul.f32.gmra.mxu0 %v831
      %v958 = vpop.f32.mrf.mxu0
      %v959 = vadd.f32 %v723, %v958
      %960 = vmatmul.f32.gmra.mxu0 %v834
      %v961 = vpop.f32.mrf.mxu0
      %v962 = vadd.f32 %v726, %v961
      %963 = vmatmul.f32.gmra.mxu0 %v837
      %v964 = vpop.f32.mrf.mxu0
      %v965 = vadd.f32 %v729, %v964
      %966 = vmatmul.f32.gmra.mxu0 %v840
      %v967 = vpop.f32.mrf.mxu0
      %v968 = vadd.f32 %v732, %v967
      %969 = vmatmul.f32.gmra.mxu0 %v843
      %v970 = vpop.f32.mrf.mxu0
      %v971 = vadd.f32 %v735, %v970
      %972 = vmatmul.f32.gmra.mxu0 %v846
      %v973 = vpop.f32.mrf.mxu0
      %v974 = vadd.f32 %v738, %v973
      %975 = vmatmul.f32.gmra.mxu0 %v849
      %v976 = vpop.f32.mrf.mxu0
      %v977 = vadd.f32 %v741, %v976
      %978 = vmatmul.f32.gmra.mxu0 %v852
      %v979 = vpop.f32.mrf.mxu0
      %v980 = vadd.f32 %v744, %v979
      %981 = vmatmul.f32.gmra.mxu0 %v855
      %v982 = vpop.f32.mrf.mxu0
      %v983 = vadd.f32 %v747, %v982
      %984 = vmatmul.f32.gmra.mxu0 %v858
      %v985 = vpop.f32.mrf.mxu0
      %v986 = vadd.f32 %v750, %v985
      %987 = vmatmul.f32.gmra.mxu0 %v861
      %v988 = vpop.f32.mrf.mxu0
      %v989 = vadd.f32 %v753, %v988
      %990 = vmatmul.f32.gmra.mxu0 %v864
      %v991 = vpop.f32.mrf.mxu0
      %v992 = vadd.f32 %v756, %v991
      %993 = vmatmul.f32.gmra.mxu0 %v867
      %v994 = vpop.f32.mrf.mxu0
      %v995 = vadd.f32 %v759, %v994
      %996 = vmatmul.f32.gmra.mxu0 %v870
      %v997 = vpop.f32.mrf.mxu0
      %v998 = vadd.f32 %v762, %v997
      %999 = vmatmul.f32.gmra.mxu0 %v873
      %v1000 = vpop.f32.mrf.mxu0
      %v1001 = vadd.f32 %v765, %v1000
      %1002 = vdwg.mxu0
      %v1003 = vld [vmem:[#allocation2 + $0x2] sm:$0xff]
      %v1004 = vld [vmem:[#allocation2 + $0xa] sm:$0xff]
      %v1005 = vld [vmem:[#allocation2 + $0x12] sm:$0xff]
      %v1006 = vld [vmem:[#allocation2 + $0x1a] sm:$0xff]
      %v1007 = vld [vmem:[#allocation2 + $0x22] sm:$0xff]
      %v1008 = vld [vmem:[#allocation2 + $0x2a] sm:$0xff]
      %v1009 = vld [vmem:[#allocation2 + $0x32] sm:$0xff]
      %v1010 = vld [vmem:[#allocation2 + $0x3a] sm:$0xff]
      %v1011 = vld [vmem:[#allocation2 + $0x42] sm:$0xff]
      %v1012 = vld [vmem:[#allocation2 + $0x4a] sm:$0xff]
      %v1013 = vld [vmem:[#allocation2 + $0x52] sm:$0xff]
      %v1014 = vld [vmem:[#allocation2 + $0x5a] sm:$0xff]
      %v1015 = vld [vmem:[#allocation2 + $0x62] sm:$0xff]
      %v1016 = vld [vmem:[#allocation2 + $0x6a] sm:$0xff]
      %v1017 = vld [vmem:[#allocation2 + $0x72] sm:$0xff]
      %v1018 = vld [vmem:[#allocation2 + $0x7a] sm:$0xff]
      %v1019 = vld [vmem:[#allocation2 + $0x82] sm:$0xff]
      %v1020 = vld [vmem:[#allocation2 + $0x8a] sm:$0xff]
      %v1021 = vld [vmem:[#allocation2 + $0x92] sm:$0xff]
      %v1022 = vld [vmem:[#allocation2 + $0x9a] sm:$0xff]
      %v1023 = vld [vmem:[#allocation2 + $0xa2] sm:$0xff]
      %v1024 = vld [vmem:[#allocation2 + $0xaa] sm:$0xff]
      %v1025 = vld [vmem:[#allocation2 + $0xb2] sm:$0xff]
      %v1026 = vld [vmem:[#allocation2 + $0xba] sm:$0xff]
      %v1027 = vld [vmem:[#allocation2 + $0xc2] sm:$0xff]
      %v1028 = vld [vmem:[#allocation2 + $0xca] sm:$0xff]
      %v1029 = vld [vmem:[#allocation2 + $0xd2] sm:$0xff]
      %v1030 = vld [vmem:[#allocation2 + $0xda] sm:$0xff]
      %v1031 = vld [vmem:[#allocation2 + $0xe2] sm:$0xff]
      %v1032 = vld [vmem:[#allocation2 + $0xea] sm:$0xff]
      %v1033 = vld [vmem:[#allocation2 + $0xf2] sm:$0xff]
      %v1034 = vld [vmem:[#allocation2 + $0xfa] sm:$0xff]
      %v1035 = vld [vmem:[#allocation2 + $0x102] sm:$0xff]
      %v1036 = vld [vmem:[#allocation2 + $0x10a] sm:$0xff]
      %v1037 = vld [vmem:[#allocation2 + $0x112] sm:$0xff]
      %v1038 = vld [vmem:[#allocation2 + $0x11a] sm:$0xff]
      %s1039 = scalar_lea.vmem %s2, 8
      %v1040 = vld [vmem:[%s1039] sm:$0xf]
      %v1042 = vsel %vm252, %v1003, 0
      %v1045 = vsel %vm252, %v1004, 0
      %v1048 = vsel %vm252, %v1005, 0
      %v1051 = vsel %vm252, %v1006, 0
      %v1054 = vsel %vm252, %v1007, 0
      %v1057 = vsel %vm252, %v1008, 0
      %v1060 = vsel %vm252, %v1009, 0
      %v1063 = vsel %vm252, %v1010, 0
      %v1066 = vsel %vm252, %v1011, 0
      %v1069 = vsel %vm252, %v1012, 0
      %v1072 = vsel %vm252, %v1013, 0
      %v1075 = vsel %vm252, %v1014, 0
      %v1078 = vsel %vm252, %v1015, 0
      %v1081 = vsel %vm252, %v1016, 0
      %v1084 = vsel %vm252, %v1017, 0
      %v1087 = vsel %vm252, %v1018, 0
      %v1090 = vsel %vm252, %v1019, 0
      %v1093 = vsel %vm252, %v1020, 0
      %v1096 = vsel %vm252, %v1021, 0
      %v1099 = vsel %vm252, %v1022, 0
      %v1102 = vsel %vm252, %v1023, 0
      %v1105 = vsel %vm252, %v1024, 0
      %v1108 = vsel %vm252, %v1025, 0
      %v1111 = vsel %vm252, %v1026, 0
      %v1114 = vsel %vm252, %v1027, 0
      %v1117 = vsel %vm252, %v1028, 0
      %v1120 = vsel %vm252, %v1029, 0
      %v1123 = vsel %vm252, %v1030, 0
      %v1126 = vsel %vm252, %v1031, 0
      %v1129 = vsel %vm252, %v1032, 0
      %v1132 = vsel %vm252, %v1033, 0
      %v1135 = vsel %vm252, %v1034, 0
      %v1138 = vsel %vm252, %v1035, 0
      %v1141 = vsel %vm252, %v1036, 0
      %v1144 = vsel %vm252, %v1037, 0
      %v1147 = vsel %vm252, %v1038, 0
      %v1150 = vsel %vm638, %v1040, 0
      %1152 = vmatpush.msra.mxu0 0.0
      %1153 = vmatpush.msra.mxu0 0.0
      %1154 = vmatpush.msra.mxu0 0.0
      %1155 = vmatpush.msra.mxu0 0.0
      %1156 = vmatpush.msra.mxu0 0.0
      %1157 = vmatpush.msra.mxu0 0.0
      %1158 = vmatpush.msra.mxu0 0.0
      %1159 = vmatpush.msra.mxu0 0.0
      %1160 = vmatpush.msra.mxu0 0.0
      %1161 = vmatpush.msra.mxu0 0.0
      %1162 = vmatpush.msra.mxu0 0.0
      %1163 = vmatpush.msra.mxu0 0.0
      %1164 = vmatpush.msra.mxu0 0.0
      %1165 = vmatpush.msra.mxu0 0.0
      %1166 = vmatpush.msra.mxu0 0.0
      %1167 = vmatpush.msra.mxu0 %v1150
      %1168 = vmatmul.f32.gmra.mxu0 %v1042
      %v1169 = vpop.f32.mrf.mxu0
      %v1170 = vadd.f32 0.0, %v1169
      %1171 = vmatmul.f32.gmra.mxu0 %v1045
      %v1172 = vpop.f32.mrf.mxu0
      %v1173 = vadd.f32 0.0, %v1172
      %1174 = vmatmul.f32.gmra.mxu0 %v1048
      %v1175 = vpop.f32.mrf.mxu0
      %v1176 = vadd.f32 0.0, %v1175
      %1177 = vmatmul.f32.gmra.mxu0 %v1051
      %v1178 = vpop.f32.mrf.mxu0
      %v1179 = vadd.f32 0.0, %v1178
      %1180 = vmatmul.f32.gmra.mxu0 %v1054
      %v1181 = vpop.f32.mrf.mxu0
      %v1182 = vadd.f32 0.0, %v1181
      %1183 = vmatmul.f32.gmra.mxu0 %v1057
      %v1184 = vpop.f32.mrf.mxu0
      %v1185 = vadd.f32 0.0, %v1184
      %1186 = vmatmul.f32.gmra.mxu0 %v1060
      %v1187 = vpop.f32.mrf.mxu0
      %v1188 = vadd.f32 0.0, %v1187
      %1189 = vmatmul.f32.gmra.mxu0 %v1063
      %v1190 = vpop.f32.mrf.mxu0
      %v1191 = vadd.f32 0.0, %v1190
      %1192 = vmatmul.f32.gmra.mxu0 %v1066
      %v1193 = vpop.f32.mrf.mxu0
      %v1194 = vadd.f32 0.0, %v1193
      %1195 = vmatmul.f32.gmra.mxu0 %v1069
      %v1196 = vpop.f32.mrf.mxu0
      %v1197 = vadd.f32 0.0, %v1196
      %1198 = vmatmul.f32.gmra.mxu0 %v1072
      %v1199 = vpop.f32.mrf.mxu0
      %v1200 = vadd.f32 0.0, %v1199
      %1201 = vmatmul.f32.gmra.mxu0 %v1075
      %v1202 = vpop.f32.mrf.mxu0
      %v1203 = vadd.f32 0.0, %v1202
      %1204 = vmatmul.f32.gmra.mxu0 %v1078
      %v1205 = vpop.f32.mrf.mxu0
      %v1206 = vadd.f32 0.0, %v1205
      %1207 = vmatmul.f32.gmra.mxu0 %v1081
      %v1208 = vpop.f32.mrf.mxu0
      %v1209 = vadd.f32 0.0, %v1208
      %1210 = vmatmul.f32.gmra.mxu0 %v1084
      %v1211 = vpop.f32.mrf.mxu0
      %v1212 = vadd.f32 0.0, %v1211
      %1213 = vmatmul.f32.gmra.mxu0 %v1087
      %v1214 = vpop.f32.mrf.mxu0
      %v1215 = vadd.f32 0.0, %v1214
      %1216 = vmatmul.f32.gmra.mxu0 %v1090
      %v1217 = vpop.f32.mrf.mxu0
      %v1218 = vadd.f32 0.0, %v1217
      %1219 = vmatmul.f32.gmra.mxu0 %v1093
      %v1220 = vpop.f32.mrf.mxu0
      %v1221 = vadd.f32 0.0, %v1220
      %1222 = vmatmul.f32.gmra.mxu0 %v1096
      %v1223 = vpop.f32.mrf.mxu0
      %v1224 = vadd.f32 0.0, %v1223
      %1225 = vmatmul.f32.gmra.mxu0 %v1099
      %v1226 = vpop.f32.mrf.mxu0
      %v1227 = vadd.f32 0.0, %v1226
      %1228 = vmatmul.f32.gmra.mxu0 %v1102
      %v1229 = vpop.f32.mrf.mxu0
      %v1230 = vadd.f32 0.0, %v1229
      %1231 = vmatmul.f32.gmra.mxu0 %v1105
      %v1232 = vpop.f32.mrf.mxu0
      %v1233 = vadd.f32 0.0, %v1232
      %1234 = vmatmul.f32.gmra.mxu0 %v1108
      %v1235 = vpop.f32.mrf.mxu0
      %v1236 = vadd.f32 0.0, %v1235
      %1237 = vmatmul.f32.gmra.mxu0 %v1111
      %v1238 = vpop.f32.mrf.mxu0
      %v1239 = vadd.f32 0.0, %v1238
      %1240 = vmatmul.f32.gmra.mxu0 %v1114
      %v1241 = vpop.f32.mrf.mxu0
      %v1242 = vadd.f32 0.0, %v1241
      %1243 = vmatmul.f32.gmra.mxu0 %v1117
      %v1244 = vpop.f32.mrf.mxu0
      %v1245 = vadd.f32 0.0, %v1244
      %1246 = vmatmul.f32.gmra.mxu0 %v1120
      %v1247 = vpop.f32.mrf.mxu0
      %v1248 = vadd.f32 0.0, %v1247
      %1249 = vmatmul.f32.gmra.mxu0 %v1123
      %v1250 = vpop.f32.mrf.mxu0
      %v1251 = vadd.f32 0.0, %v1250
      %1252 = vmatmul.f32.gmra.mxu0 %v1126
      %v1253 = vpop.f32.mrf.mxu0
      %v1254 = vadd.f32 0.0, %v1253
      %1255 = vmatmul.f32.gmra.mxu0 %v1129
      %v1256 = vpop.f32.mrf.mxu0
      %v1257 = vadd.f32 0.0, %v1256
      %1258 = vmatmul.f32.gmra.mxu0 %v1132
      %v1259 = vpop.f32.mrf.mxu0
      %v1260 = vadd.f32 0.0, %v1259
      %1261 = vmatmul.f32.gmra.mxu0 %v1135
      %v1262 = vpop.f32.mrf.mxu0
      %v1263 = vadd.f32 0.0, %v1262
      %1264 = vmatmul.f32.gmra.mxu0 %v1138
      %v1265 = vpop.f32.mrf.mxu0
      %v1266 = vadd.f32 0.0, %v1265
      %1267 = vmatmul.f32.gmra.mxu0 %v1141
      %v1268 = vpop.f32.mrf.mxu0
      %v1269 = vadd.f32 0.0, %v1268
      %1270 = vmatmul.f32.gmra.mxu0 %v1144
      %v1271 = vpop.f32.mrf.mxu0
      %v1272 = vadd.f32 0.0, %v1271
      %1273 = vmatmul.f32.gmra.mxu0 %v1147
      %v1274 = vpop.f32.mrf.mxu0
      %v1275 = vadd.f32 0.0, %v1274
      %1276 = vdwg.mxu0
      %v1277 = vadd.f32 %v896, %v1170
      %v1278 = vadd.f32 %v899, %v1173
      %v1279 = vadd.f32 %v902, %v1176
      %v1280 = vadd.f32 %v905, %v1179
      %v1281 = vadd.f32 %v908, %v1182
      %v1282 = vadd.f32 %v911, %v1185
      %v1283 = vadd.f32 %v914, %v1188
      %v1284 = vadd.f32 %v917, %v1191
      %v1285 = vadd.f32 %v920, %v1194
      %v1286 = vadd.f32 %v923, %v1197
      %v1287 = vadd.f32 %v926, %v1200
      %v1288 = vadd.f32 %v929, %v1203
      %v1289 = vadd.f32 %v932, %v1206
      %v1290 = vadd.f32 %v935, %v1209
      %v1291 = vadd.f32 %v938, %v1212
      %v1292 = vadd.f32 %v941, %v1215
      %v1293 = vadd.f32 %v944, %v1218
      %v1294 = vadd.f32 %v947, %v1221
      %v1295 = vadd.f32 %v950, %v1224
      %v1296 = vadd.f32 %v953, %v1227
      %v1297 = vadd.f32 %v956, %v1230
      %v1298 = vadd.f32 %v959, %v1233
      %v1299 = vadd.f32 %v962, %v1236
      %v1300 = vadd.f32 %v965, %v1239
      %v1301 = vadd.f32 %v968, %v1242
      %v1302 = vadd.f32 %v971, %v1245
      %v1303 = vadd.f32 %v974, %v1248
      %v1304 = vadd.f32 %v977, %v1251
      %v1305 = vadd.f32 %v980, %v1254
      %v1306 = vadd.f32 %v983, %v1257
      %v1307 = vadd.f32 %v986, %v1260
      %v1308 = vadd.f32 %v989, %v1263
      %v1309 = vadd.f32 %v992, %v1266
      %v1310 = vadd.f32 %v995, %v1269
      %v1311 = vadd.f32 %v998, %v1272
      %v1312 = vadd.f32 %v1001, %v1275
      %v1313 = vld [vmem:[#allocation2 + $0x12] sm:$0xff]
      %v1314 = vld [vmem:[#allocation2 + $0x1a] sm:$0xff]
      %v1315 = vld [vmem:[#allocation2 + $0x22] sm:$0xff]
      %v1316 = vld [vmem:[#allocation2 + $0x2a] sm:$0xff]
      %v1317 = vld [vmem:[#allocation2 + $0x32] sm:$0xff]
      %v1318 = vld [vmem:[#allocation2 + $0x3a] sm:$0xff]
      %v1319 = vld [vmem:[#allocation2 + $0x42] sm:$0xff]
      %v1320 = vld [vmem:[#allocation2 + $0x4a] sm:$0xff]
      %v1321 = vld [vmem:[#allocation2 + $0x52] sm:$0xff]
      %v1322 = vld [vmem:[#allocation2 + $0x5a] sm:$0xff]
      %v1323 = vld [vmem:[#allocation2 + $0x62] sm:$0xff]
      %v1324 = vld [vmem:[#allocation2 + $0x6a] sm:$0xff]
      %v1325 = vld [vmem:[#allocation2 + $0x72] sm:$0xff]
      %v1326 = vld [vmem:[#allocation2 + $0x7a] sm:$0xff]
      %v1327 = vld [vmem:[#allocation2 + $0x82] sm:$0xff]
      %v1328 = vld [vmem:[#allocation2 + $0x8a] sm:$0xff]
      %v1329 = vld [vmem:[#allocation2 + $0x92] sm:$0xff]
      %v1330 = vld [vmem:[#allocation2 + $0x9a] sm:$0xff]
      %v1331 = vld [vmem:[#allocation2 + $0xa2] sm:$0xff]
      %v1332 = vld [vmem:[#allocation2 + $0xaa] sm:$0xff]
      %v1333 = vld [vmem:[#allocation2 + $0xb2] sm:$0xff]
      %v1334 = vld [vmem:[#allocation2 + $0xba] sm:$0xff]
      %v1335 = vld [vmem:[#allocation2 + $0xc2] sm:$0xff]
      %v1336 = vld [vmem:[#allocation2 + $0xca] sm:$0xff]
      %v1337 = vld [vmem:[#allocation2 + $0xd2] sm:$0xff]
      %v1338 = vld [vmem:[#allocation2 + $0xda] sm:$0xff]
      %v1339 = vld [vmem:[#allocation2 + $0xe2] sm:$0xff]
      %v1340 = vld [vmem:[#allocation2 + $0xea] sm:$0xff]
      %v1341 = vld [vmem:[#allocation2 + $0xf2] sm:$0xff]
      %v1342 = vld [vmem:[#allocation2 + $0xfa] sm:$0xff]
      %v1343 = vld [vmem:[#allocation2 + $0x102] sm:$0xff]
      %v1344 = vld [vmem:[#allocation2 + $0x10a] sm:$0xff]
      %v1345 = vld [vmem:[#allocation2 + $0x112] sm:$0xff]
      %v1346 = vld [vmem:[#allocation2 + $0x11a] sm:$0xff]
      %v1347 = vld [vmem:[#allocation2 + $0x122] sm:$0xff]
      %v1348 = vld [vmem:[#allocation2 + $0x12a] sm:$0xff]
      %s1349 = scalar_lea.vmem %s2, 12
      %v1350 = vld [vmem:[%s1349] sm:$0xf]
      %v1352 = vsel %vm252, %v1313, 0
      %v1355 = vsel %vm252, %v1314, 0
      %v1358 = vsel %vm252, %v1315, 0
      %v1361 = vsel %vm252, %v1316, 0
      %v1364 = vsel %vm252, %v1317, 0
      %v1367 = vsel %vm252, %v1318, 0
      %v1370 = vsel %vm252, %v1319, 0
      %v1373 = vsel %vm252, %v1320, 0
      %v1376 = vsel %vm252, %v1321, 0
      %v1379 = vsel %vm252, %v1322, 0
      %v1382 = vsel %vm252, %v1323, 0
      %v1385 = vsel %vm252, %v1324, 0
      %v1388 = vsel %vm252, %v1325, 0
      %v1391 = vsel %vm252, %v1326, 0
      %v1394 = vsel %vm252, %v1327, 0
      %v1397 = vsel %vm252, %v1328, 0
      %v1400 = vsel %vm252, %v1329, 0
      %v1403 = vsel %vm252, %v1330, 0
      %v1406 = vsel %vm252, %v1331, 0
      %v1409 = vsel %vm252, %v1332, 0
      %v1412 = vsel %vm252, %v1333, 0
      %v1415 = vsel %vm252, %v1334, 0
      %v1418 = vsel %vm252, %v1335, 0
      %v1421 = vsel %vm252, %v1336, 0
      %v1424 = vsel %vm252, %v1337, 0
      %v1427 = vsel %vm252, %v1338, 0
      %v1430 = vsel %vm252, %v1339, 0
      %v1433 = vsel %vm252, %v1340, 0
      %v1436 = vsel %vm252, %v1341, 0
      %v1439 = vsel %vm252, %v1342, 0
      %v1442 = vsel %vm252, %v1343, 0
      %v1445 = vsel %vm252, %v1344, 0
      %v1448 = vsel %vm252, %v1345, 0
      %v1451 = vsel %vm252, %v1346, 0
      %v1454 = vsel %vm252, %v1347, 0
      %v1457 = vsel %vm252, %v1348, 0
      %v1460 = vsel %vm638, %v1350, 0
      %1462 = vmatpush.msra.mxu0 0.0
      %1463 = vmatpush.msra.mxu0 0.0
      %1464 = vmatpush.msra.mxu0 0.0
      %1465 = vmatpush.msra.mxu0 0.0
      %1466 = vmatpush.msra.mxu0 0.0
      %1467 = vmatpush.msra.mxu0 0.0
      %1468 = vmatpush.msra.mxu0 0.0
      %1469 = vmatpush.msra.mxu0 0.0
      %1470 = vmatpush.msra.mxu0 0.0
      %1471 = vmatpush.msra.mxu0 0.0
      %1472 = vmatpush.msra.mxu0 0.0
      %1473 = vmatpush.msra.mxu0 0.0
      %1474 = vmatpush.msra.mxu0 0.0
      %1475 = vmatpush.msra.mxu0 0.0
      %1476 = vmatpush.msra.mxu0 0.0
      %1477 = vmatpush.msra.mxu0 %v1460
      %1478 = vmatmul.f32.gmra.mxu0 %v1352
      %v1479 = vpop.f32.mrf.mxu0
      %v1480 = vadd.f32 0.0, %v1479
      %1481 = vmatmul.f32.gmra.mxu0 %v1355
      %v1482 = vpop.f32.mrf.mxu0
      %v1483 = vadd.f32 0.0, %v1482
      %1484 = vmatmul.f32.gmra.mxu0 %v1358
      %v1485 = vpop.f32.mrf.mxu0
      %v1486 = vadd.f32 0.0, %v1485
      %1487 = vmatmul.f32.gmra.mxu0 %v1361
      %v1488 = vpop.f32.mrf.mxu0
      %v1489 = vadd.f32 0.0, %v1488
      %1490 = vmatmul.f32.gmra.mxu0 %v1364
      %v1491 = vpop.f32.mrf.mxu0
      %v1492 = vadd.f32 0.0, %v1491
      %1493 = vmatmul.f32.gmra.mxu0 %v1367
      %v1494 = vpop.f32.mrf.mxu0
      %v1495 = vadd.f32 0.0, %v1494
      %1496 = vmatmul.f32.gmra.mxu0 %v1370
      %v1497 = vpop.f32.mrf.mxu0
      %v1498 = vadd.f32 0.0, %v1497
      %1499 = vmatmul.f32.gmra.mxu0 %v1373
      %v1500 = vpop.f32.mrf.mxu0
      %v1501 = vadd.f32 0.0, %v1500
      %1502 = vmatmul.f32.gmra.mxu0 %v1376
      %v1503 = vpop.f32.mrf.mxu0
      %v1504 = vadd.f32 0.0, %v1503
      %1505 = vmatmul.f32.gmra.mxu0 %v1379
      %v1506 = vpop.f32.mrf.mxu0
      %v1507 = vadd.f32 0.0, %v1506
      %1508 = vmatmul.f32.gmra.mxu0 %v1382
      %v1509 = vpop.f32.mrf.mxu0
      %v1510 = vadd.f32 0.0, %v1509
      %1511 = vmatmul.f32.gmra.mxu0 %v1385
      %v1512 = vpop.f32.mrf.mxu0
      %v1513 = vadd.f32 0.0, %v1512
      %1514 = vmatmul.f32.gmra.mxu0 %v1388
      %v1515 = vpop.f32.mrf.mxu0
      %v1516 = vadd.f32 0.0, %v1515
      %1517 = vmatmul.f32.gmra.mxu0 %v1391
      %v1518 = vpop.f32.mrf.mxu0
      %v1519 = vadd.f32 0.0, %v1518
      %1520 = vmatmul.f32.gmra.mxu0 %v1394
      %v1521 = vpop.f32.mrf.mxu0
      %v1522 = vadd.f32 0.0, %v1521
      %1523 = vmatmul.f32.gmra.mxu0 %v1397
      %v1524 = vpop.f32.mrf.mxu0
      %v1525 = vadd.f32 0.0, %v1524
      %1526 = vmatmul.f32.gmra.mxu0 %v1400
      %v1527 = vpop.f32.mrf.mxu0
      %v1528 = vadd.f32 0.0, %v1527
      %1529 = vmatmul.f32.gmra.mxu0 %v1403
      %v1530 = vpop.f32.mrf.mxu0
      %v1531 = vadd.f32 0.0, %v1530
      %1532 = vmatmul.f32.gmra.mxu0 %v1406
      %v1533 = vpop.f32.mrf.mxu0
      %v1534 = vadd.f32 0.0, %v1533
      %1535 = vmatmul.f32.gmra.mxu0 %v1409
      %v1536 = vpop.f32.mrf.mxu0
      %v1537 = vadd.f32 0.0, %v1536
      %1538 = vmatmul.f32.gmra.mxu0 %v1412
      %v1539 = vpop.f32.mrf.mxu0
      %v1540 = vadd.f32 0.0, %v1539
      %1541 = vmatmul.f32.gmra.mxu0 %v1415
      %v1542 = vpop.f32.mrf.mxu0
      %v1543 = vadd.f32 0.0, %v1542
      %1544 = vmatmul.f32.gmra.mxu0 %v1418
      %v1545 = vpop.f32.mrf.mxu0
      %v1546 = vadd.f32 0.0, %v1545
      %1547 = vmatmul.f32.gmra.mxu0 %v1421
      %v1548 = vpop.f32.mrf.mxu0
      %v1549 = vadd.f32 0.0, %v1548
      %1550 = vmatmul.f32.gmra.mxu0 %v1424
      %v1551 = vpop.f32.mrf.mxu0
      %v1552 = vadd.f32 0.0, %v1551
      %1553 = vmatmul.f32.gmra.mxu0 %v1427
      %v1554 = vpop.f32.mrf.mxu0
      %v1555 = vadd.f32 0.0, %v1554
      %1556 = vmatmul.f32.gmra.mxu0 %v1430
      %v1557 = vpop.f32.mrf.mxu0
      %v1558 = vadd.f32 0.0, %v1557
      %1559 = vmatmul.f32.gmra.mxu0 %v1433
      %v1560 = vpop.f32.mrf.mxu0
      %v1561 = vadd.f32 0.0, %v1560
      %1562 = vmatmul.f32.gmra.mxu0 %v1436
      %v1563 = vpop.f32.mrf.mxu0
      %v1564 = vadd.f32 0.0, %v1563
      %1565 = vmatmul.f32.gmra.mxu0 %v1439
      %v1566 = vpop.f32.mrf.mxu0
      %v1567 = vadd.f32 0.0, %v1566
      %1568 = vmatmul.f32.gmra.mxu0 %v1442
      %v1569 = vpop.f32.mrf.mxu0
      %v1570 = vadd.f32 0.0, %v1569
      %1571 = vmatmul.f32.gmra.mxu0 %v1445
      %v1572 = vpop.f32.mrf.mxu0
      %v1573 = vadd.f32 0.0, %v1572
      %1574 = vmatmul.f32.gmra.mxu0 %v1448
      %v1575 = vpop.f32.mrf.mxu0
      %v1576 = vadd.f32 0.0, %v1575
      %1577 = vmatmul.f32.gmra.mxu0 %v1451
      %v1578 = vpop.f32.mrf.mxu0
      %v1579 = vadd.f32 0.0, %v1578
      %1580 = vmatmul.f32.gmra.mxu0 %v1454
      %v1581 = vpop.f32.mrf.mxu0
      %v1582 = vadd.f32 0.0, %v1581
      %1583 = vmatmul.f32.gmra.mxu0 %v1457
      %v1584 = vpop.f32.mrf.mxu0
      %v1585 = vadd.f32 0.0, %v1584
      %1586 = vdwg.mxu0
      %v1587 = vadd.f32 %v1277, %v1480
      %v1588 = vadd.f32 %v1278, %v1483
      %v1589 = vadd.f32 %v1279, %v1486
      %v1590 = vadd.f32 %v1280, %v1489
      %v1591 = vadd.f32 %v1281, %v1492
      %v1592 = vadd.f32 %v1282, %v1495
      %v1593 = vadd.f32 %v1283, %v1498
      %v1594 = vadd.f32 %v1284, %v1501
      %v1595 = vadd.f32 %v1285, %v1504
      %v1596 = vadd.f32 %v1286, %v1507
      %v1597 = vadd.f32 %v1287, %v1510
      %v1598 = vadd.f32 %v1288, %v1513
      %v1599 = vadd.f32 %v1289, %v1516
      %v1600 = vadd.f32 %v1290, %v1519
      %v1601 = vadd.f32 %v1291, %v1522
      %v1602 = vadd.f32 %v1292, %v1525
      %v1603 = vadd.f32 %v1293, %v1528
      %v1604 = vadd.f32 %v1294, %v1531
      %v1605 = vadd.f32 %v1295, %v1534
      %v1606 = vadd.f32 %v1296, %v1537
      %v1607 = vadd.f32 %v1297, %v1540
      %v1608 = vadd.f32 %v1298, %v1543
      %v1609 = vadd.f32 %v1299, %v1546
      %v1610 = vadd.f32 %v1300, %v1549
      %v1611 = vadd.f32 %v1301, %v1552
      %v1612 = vadd.f32 %v1302, %v1555
      %v1613 = vadd.f32 %v1303, %v1558
      %v1614 = vadd.f32 %v1304, %v1561
      %v1615 = vadd.f32 %v1305, %v1564
      %v1616 = vadd.f32 %v1306, %v1567
      %v1617 = vadd.f32 %v1307, %v1570
      %v1618 = vadd.f32 %v1308, %v1573
      %v1619 = vadd.f32 %v1309, %v1576
      %v1620 = vadd.f32 %v1310, %v1579
      %v1621 = vadd.f32 %v1311, %v1582
      %v1622 = vadd.f32 %v1312, %v1585
      %v1623 = vld [vmem:[#allocation2 + $0x13] sm:$0xff]
      %v1624 = vld [vmem:[#allocation2 + $0x1b] sm:$0xff]
      %v1625 = vld [vmem:[#allocation2 + $0x23] sm:$0xff]
      %v1626 = vld [vmem:[#allocation2 + $0x2b] sm:$0xff]
      %v1627 = vld [vmem:[#allocation2 + $0x33] sm:$0xff]
      %v1628 = vld [vmem:[#allocation2 + $0x3b] sm:$0xff]
      %v1629 = vld [vmem:[#allocation2 + $0x43] sm:$0xff]
      %v1630 = vld [vmem:[#allocation2 + $0x4b] sm:$0xff]
      %v1631 = vld [vmem:[#allocation2 + $0x53] sm:$0xff]
      %v1632 = vld [vmem:[#allocation2 + $0x5b] sm:$0xff]
      %v1633 = vld [vmem:[#allocation2 + $0x63] sm:$0xff]
      %v1634 = vld [vmem:[#allocation2 + $0x6b] sm:$0xff]
      %v1635 = vld [vmem:[#allocation2 + $0x73] sm:$0xff]
      %v1636 = vld [vmem:[#allocation2 + $0x7b] sm:$0xff]
      %v1637 = vld [vmem:[#allocation2 + $0x83] sm:$0xff]
      %v1638 = vld [vmem:[#allocation2 + $0x8b] sm:$0xff]
      %v1639 = vld [vmem:[#allocation2 + $0x93] sm:$0xff]
      %v1640 = vld [vmem:[#allocation2 + $0x9b] sm:$0xff]
      %v1641 = vld [vmem:[#allocation2 + $0xa3] sm:$0xff]
      %v1642 = vld [vmem:[#allocation2 + $0xab] sm:$0xff]
      %v1643 = vld [vmem:[#allocation2 + $0xb3] sm:$0xff]
      %v1644 = vld [vmem:[#allocation2 + $0xbb] sm:$0xff]
      %v1645 = vld [vmem:[#allocation2 + $0xc3] sm:$0xff]
      %v1646 = vld [vmem:[#allocation2 + $0xcb] sm:$0xff]
      %v1647 = vld [vmem:[#allocation2 + $0xd3] sm:$0xff]
      %v1648 = vld [vmem:[#allocation2 + $0xdb] sm:$0xff]
      %v1649 = vld [vmem:[#allocation2 + $0xe3] sm:$0xff]
      %v1650 = vld [vmem:[#allocation2 + $0xeb] sm:$0xff]
      %v1651 = vld [vmem:[#allocation2 + $0xf3] sm:$0xff]
      %v1652 = vld [vmem:[#allocation2 + $0xfb] sm:$0xff]
      %v1653 = vld [vmem:[#allocation2 + $0x103] sm:$0xff]
      %v1654 = vld [vmem:[#allocation2 + $0x10b] sm:$0xff]
      %v1655 = vld [vmem:[#allocation2 + $0x113] sm:$0xff]
      %v1656 = vld [vmem:[#allocation2 + $0x11b] sm:$0xff]
      %v1657 = vld [vmem:[#allocation2 + $0x123] sm:$0xff]
      %v1658 = vld [vmem:[#allocation2 + $0x12b] sm:$0xff]
      %s1659 = scalar_lea.vmem %s2, 16
      %v1660 = vld [vmem:[%s1659] sm:$0xf]
      %v1662 = vsel %vm252, %v1623, 0
      %v1665 = vsel %vm252, %v1624, 0
      %v1668 = vsel %vm252, %v1625, 0
      %v1671 = vsel %vm252, %v1626, 0
      %v1674 = vsel %vm252, %v1627, 0
      %v1677 = vsel %vm252, %v1628, 0
      %v1680 = vsel %vm252, %v1629, 0
      %v1683 = vsel %vm252, %v1630, 0
      %v1686 = vsel %vm252, %v1631, 0
      %v1689 = vsel %vm252, %v1632, 0
      %v1692 = vsel %vm252, %v1633, 0
      %v1695 = vsel %vm252, %v1634, 0
      %v1698 = vsel %vm252, %v1635, 0
      %v1701 = vsel %vm252, %v1636, 0
      %v1704 = vsel %vm252, %v1637, 0
      %v1707 = vsel %vm252, %v1638, 0
      %v1710 = vsel %vm252, %v1639, 0
      %v1713 = vsel %vm252, %v1640, 0
      %v1716 = vsel %vm252, %v1641, 0
      %v1719 = vsel %vm252, %v1642, 0
      %v1722 = vsel %vm252, %v1643, 0
      %v1725 = vsel %vm252, %v1644, 0
      %v1728 = vsel %vm252, %v1645, 0
      %v1731 = vsel %vm252, %v1646, 0
      %v1734 = vsel %vm252, %v1647, 0
      %v1737 = vsel %vm252, %v1648, 0
      %v1740 = vsel %vm252, %v1649, 0
      %v1743 = vsel %vm252, %v1650, 0
      %v1746 = vsel %vm252, %v1651, 0
      %v1749 = vsel %vm252, %v1652, 0
      %v1752 = vsel %vm252, %v1653, 0
      %v1755 = vsel %vm252, %v1654, 0
      %v1758 = vsel %vm252, %v1655, 0
      %v1761 = vsel %vm252, %v1656, 0
      %v1764 = vsel %vm252, %v1657, 0
      %v1767 = vsel %vm252, %v1658, 0
      %v1770 = vsel %vm638, %v1660, 0
      %1772 = vmatpush.msra.mxu0 0.0
      %1773 = vmatpush.msra.mxu0 0.0
      %1774 = vmatpush.msra.mxu0 0.0
      %1775 = vmatpush.msra.mxu0 0.0
      %1776 = vmatpush.msra.mxu0 0.0
      %1777 = vmatpush.msra.mxu0 0.0
      %1778 = vmatpush.msra.mxu0 0.0
      %1779 = vmatpush.msra.mxu0 0.0
      %1780 = vmatpush.msra.mxu0 0.0
      %1781 = vmatpush.msra.mxu0 0.0
      %1782 = vmatpush.msra.mxu0 0.0
      %1783 = vmatpush.msra.mxu0 0.0
      %1784 = vmatpush.msra.mxu0 0.0
      %1785 = vmatpush.msra.mxu0 0.0
      %1786 = vmatpush.msra.mxu0 0.0
      %1787 = vmatpush.msra.mxu0 %v1770
      %1788 = vmatmul.f32.gmra.mxu0 %v1662
      %v1789 = vpop.f32.mrf.mxu0
      %v1790 = vadd.f32 0.0, %v1789
      %1791 = vmatmul.f32.gmra.mxu0 %v1665
      %v1792 = vpop.f32.mrf.mxu0
      %v1793 = vadd.f32 0.0, %v1792
      %1794 = vmatmul.f32.gmra.mxu0 %v1668
      %v1795 = vpop.f32.mrf.mxu0
      %v1796 = vadd.f32 0.0, %v1795
      %1797 = vmatmul.f32.gmra.mxu0 %v1671
      %v1798 = vpop.f32.mrf.mxu0
      %v1799 = vadd.f32 0.0, %v1798
      %1800 = vmatmul.f32.gmra.mxu0 %v1674
      %v1801 = vpop.f32.mrf.mxu0
      %v1802 = vadd.f32 0.0, %v1801
      %1803 = vmatmul.f32.gmra.mxu0 %v1677
      %v1804 = vpop.f32.mrf.mxu0
      %v1805 = vadd.f32 0.0, %v1804
      %1806 = vmatmul.f32.gmra.mxu0 %v1680
      %v1807 = vpop.f32.mrf.mxu0
      %v1808 = vadd.f32 0.0, %v1807
      %1809 = vmatmul.f32.gmra.mxu0 %v1683
      %v1810 = vpop.f32.mrf.mxu0
      %v1811 = vadd.f32 0.0, %v1810
      %1812 = vmatmul.f32.gmra.mxu0 %v1686
      %v1813 = vpop.f32.mrf.mxu0
      %v1814 = vadd.f32 0.0, %v1813
      %1815 = vmatmul.f32.gmra.mxu0 %v1689
      %v1816 = vpop.f32.mrf.mxu0
      %v1817 = vadd.f32 0.0, %v1816
      %1818 = vmatmul.f32.gmra.mxu0 %v1692
      %v1819 = vpop.f32.mrf.mxu0
      %v1820 = vadd.f32 0.0, %v1819
      %1821 = vmatmul.f32.gmra.mxu0 %v1695
      %v1822 = vpop.f32.mrf.mxu0
      %v1823 = vadd.f32 0.0, %v1822
      %1824 = vmatmul.f32.gmra.mxu0 %v1698
      %v1825 = vpop.f32.mrf.mxu0
      %v1826 = vadd.f32 0.0, %v1825
      %1827 = vmatmul.f32.gmra.mxu0 %v1701
      %v1828 = vpop.f32.mrf.mxu0
      %v1829 = vadd.f32 0.0, %v1828
      %1830 = vmatmul.f32.gmra.mxu0 %v1704
      %v1831 = vpop.f32.mrf.mxu0
      %v1832 = vadd.f32 0.0, %v1831
      %1833 = vmatmul.f32.gmra.mxu0 %v1707
      %v1834 = vpop.f32.mrf.mxu0
      %v1835 = vadd.f32 0.0, %v1834
      %1836 = vmatmul.f32.gmra.mxu0 %v1710
      %v1837 = vpop.f32.mrf.mxu0
      %v1838 = vadd.f32 0.0, %v1837
      %1839 = vmatmul.f32.gmra.mxu0 %v1713
      %v1840 = vpop.f32.mrf.mxu0
      %v1841 = vadd.f32 0.0, %v1840
      %1842 = vmatmul.f32.gmra.mxu0 %v1716
      %v1843 = vpop.f32.mrf.mxu0
      %v1844 = vadd.f32 0.0, %v1843
      %1845 = vmatmul.f32.gmra.mxu0 %v1719
      %v1846 = vpop.f32.mrf.mxu0
      %v1847 = vadd.f32 0.0, %v1846
      %1848 = vmatmul.f32.gmra.mxu0 %v1722
      %v1849 = vpop.f32.mrf.mxu0
      %v1850 = vadd.f32 0.0, %v1849
      %1851 = vmatmul.f32.gmra.mxu0 %v1725
      %v1852 = vpop.f32.mrf.mxu0
      %v1853 = vadd.f32 0.0, %v1852
      %1854 = vmatmul.f32.gmra.mxu0 %v1728
      %v1855 = vpop.f32.mrf.mxu0
      %v1856 = vadd.f32 0.0, %v1855
      %1857 = vmatmul.f32.gmra.mxu0 %v1731
      %v1858 = vpop.f32.mrf.mxu0
      %v1859 = vadd.f32 0.0, %v1858
      %1860 = vmatmul.f32.gmra.mxu0 %v1734
      %v1861 = vpop.f32.mrf.mxu0
      %v1862 = vadd.f32 0.0, %v1861
      %1863 = vmatmul.f32.gmra.mxu0 %v1737
      %v1864 = vpop.f32.mrf.mxu0
      %v1865 = vadd.f32 0.0, %v1864
      %1866 = vmatmul.f32.gmra.mxu0 %v1740
      %v1867 = vpop.f32.mrf.mxu0
      %v1868 = vadd.f32 0.0, %v1867
      %1869 = vmatmul.f32.gmra.mxu0 %v1743
      %v1870 = vpop.f32.mrf.mxu0
      %v1871 = vadd.f32 0.0, %v1870
      %1872 = vmatmul.f32.gmra.mxu0 %v1746
      %v1873 = vpop.f32.mrf.mxu0
      %v1874 = vadd.f32 0.0, %v1873
      %1875 = vmatmul.f32.gmra.mxu0 %v1749
      %v1876 = vpop.f32.mrf.mxu0
      %v1877 = vadd.f32 0.0, %v1876
      %1878 = vmatmul.f32.gmra.mxu0 %v1752
      %v1879 = vpop.f32.mrf.mxu0
      %v1880 = vadd.f32 0.0, %v1879
      %1881 = vmatmul.f32.gmra.mxu0 %v1755
      %v1882 = vpop.f32.mrf.mxu0
      %v1883 = vadd.f32 0.0, %v1882
      %1884 = vmatmul.f32.gmra.mxu0 %v1758
      %v1885 = vpop.f32.mrf.mxu0
      %v1886 = vadd.f32 0.0, %v1885
      %1887 = vmatmul.f32.gmra.mxu0 %v1761
      %v1888 = vpop.f32.mrf.mxu0
      %v1889 = vadd.f32 0.0, %v1888
      %1890 = vmatmul.f32.gmra.mxu0 %v1764
      %v1891 = vpop.f32.mrf.mxu0
      %v1892 = vadd.f32 0.0, %v1891
      %1893 = vmatmul.f32.gmra.mxu0 %v1767
      %v1894 = vpop.f32.mrf.mxu0
      %v1895 = vadd.f32 0.0, %v1894
      %1896 = vdwg.mxu0
      %v1897 = vadd.f32 %v1587, %v1790
      %v1898 = vadd.f32 %v1588, %v1793
      %v1899 = vadd.f32 %v1589, %v1796
      %v1900 = vadd.f32 %v1590, %v1799
      %v1901 = vadd.f32 %v1591, %v1802
      %v1902 = vadd.f32 %v1592, %v1805
      %v1903 = vadd.f32 %v1593, %v1808
      %v1904 = vadd.f32 %v1594, %v1811
      %v1905 = vadd.f32 %v1595, %v1814
      %v1906 = vadd.f32 %v1596, %v1817
      %v1907 = vadd.f32 %v1597, %v1820
      %v1908 = vadd.f32 %v1598, %v1823
      %v1909 = vadd.f32 %v1599, %v1826
      %v1910 = vadd.f32 %v1600, %v1829
      %v1911 = vadd.f32 %v1601, %v1832
      %v1912 = vadd.f32 %v1602, %v1835
      %v1913 = vadd.f32 %v1603, %v1838
      %v1914 = vadd.f32 %v1604, %v1841
      %v1915 = vadd.f32 %v1605, %v1844
      %v1916 = vadd.f32 %v1606, %v1847
      %v1917 = vadd.f32 %v1607, %v1850
      %v1918 = vadd.f32 %v1608, %v1853
      %v1919 = vadd.f32 %v1609, %v1856
      %v1920 = vadd.f32 %v1610, %v1859
      %v1921 = vadd.f32 %v1611, %v1862
      %v1922 = vadd.f32 %v1612, %v1865
      %v1923 = vadd.f32 %v1613, %v1868
      %v1924 = vadd.f32 %v1614, %v1871
      %v1925 = vadd.f32 %v1615, %v1874
      %v1926 = vadd.f32 %v1616, %v1877
      %v1927 = vadd.f32 %v1617, %v1880
      %v1928 = vadd.f32 %v1618, %v1883
      %v1929 = vadd.f32 %v1619, %v1886
      %v1930 = vadd.f32 %v1620, %v1889
      %v1931 = vadd.f32 %v1621, %v1892
      %v1932 = vadd.f32 %v1622, %v1895
      %v1933 = vld [vmem:[#allocation2 + $0x14] sm:$0xff]
      %v1934 = vld [vmem:[#allocation2 + $0x1c] sm:$0xff]
      %v1935 = vld [vmem:[#allocation2 + $0x24] sm:$0xff]
      %v1936 = vld [vmem:[#allocation2 + $0x2c] sm:$0xff]
      %v1937 = vld [vmem:[#allocation2 + $0x34] sm:$0xff]
      %v1938 = vld [vmem:[#allocation2 + $0x3c] sm:$0xff]
      %v1939 = vld [vmem:[#allocation2 + $0x44] sm:$0xff]
      %v1940 = vld [vmem:[#allocation2 + $0x4c] sm:$0xff]
      %v1941 = vld [vmem:[#allocation2 + $0x54] sm:$0xff]
      %v1942 = vld [vmem:[#allocation2 + $0x5c] sm:$0xff]
      %v1943 = vld [vmem:[#allocation2 + $0x64] sm:$0xff]
      %v1944 = vld [vmem:[#allocation2 + $0x6c] sm:$0xff]
      %v1945 = vld [vmem:[#allocation2 + $0x74] sm:$0xff]
      %v1946 = vld [vmem:[#allocation2 + $0x7c] sm:$0xff]
      %v1947 = vld [vmem:[#allocation2 + $0x84] sm:$0xff]
      %v1948 = vld [vmem:[#allocation2 + $0x8c] sm:$0xff]
      %v1949 = vld [vmem:[#allocation2 + $0x94] sm:$0xff]
      %v1950 = vld [vmem:[#allocation2 + $0x9c] sm:$0xff]
      %v1951 = vld [vmem:[#allocation2 + $0xa4] sm:$0xff]
      %v1952 = vld [vmem:[#allocation2 + $0xac] sm:$0xff]
      %v1953 = vld [vmem:[#allocation2 + $0xb4] sm:$0xff]
      %v1954 = vld [vmem:[#allocation2 + $0xbc] sm:$0xff]
      %v1955 = vld [vmem:[#allocation2 + $0xc4] sm:$0xff]
      %v1956 = vld [vmem:[#allocation2 + $0xcc] sm:$0xff]
      %v1957 = vld [vmem:[#allocation2 + $0xd4] sm:$0xff]
      %v1958 = vld [vmem:[#allocation2 + $0xdc] sm:$0xff]
      %v1959 = vld [vmem:[#allocation2 + $0xe4] sm:$0xff]
      %v1960 = vld [vmem:[#allocation2 + $0xec] sm:$0xff]
      %v1961 = vld [vmem:[#allocation2 + $0xf4] sm:$0xff]
      %v1962 = vld [vmem:[#allocation2 + $0xfc] sm:$0xff]
      %v1963 = vld [vmem:[#allocation2 + $0x104] sm:$0xff]
      %v1964 = vld [vmem:[#allocation2 + $0x10c] sm:$0xff]
      %v1965 = vld [vmem:[#allocation2 + $0x114] sm:$0xff]
      %v1966 = vld [vmem:[#allocation2 + $0x11c] sm:$0xff]
      %v1967 = vld [vmem:[#allocation2 + $0x124] sm:$0xff]
      %v1968 = vld [vmem:[#allocation2 + $0x12c] sm:$0xff]
      %s1969 = scalar_lea.vmem %s2, 20
      %v1970 = vld [vmem:[%s1969] sm:$0xf]
      %v1972 = vsel %vm252, %v1933, 0
      %v1975 = vsel %vm252, %v1934, 0
      %v1978 = vsel %vm252, %v1935, 0
      %v1981 = vsel %vm252, %v1936, 0
      %v1984 = vsel %vm252, %v1937, 0
      %v1987 = vsel %vm252, %v1938, 0
      %v1990 = vsel %vm252, %v1939, 0
      %v1993 = vsel %vm252, %v1940, 0
      %v1996 = vsel %vm252, %v1941, 0
      %v1999 = vsel %vm252, %v1942, 0
      %v2002 = vsel %vm252, %v1943, 0
      %v2005 = vsel %vm252, %v1944, 0
      %v2008 = vsel %vm252, %v1945, 0
      %v2011 = vsel %vm252, %v1946, 0
      %v2014 = vsel %vm252, %v1947, 0
      %v2017 = vsel %vm252, %v1948, 0
      %v2020 = vsel %vm252, %v1949, 0
      %v2023 = vsel %vm252, %v1950, 0
      %v2026 = vsel %vm252, %v1951, 0
      %v2029 = vsel %vm252, %v1952, 0
      %v2032 = vsel %vm252, %v1953, 0
      %v2035 = vsel %vm252, %v1954, 0
      %v2038 = vsel %vm252, %v1955, 0
      %v2041 = vsel %vm252, %v1956, 0
      %v2044 = vsel %vm252, %v1957, 0
      %v2047 = vsel %vm252, %v1958, 0
      %v2050 = vsel %vm252, %v1959, 0
      %v2053 = vsel %vm252, %v1960, 0
      %v2056 = vsel %vm252, %v1961, 0
      %v2059 = vsel %vm252, %v1962, 0
      %v2062 = vsel %vm252, %v1963, 0
      %v2065 = vsel %vm252, %v1964, 0
      %v2068 = vsel %vm252, %v1965, 0
      %v2071 = vsel %vm252, %v1966, 0
      %v2074 = vsel %vm252, %v1967, 0
      %v2077 = vsel %vm252, %v1968, 0
      %v2080 = vsel %vm638, %v1970, 0
      %2082 = vmatpush.msra.mxu0 0.0
      %2083 = vmatpush.msra.mxu0 0.0
      %2084 = vmatpush.msra.mxu0 0.0
      %2085 = vmatpush.msra.mxu0 0.0
      %2086 = vmatpush.msra.mxu0 0.0
      %2087 = vmatpush.msra.mxu0 0.0
      %2088 = vmatpush.msra.mxu0 0.0
      %2089 = vmatpush.msra.mxu0 0.0
      %2090 = vmatpush.msra.mxu0 0.0
      %2091 = vmatpush.msra.mxu0 0.0
      %2092 = vmatpush.msra.mxu0 0.0
      %2093 = vmatpush.msra.mxu0 0.0
      %2094 = vmatpush.msra.mxu0 0.0
      %2095 = vmatpush.msra.mxu0 0.0
      %2096 = vmatpush.msra.mxu0 0.0
      %2097 = vmatpush.msra.mxu0 %v2080
      %2098 = vmatmul.f32.gmra.mxu0 %v1972
      %v2099 = vpop.f32.mrf.mxu0
      %v2100 = vadd.f32 0.0, %v2099
      %2101 = vmatmul.f32.gmra.mxu0 %v1975
      %v2102 = vpop.f32.mrf.mxu0
      %v2103 = vadd.f32 0.0, %v2102
      %2104 = vmatmul.f32.gmra.mxu0 %v1978
      %v2105 = vpop.f32.mrf.mxu0
      %v2106 = vadd.f32 0.0, %v2105
      %2107 = vmatmul.f32.gmra.mxu0 %v1981
      %v2108 = vpop.f32.mrf.mxu0
      %v2109 = vadd.f32 0.0, %v2108
      %2110 = vmatmul.f32.gmra.mxu0 %v1984
      %v2111 = vpop.f32.mrf.mxu0
      %v2112 = vadd.f32 0.0, %v2111
      %2113 = vmatmul.f32.gmra.mxu0 %v1987
      %v2114 = vpop.f32.mrf.mxu0
      %v2115 = vadd.f32 0.0, %v2114
      %2116 = vmatmul.f32.gmra.mxu0 %v1990
      %v2117 = vpop.f32.mrf.mxu0
      %v2118 = vadd.f32 0.0, %v2117
      %2119 = vmatmul.f32.gmra.mxu0 %v1993
      %v2120 = vpop.f32.mrf.mxu0
      %v2121 = vadd.f32 0.0, %v2120
      %2122 = vmatmul.f32.gmra.mxu0 %v1996
      %v2123 = vpop.f32.mrf.mxu0
      %v2124 = vadd.f32 0.0, %v2123
      %2125 = vmatmul.f32.gmra.mxu0 %v1999
      %v2126 = vpop.f32.mrf.mxu0
      %v2127 = vadd.f32 0.0, %v2126
      %2128 = vmatmul.f32.gmra.mxu0 %v2002
      %v2129 = vpop.f32.mrf.mxu0
      %v2130 = vadd.f32 0.0, %v2129
      %2131 = vmatmul.f32.gmra.mxu0 %v2005
      %v2132 = vpop.f32.mrf.mxu0
      %v2133 = vadd.f32 0.0, %v2132
      %2134 = vmatmul.f32.gmra.mxu0 %v2008
      %v2135 = vpop.f32.mrf.mxu0
      %v2136 = vadd.f32 0.0, %v2135
      %2137 = vmatmul.f32.gmra.mxu0 %v2011
      %v2138 = vpop.f32.mrf.mxu0
      %v2139 = vadd.f32 0.0, %v2138
      %2140 = vmatmul.f32.gmra.mxu0 %v2014
      %v2141 = vpop.f32.mrf.mxu0
      %v2142 = vadd.f32 0.0, %v2141
      %2143 = vmatmul.f32.gmra.mxu0 %v2017
      %v2144 = vpop.f32.mrf.mxu0
      %v2145 = vadd.f32 0.0, %v2144
      %2146 = vmatmul.f32.gmra.mxu0 %v2020
      %v2147 = vpop.f32.mrf.mxu0
      %v2148 = vadd.f32 0.0, %v2147
      %2149 = vmatmul.f32.gmra.mxu0 %v2023
      %v2150 = vpop.f32.mrf.mxu0
      %v2151 = vadd.f32 0.0, %v2150
      %2152 = vmatmul.f32.gmra.mxu0 %v2026
      %v2153 = vpop.f32.mrf.mxu0
      %v2154 = vadd.f32 0.0, %v2153
      %2155 = vmatmul.f32.gmra.mxu0 %v2029
      %v2156 = vpop.f32.mrf.mxu0
      %v2157 = vadd.f32 0.0, %v2156
      %2158 = vmatmul.f32.gmra.mxu0 %v2032
      %v2159 = vpop.f32.mrf.mxu0
      %v2160 = vadd.f32 0.0, %v2159
      %2161 = vmatmul.f32.gmra.mxu0 %v2035
      %v2162 = vpop.f32.mrf.mxu0
      %v2163 = vadd.f32 0.0, %v2162
      %2164 = vmatmul.f32.gmra.mxu0 %v2038
      %v2165 = vpop.f32.mrf.mxu0
      %v2166 = vadd.f32 0.0, %v2165
      %2167 = vmatmul.f32.gmra.mxu0 %v2041
      %v2168 = vpop.f32.mrf.mxu0
      %v2169 = vadd.f32 0.0, %v2168
      %2170 = vmatmul.f32.gmra.mxu0 %v2044
      %v2171 = vpop.f32.mrf.mxu0
      %v2172 = vadd.f32 0.0, %v2171
      %2173 = vmatmul.f32.gmra.mxu0 %v2047
      %v2174 = vpop.f32.mrf.mxu0
      %v2175 = vadd.f32 0.0, %v2174
      %2176 = vmatmul.f32.gmra.mxu0 %v2050
      %v2177 = vpop.f32.mrf.mxu0
      %v2178 = vadd.f32 0.0, %v2177
      %2179 = vmatmul.f32.gmra.mxu0 %v2053
      %v2180 = vpop.f32.mrf.mxu0
      %v2181 = vadd.f32 0.0, %v2180
      %2182 = vmatmul.f32.gmra.mxu0 %v2056
      %v2183 = vpop.f32.mrf.mxu0
      %v2184 = vadd.f32 0.0, %v2183
      %2185 = vmatmul.f32.gmra.mxu0 %v2059
      %v2186 = vpop.f32.mrf.mxu0
      %v2187 = vadd.f32 0.0, %v2186
      %2188 = vmatmul.f32.gmra.mxu0 %v2062
      %v2189 = vpop.f32.mrf.mxu0
      %v2190 = vadd.f32 0.0, %v2189
      %2191 = vmatmul.f32.gmra.mxu0 %v2065
      %v2192 = vpop.f32.mrf.mxu0
      %v2193 = vadd.f32 0.0, %v2192
      %2194 = vmatmul.f32.gmra.mxu0 %v2068
      %v2195 = vpop.f32.mrf.mxu0
      %v2196 = vadd.f32 0.0, %v2195
      %2197 = vmatmul.f32.gmra.mxu0 %v2071
      %v2198 = vpop.f32.mrf.mxu0
      %v2199 = vadd.f32 0.0, %v2198
      %2200 = vmatmul.f32.gmra.mxu0 %v2074
      %v2201 = vpop.f32.mrf.mxu0
      %v2202 = vadd.f32 0.0, %v2201
      %2203 = vmatmul.f32.gmra.mxu0 %v2077
      %v2204 = vpop.f32.mrf.mxu0
      %v2205 = vadd.f32 0.0, %v2204
      %2206 = vdwg.mxu0
      %v2207 = vadd.f32 %v1897, %v2100
      %v2208 = vadd.f32 %v1898, %v2103
      %v2209 = vadd.f32 %v1899, %v2106
      %v2210 = vadd.f32 %v1900, %v2109
      %v2211 = vadd.f32 %v1901, %v2112
      %v2212 = vadd.f32 %v1902, %v2115
      %v2213 = vadd.f32 %v1903, %v2118
      %v2214 = vadd.f32 %v1904, %v2121
      %v2215 = vadd.f32 %v1905, %v2124
      %v2216 = vadd.f32 %v1906, %v2127
      %v2217 = vadd.f32 %v1907, %v2130
      %v2218 = vadd.f32 %v1908, %v2133
      %v2219 = vadd.f32 %v1909, %v2136
      %v2220 = vadd.f32 %v1910, %v2139
      %v2221 = vadd.f32 %v1911, %v2142
      %v2222 = vadd.f32 %v1912, %v2145
      %v2223 = vadd.f32 %v1913, %v2148
      %v2224 = vadd.f32 %v1914, %v2151
      %v2225 = vadd.f32 %v1915, %v2154
      %v2226 = vadd.f32 %v1916, %v2157
      %v2227 = vadd.f32 %v1917, %v2160
      %v2228 = vadd.f32 %v1918, %v2163
      %v2229 = vadd.f32 %v1919, %v2166
      %v2230 = vadd.f32 %v1920, %v2169
      %v2231 = vadd.f32 %v1921, %v2172
      %v2232 = vadd.f32 %v1922, %v2175
      %v2233 = vadd.f32 %v1923, %v2178
      %v2234 = vadd.f32 %v1924, %v2181
      %v2235 = vadd.f32 %v1925, %v2184
      %v2236 = vadd.f32 %v1926, %v2187
      %v2237 = vadd.f32 %v1927, %v2190
      %v2238 = vadd.f32 %v1928, %v2193
      %v2239 = vadd.f32 %v1929, %v2196
      %v2240 = vadd.f32 %v1930, %v2199
      %v2241 = vadd.f32 %v1931, %v2202
      %v2242 = vadd.f32 %v1932, %v2205
      %v2243 = vld [vmem:[#allocation2 + $0x24] sm:$0xff]
      %v2244 = vld [vmem:[#allocation2 + $0x2c] sm:$0xff]
      %v2245 = vld [vmem:[#allocation2 + $0x34] sm:$0xff]
      %v2246 = vld [vmem:[#allocation2 + $0x3c] sm:$0xff]
      %v2247 = vld [vmem:[#allocation2 + $0x44] sm:$0xff]
      %v2248 = vld [vmem:[#allocation2 + $0x4c] sm:$0xff]
      %v2249 = vld [vmem:[#allocation2 + $0x54] sm:$0xff]
      %v2250 = vld [vmem:[#allocation2 + $0x5c] sm:$0xff]
      %v2251 = vld [vmem:[#allocation2 + $0x64] sm:$0xff]
      %v2252 = vld [vmem:[#allocation2 + $0x6c] sm:$0xff]
      %v2253 = vld [vmem:[#allocation2 + $0x74] sm:$0xff]
      %v2254 = vld [vmem:[#allocation2 + $0x7c] sm:$0xff]
      %v2255 = vld [vmem:[#allocation2 + $0x84] sm:$0xff]
      %v2256 = vld [vmem:[#allocation2 + $0x8c] sm:$0xff]
      %v2257 = vld [vmem:[#allocation2 + $0x94] sm:$0xff]
      %v2258 = vld [vmem:[#allocation2 + $0x9c] sm:$0xff]
      %v2259 = vld [vmem:[#allocation2 + $0xa4] sm:$0xff]
      %v2260 = vld [vmem:[#allocation2 + $0xac] sm:$0xff]
      %v2261 = vld [vmem:[#allocation2 + $0xb4] sm:$0xff]
      %v2262 = vld [vmem:[#allocation2 + $0xbc] sm:$0xff]
      %v2263 = vld [vmem:[#allocation2 + $0xc4] sm:$0xff]
      %v2264 = vld [vmem:[#allocation2 + $0xcc] sm:$0xff]
      %v2265 = vld [vmem:[#allocation2 + $0xd4] sm:$0xff]
      %v2266 = vld [vmem:[#allocation2 + $0xdc] sm:$0xff]
      %v2267 = vld [vmem:[#allocation2 + $0xe4] sm:$0xff]
      %v2268 = vld [vmem:[#allocation2 + $0xec] sm:$0xff]
      %v2269 = vld [vmem:[#allocation2 + $0xf4] sm:$0xff]
      %v2270 = vld [vmem:[#allocation2 + $0xfc] sm:$0xff]
      %v2271 = vld [vmem:[#allocation2 + $0x104] sm:$0xff]
      %v2272 = vld [vmem:[#allocation2 + $0x10c] sm:$0xff]
      %v2273 = vld [vmem:[#allocation2 + $0x114] sm:$0xff]
      %v2274 = vld [vmem:[#allocation2 + $0x11c] sm:$0xff]
      %v2275 = vld [vmem:[#allocation2 + $0x124] sm:$0xff]
      %v2276 = vld [vmem:[#allocation2 + $0x12c] sm:$0xff]
      %v2277 = vld [vmem:[#allocation2 + $0x134] sm:$0xff]
      %v2278 = vld [vmem:[#allocation2 + $0x13c] sm:$0xff]
      %s2279 = scalar_lea.vmem %s2, 24
      %v2280 = vld [vmem:[%s2279] sm:$0xf]
      %v2282 = vsel %vm252, %v2243, 0
      %v2285 = vsel %vm252, %v2244, 0
      %v2288 = vsel %vm252, %v2245, 0
      %v2291 = vsel %vm252, %v2246, 0
      %v2294 = vsel %vm252, %v2247, 0
      %v2297 = vsel %vm252, %v2248, 0
      %v2300 = vsel %vm252, %v2249, 0
      %v2303 = vsel %vm252, %v2250, 0
      %v2306 = vsel %vm252, %v2251, 0
      %v2309 = vsel %vm252, %v2252, 0
      %v2312 = vsel %vm252, %v2253, 0
      %v2315 = vsel %vm252, %v2254, 0
      %v2318 = vsel %vm252, %v2255, 0
      %v2321 = vsel %vm252, %v2256, 0
      %v2324 = vsel %vm252, %v2257, 0
      %v2327 = vsel %vm252, %v2258, 0
      %v2330 = vsel %vm252, %v2259, 0
      %v2333 = vsel %vm252, %v2260, 0
      %v2336 = vsel %vm252, %v2261, 0
      %v2339 = vsel %vm252, %v2262, 0
      %v2342 = vsel %vm252, %v2263, 0
      %v2345 = vsel %vm252, %v2264, 0
      %v2348 = vsel %vm252, %v2265, 0
      %v2351 = vsel %vm252, %v2266, 0
      %v2354 = vsel %vm252, %v2267, 0
      %v2357 = vsel %vm252, %v2268, 0
      %v2360 = vsel %vm252, %v2269, 0
      %v2363 = vsel %vm252, %v2270, 0
      %v2366 = vsel %vm252, %v2271, 0
      %v2369 = vsel %vm252, %v2272, 0
      %v2372 = vsel %vm252, %v2273, 0
      %v2375 = vsel %vm252, %v2274, 0
      %v2378 = vsel %vm252, %v2275, 0
      %v2381 = vsel %vm252, %v2276, 0
      %v2384 = vsel %vm252, %v2277, 0
      %v2387 = vsel %vm252, %v2278, 0
      %v2390 = vsel %vm638, %v2280, 0
      %2392 = vmatpush.msra.mxu0 0.0
      %2393 = vmatpush.msra.mxu0 0.0
      %2394 = vmatpush.msra.mxu0 0.0
      %2395 = vmatpush.msra.mxu0 0.0
      %2396 = vmatpush.msra.mxu0 0.0
      %2397 = vmatpush.msra.mxu0 0.0
      %2398 = vmatpush.msra.mxu0 0.0
      %2399 = vmatpush.msra.mxu0 0.0
      %2400 = vmatpush.msra.mxu0 0.0
      %2401 = vmatpush.msra.mxu0 0.0
      %2402 = vmatpush.msra.mxu0 0.0
      %2403 = vmatpush.msra.mxu0 0.0
      %2404 = vmatpush.msra.mxu0 0.0
      %2405 = vmatpush.msra.mxu0 0.0
      %2406 = vmatpush.msra.mxu0 0.0
      %2407 = vmatpush.msra.mxu0 %v2390
      %2408 = vmatmul.f32.gmra.mxu0 %v2282
      %v2409 = vpop.f32.mrf.mxu0
      %v2410 = vadd.f32 0.0, %v2409
      %2411 = vmatmul.f32.gmra.mxu0 %v2285
      %v2412 = vpop.f32.mrf.mxu0
      %v2413 = vadd.f32 0.0, %v2412
      %2414 = vmatmul.f32.gmra.mxu0 %v2288
      %v2415 = vpop.f32.mrf.mxu0
      %v2416 = vadd.f32 0.0, %v2415
      %2417 = vmatmul.f32.gmra.mxu0 %v2291
      %v2418 = vpop.f32.mrf.mxu0
      %v2419 = vadd.f32 0.0, %v2418
      %2420 = vmatmul.f32.gmra.mxu0 %v2294
      %v2421 = vpop.f32.mrf.mxu0
      %v2422 = vadd.f32 0.0, %v2421
      %2423 = vmatmul.f32.gmra.mxu0 %v2297
      %v2424 = vpop.f32.mrf.mxu0
      %v2425 = vadd.f32 0.0, %v2424
      %2426 = vmatmul.f32.gmra.mxu0 %v2300
      %v2427 = vpop.f32.mrf.mxu0
      %v2428 = vadd.f32 0.0, %v2427
      %2429 = vmatmul.f32.gmra.mxu0 %v2303
      %v2430 = vpop.f32.mrf.mxu0
      %v2431 = vadd.f32 0.0, %v2430
      %2432 = vmatmul.f32.gmra.mxu0 %v2306
      %v2433 = vpop.f32.mrf.mxu0
      %v2434 = vadd.f32 0.0, %v2433
      %2435 = vmatmul.f32.gmra.mxu0 %v2309
      %v2436 = vpop.f32.mrf.mxu0
      %v2437 = vadd.f32 0.0, %v2436
      %2438 = vmatmul.f32.gmra.mxu0 %v2312
      %v2439 = vpop.f32.mrf.mxu0
      %v2440 = vadd.f32 0.0, %v2439
      %2441 = vmatmul.f32.gmra.mxu0 %v2315
      %v2442 = vpop.f32.mrf.mxu0
      %v2443 = vadd.f32 0.0, %v2442
      %2444 = vmatmul.f32.gmra.mxu0 %v2318
      %v2445 = vpop.f32.mrf.mxu0
      %v2446 = vadd.f32 0.0, %v2445
      %2447 = vmatmul.f32.gmra.mxu0 %v2321
      %v2448 = vpop.f32.mrf.mxu0
      %v2449 = vadd.f32 0.0, %v2448
      %2450 = vmatmul.f32.gmra.mxu0 %v2324
      %v2451 = vpop.f32.mrf.mxu0
      %v2452 = vadd.f32 0.0, %v2451
      %2453 = vmatmul.f32.gmra.mxu0 %v2327
      %v2454 = vpop.f32.mrf.mxu0
      %v2455 = vadd.f32 0.0, %v2454
      %2456 = vmatmul.f32.gmra.mxu0 %v2330
      %v2457 = vpop.f32.mrf.mxu0
      %v2458 = vadd.f32 0.0, %v2457
      %2459 = vmatmul.f32.gmra.mxu0 %v2333
      %v2460 = vpop.f32.mrf.mxu0
      %v2461 = vadd.f32 0.0, %v2460
      %2462 = vmatmul.f32.gmra.mxu0 %v2336
      %v2463 = vpop.f32.mrf.mxu0
      %v2464 = vadd.f32 0.0, %v2463
      %2465 = vmatmul.f32.gmra.mxu0 %v2339
      %v2466 = vpop.f32.mrf.mxu0
      %v2467 = vadd.f32 0.0, %v2466
      %2468 = vmatmul.f32.gmra.mxu0 %v2342
      %v2469 = vpop.f32.mrf.mxu0
      %v2470 = vadd.f32 0.0, %v2469
      %2471 = vmatmul.f32.gmra.mxu0 %v2345
      %v2472 = vpop.f32.mrf.mxu0
      %v2473 = vadd.f32 0.0, %v2472
      %2474 = vmatmul.f32.gmra.mxu0 %v2348
      %v2475 = vpop.f32.mrf.mxu0
      %v2476 = vadd.f32 0.0, %v2475
      %2477 = vmatmul.f32.gmra.mxu0 %v2351
      %v2478 = vpop.f32.mrf.mxu0
      %v2479 = vadd.f32 0.0, %v2478
      %2480 = vmatmul.f32.gmra.mxu0 %v2354
      %v2481 = vpop.f32.mrf.mxu0
      %v2482 = vadd.f32 0.0, %v2481
      %2483 = vmatmul.f32.gmra.mxu0 %v2357
      %v2484 = vpop.f32.mrf.mxu0
      %v2485 = vadd.f32 0.0, %v2484
      %2486 = vmatmul.f32.gmra.mxu0 %v2360
      %v2487 = vpop.f32.mrf.mxu0
      %v2488 = vadd.f32 0.0, %v2487
      %2489 = vmatmul.f32.gmra.mxu0 %v2363
      %v2490 = vpop.f32.mrf.mxu0
      %v2491 = vadd.f32 0.0, %v2490
      %2492 = vmatmul.f32.gmra.mxu0 %v2366
      %v2493 = vpop.f32.mrf.mxu0
      %v2494 = vadd.f32 0.0, %v2493
      %2495 = vmatmul.f32.gmra.mxu0 %v2369
      %v2496 = vpop.f32.mrf.mxu0
      %v2497 = vadd.f32 0.0, %v2496
      %2498 = vmatmul.f32.gmra.mxu0 %v2372
      %v2499 = vpop.f32.mrf.mxu0
      %v2500 = vadd.f32 0.0, %v2499
      %2501 = vmatmul.f32.gmra.mxu0 %v2375
      %v2502 = vpop.f32.mrf.mxu0
      %v2503 = vadd.f32 0.0, %v2502
      %2504 = vmatmul.f32.gmra.mxu0 %v2378
      %v2505 = vpop.f32.mrf.mxu0
      %v2506 = vadd.f32 0.0, %v2505
      %2507 = vmatmul.f32.gmra.mxu0 %v2381
      %v2508 = vpop.f32.mrf.mxu0
      %v2509 = vadd.f32 0.0, %v2508
      %2510 = vmatmul.f32.gmra.mxu0 %v2384
      %v2511 = vpop.f32.mrf.mxu0
      %v2512 = vadd.f32 0.0, %v2511
      %2513 = vmatmul.f32.gmra.mxu0 %v2387
      %v2514 = vpop.f32.mrf.mxu0
      %v2515 = vadd.f32 0.0, %v2514
      %2516 = vdwg.mxu0
      %v2517 = vadd.f32 %v2207, %v2410
      %v2518 = vadd.f32 %v2208, %v2413
      %v2519 = vadd.f32 %v2209, %v2416
      %v2520 = vadd.f32 %v2210, %v2419
      %v2521 = vadd.f32 %v2211, %v2422
      %v2522 = vadd.f32 %v2212, %v2425
      %v2523 = vadd.f32 %v2213, %v2428
      %v2524 = vadd.f32 %v2214, %v2431
      %v2525 = vadd.f32 %v2215, %v2434
      %v2526 = vadd.f32 %v2216, %v2437
      %v2527 = vadd.f32 %v2217, %v2440
      %v2528 = vadd.f32 %v2218, %v2443
      %v2529 = vadd.f32 %v2219, %v2446
      %v2530 = vadd.f32 %v2220, %v2449
      %v2531 = vadd.f32 %v2221, %v2452
      %v2532 = vadd.f32 %v2222, %v2455
      %v2533 = vadd.f32 %v2223, %v2458
      %v2534 = vadd.f32 %v2224, %v2461
      %v2535 = vadd.f32 %v2225, %v2464
      %v2536 = vadd.f32 %v2226, %v2467
      %v2537 = vadd.f32 %v2227, %v2470
      %v2538 = vadd.f32 %v2228, %v2473
      %v2539 = vadd.f32 %v2229, %v2476
      %v2540 = vadd.f32 %v2230, %v2479
      %v2541 = vadd.f32 %v2231, %v2482
      %v2542 = vadd.f32 %v2232, %v2485
      %v2543 = vadd.f32 %v2233, %v2488
      %v2544 = vadd.f32 %v2234, %v2491
      %v2545 = vadd.f32 %v2235, %v2494
      %v2546 = vadd.f32 %v2236, %v2497
      %v2547 = vadd.f32 %v2237, %v2500
      %v2548 = vadd.f32 %v2238, %v2503
      %v2549 = vadd.f32 %v2239, %v2506
      %v2550 = vadd.f32 %v2240, %v2509
      %v2551 = vadd.f32 %v2241, %v2512
      %v2552 = vadd.f32 %v2242, %v2515
      %v2553 = vld [vmem:[#allocation2 + $0x25] sm:$0xff]
      %v2554 = vld [vmem:[#allocation2 + $0x2d] sm:$0xff]
      %v2555 = vld [vmem:[#allocation2 + $0x35] sm:$0xff]
      %v2556 = vld [vmem:[#allocation2 + $0x3d] sm:$0xff]
      %v2557 = vld [vmem:[#allocation2 + $0x45] sm:$0xff]
      %v2558 = vld [vmem:[#allocation2 + $0x4d] sm:$0xff]
      %v2559 = vld [vmem:[#allocation2 + $0x55] sm:$0xff]
      %v2560 = vld [vmem:[#allocation2 + $0x5d] sm:$0xff]
      %v2561 = vld [vmem:[#allocation2 + $0x65] sm:$0xff]
      %v2562 = vld [vmem:[#allocation2 + $0x6d] sm:$0xff]
      %v2563 = vld [vmem:[#allocation2 + $0x75] sm:$0xff]
      %v2564 = vld [vmem:[#allocation2 + $0x7d] sm:$0xff]
      %v2565 = vld [vmem:[#allocation2 + $0x85] sm:$0xff]
      %v2566 = vld [vmem:[#allocation2 + $0x8d] sm:$0xff]
      %v2567 = vld [vmem:[#allocation2 + $0x95] sm:$0xff]
      %v2568 = vld [vmem:[#allocation2 + $0x9d] sm:$0xff]
      %v2569 = vld [vmem:[#allocation2 + $0xa5] sm:$0xff]
      %v2570 = vld [vmem:[#allocation2 + $0xad] sm:$0xff]
      %v2571 = vld [vmem:[#allocation2 + $0xb5] sm:$0xff]
      %v2572 = vld [vmem:[#allocation2 + $0xbd] sm:$0xff]
      %v2573 = vld [vmem:[#allocation2 + $0xc5] sm:$0xff]
      %v2574 = vld [vmem:[#allocation2 + $0xcd] sm:$0xff]
      %v2575 = vld [vmem:[#allocation2 + $0xd5] sm:$0xff]
      %v2576 = vld [vmem:[#allocation2 + $0xdd] sm:$0xff]
      %v2577 = vld [vmem:[#allocation2 + $0xe5] sm:$0xff]
      %v2578 = vld [vmem:[#allocation2 + $0xed] sm:$0xff]
      %v2579 = vld [vmem:[#allocation2 + $0xf5] sm:$0xff]
      %v2580 = vld [vmem:[#allocation2 + $0xfd] sm:$0xff]
      %v2581 = vld [vmem:[#allocation2 + $0x105] sm:$0xff]
      %v2582 = vld [vmem:[#allocation2 + $0x10d] sm:$0xff]
      %v2583 = vld [vmem:[#allocation2 + $0x115] sm:$0xff]
      %v2584 = vld [vmem:[#allocation2 + $0x11d] sm:$0xff]
      %v2585 = vld [vmem:[#allocation2 + $0x125] sm:$0xff]
      %v2586 = vld [vmem:[#allocation2 + $0x12d] sm:$0xff]
      %v2587 = vld [vmem:[#allocation2 + $0x135] sm:$0xff]
      %v2588 = vld [vmem:[#allocation2 + $0x13d] sm:$0xff]
      %s2589 = scalar_lea.vmem %s2, 28
      %v2590 = vld [vmem:[%s2589] sm:$0xf]
      %v2592 = vsel %vm252, %v2553, 0
      %v2595 = vsel %vm252, %v2554, 0
      %v2598 = vsel %vm252, %v2555, 0
      %v2601 = vsel %vm252, %v2556, 0
      %v2604 = vsel %vm252, %v2557, 0
      %v2607 = vsel %vm252, %v2558, 0
      %v2610 = vsel %vm252, %v2559, 0
      %v2613 = vsel %vm252, %v2560, 0
      %v2616 = vsel %vm252, %v2561, 0
      %v2619 = vsel %vm252, %v2562, 0
      %v2622 = vsel %vm252, %v2563, 0
      %v2625 = vsel %vm252, %v2564, 0
      %v2628 = vsel %vm252, %v2565, 0
      %v2631 = vsel %vm252, %v2566, 0
      %v2634 = vsel %vm252, %v2567, 0
      %v2637 = vsel %vm252, %v2568, 0
      %v2640 = vsel %vm252, %v2569, 0
      %v2643 = vsel %vm252, %v2570, 0
      %v2646 = vsel %vm252, %v2571, 0
      %v2649 = vsel %vm252, %v2572, 0
      %v2652 = vsel %vm252, %v2573, 0
      %v2655 = vsel %vm252, %v2574, 0
      %v2658 = vsel %vm252, %v2575, 0
      %v2661 = vsel %vm252, %v2576, 0
      %v2664 = vsel %vm252, %v2577, 0
      %v2667 = vsel %vm252, %v2578, 0
      %v2670 = vsel %vm252, %v2579, 0
      %v2673 = vsel %vm252, %v2580, 0
      %v2676 = vsel %vm252, %v2581, 0
      %v2679 = vsel %vm252, %v2582, 0
      %v2682 = vsel %vm252, %v2583, 0
      %v2685 = vsel %vm252, %v2584, 0
      %v2688 = vsel %vm252, %v2585, 0
      %v2691 = vsel %vm252, %v2586, 0
      %v2694 = vsel %vm252, %v2587, 0
      %v2697 = vsel %vm252, %v2588, 0
      %v2700 = vsel %vm638, %v2590, 0
      %2702 = vmatpush.msra.mxu0 0.0
      %2703 = vmatpush.msra.mxu0 0.0
      %2704 = vmatpush.msra.mxu0 0.0
      %2705 = vmatpush.msra.mxu0 0.0
      %2706 = vmatpush.msra.mxu0 0.0
      %2707 = vmatpush.msra.mxu0 0.0
      %2708 = vmatpush.msra.mxu0 0.0
      %2709 = vmatpush.msra.mxu0 0.0
      %2710 = vmatpush.msra.mxu0 0.0
      %2711 = vmatpush.msra.mxu0 0.0
      %2712 = vmatpush.msra.mxu0 0.0
      %2713 = vmatpush.msra.mxu0 0.0
      %2714 = vmatpush.msra.mxu0 0.0
      %2715 = vmatpush.msra.mxu0 0.0
      %2716 = vmatpush.msra.mxu0 0.0
      %2717 = vmatpush.msra.mxu0 %v2700
      %2718 = vmatmul.f32.gmra.mxu0 %v2592
      %v2719 = vpop.f32.mrf.mxu0
      %v2720 = vadd.f32 0.0, %v2719
      %2721 = vmatmul.f32.gmra.mxu0 %v2595
      %v2722 = vpop.f32.mrf.mxu0
      %v2723 = vadd.f32 0.0, %v2722
      %2724 = vmatmul.f32.gmra.mxu0 %v2598
      %v2725 = vpop.f32.mrf.mxu0
      %v2726 = vadd.f32 0.0, %v2725
      %2727 = vmatmul.f32.gmra.mxu0 %v2601
      %v2728 = vpop.f32.mrf.mxu0
      %v2729 = vadd.f32 0.0, %v2728
      %2730 = vmatmul.f32.gmra.mxu0 %v2604
      %v2731 = vpop.f32.mrf.mxu0
      %v2732 = vadd.f32 0.0, %v2731
      %2733 = vmatmul.f32.gmra.mxu0 %v2607
      %v2734 = vpop.f32.mrf.mxu0
      %v2735 = vadd.f32 0.0, %v2734
      %2736 = vmatmul.f32.gmra.mxu0 %v2610
      %v2737 = vpop.f32.mrf.mxu0
      %v2738 = vadd.f32 0.0, %v2737
      %2739 = vmatmul.f32.gmra.mxu0 %v2613
      %v2740 = vpop.f32.mrf.mxu0
      %v2741 = vadd.f32 0.0, %v2740
      %2742 = vmatmul.f32.gmra.mxu0 %v2616
      %v2743 = vpop.f32.mrf.mxu0
      %v2744 = vadd.f32 0.0, %v2743
      %2745 = vmatmul.f32.gmra.mxu0 %v2619
      %v2746 = vpop.f32.mrf.mxu0
      %v2747 = vadd.f32 0.0, %v2746
      %2748 = vmatmul.f32.gmra.mxu0 %v2622
      %v2749 = vpop.f32.mrf.mxu0
      %v2750 = vadd.f32 0.0, %v2749
      %2751 = vmatmul.f32.gmra.mxu0 %v2625
      %v2752 = vpop.f32.mrf.mxu0
      %v2753 = vadd.f32 0.0, %v2752
      %2754 = vmatmul.f32.gmra.mxu0 %v2628
      %v2755 = vpop.f32.mrf.mxu0
      %v2756 = vadd.f32 0.0, %v2755
      %2757 = vmatmul.f32.gmra.mxu0 %v2631
      %v2758 = vpop.f32.mrf.mxu0
      %v2759 = vadd.f32 0.0, %v2758
      %2760 = vmatmul.f32.gmra.mxu0 %v2634
      %v2761 = vpop.f32.mrf.mxu0
      %v2762 = vadd.f32 0.0, %v2761
      %2763 = vmatmul.f32.gmra.mxu0 %v2637
      %v2764 = vpop.f32.mrf.mxu0
      %v2765 = vadd.f32 0.0, %v2764
      %2766 = vmatmul.f32.gmra.mxu0 %v2640
      %v2767 = vpop.f32.mrf.mxu0
      %v2768 = vadd.f32 0.0, %v2767
      %2769 = vmatmul.f32.gmra.mxu0 %v2643
      %v2770 = vpop.f32.mrf.mxu0
      %v2771 = vadd.f32 0.0, %v2770
      %2772 = vmatmul.f32.gmra.mxu0 %v2646
      %v2773 = vpop.f32.mrf.mxu0
      %v2774 = vadd.f32 0.0, %v2773
      %2775 = vmatmul.f32.gmra.mxu0 %v2649
      %v2776 = vpop.f32.mrf.mxu0
      %v2777 = vadd.f32 0.0, %v2776
      %2778 = vmatmul.f32.gmra.mxu0 %v2652
      %v2779 = vpop.f32.mrf.mxu0
      %v2780 = vadd.f32 0.0, %v2779
      %2781 = vmatmul.f32.gmra.mxu0 %v2655
      %v2782 = vpop.f32.mrf.mxu0
      %v2783 = vadd.f32 0.0, %v2782
      %2784 = vmatmul.f32.gmra.mxu0 %v2658
      %v2785 = vpop.f32.mrf.mxu0
      %v2786 = vadd.f32 0.0, %v2785
      %2787 = vmatmul.f32.gmra.mxu0 %v2661
      %v2788 = vpop.f32.mrf.mxu0
      %v2789 = vadd.f32 0.0, %v2788
      %2790 = vmatmul.f32.gmra.mxu0 %v2664
      %v2791 = vpop.f32.mrf.mxu0
      %v2792 = vadd.f32 0.0, %v2791
      %2793 = vmatmul.f32.gmra.mxu0 %v2667
      %v2794 = vpop.f32.mrf.mxu0
      %v2795 = vadd.f32 0.0, %v2794
      %2796 = vmatmul.f32.gmra.mxu0 %v2670
      %v2797 = vpop.f32.mrf.mxu0
      %v2798 = vadd.f32 0.0, %v2797
      %2799 = vmatmul.f32.gmra.mxu0 %v2673
      %v2800 = vpop.f32.mrf.mxu0
      %v2801 = vadd.f32 0.0, %v2800
      %2802 = vmatmul.f32.gmra.mxu0 %v2676
      %v2803 = vpop.f32.mrf.mxu0
      %v2804 = vadd.f32 0.0, %v2803
      %2805 = vmatmul.f32.gmra.mxu0 %v2679
      %v2806 = vpop.f32.mrf.mxu0
      %v2807 = vadd.f32 0.0, %v2806
      %2808 = vmatmul.f32.gmra.mxu0 %v2682
      %v2809 = vpop.f32.mrf.mxu0
      %v2810 = vadd.f32 0.0, %v2809
      %2811 = vmatmul.f32.gmra.mxu0 %v2685
      %v2812 = vpop.f32.mrf.mxu0
      %v2813 = vadd.f32 0.0, %v2812
      %2814 = vmatmul.f32.gmra.mxu0 %v2688
      %v2815 = vpop.f32.mrf.mxu0
      %v2816 = vadd.f32 0.0, %v2815
      %2817 = vmatmul.f32.gmra.mxu0 %v2691
      %v2818 = vpop.f32.mrf.mxu0
      %v2819 = vadd.f32 0.0, %v2818
      %2820 = vmatmul.f32.gmra.mxu0 %v2694
      %v2821 = vpop.f32.mrf.mxu0
      %v2822 = vadd.f32 0.0, %v2821
      %2823 = vmatmul.f32.gmra.mxu0 %v2697
      %v2824 = vpop.f32.mrf.mxu0
      %v2825 = vadd.f32 0.0, %v2824
      %2826 = vdwg.mxu0
      %v2827 = vadd.f32 %v2517, %v2720
      %v2828 = vadd.f32 %v2518, %v2723
      %v2829 = vadd.f32 %v2519, %v2726
      %v2830 = vadd.f32 %v2520, %v2729
      %v2831 = vadd.f32 %v2521, %v2732
      %v2832 = vadd.f32 %v2522, %v2735
      %v2833 = vadd.f32 %v2523, %v2738
      %v2834 = vadd.f32 %v2524, %v2741
      %v2835 = vadd.f32 %v2525, %v2744
      %v2836 = vadd.f32 %v2526, %v2747
      %v2837 = vadd.f32 %v2527, %v2750
      %v2838 = vadd.f32 %v2528, %v2753
      %v2839 = vadd.f32 %v2529, %v2756
      %v2840 = vadd.f32 %v2530, %v2759
      %v2841 = vadd.f32 %v2531, %v2762
      %v2842 = vadd.f32 %v2532, %v2765
      %v2843 = vadd.f32 %v2533, %v2768
      %v2844 = vadd.f32 %v2534, %v2771
      %v2845 = vadd.f32 %v2535, %v2774
      %v2846 = vadd.f32 %v2536, %v2777
      %v2847 = vadd.f32 %v2537, %v2780
      %v2848 = vadd.f32 %v2538, %v2783
      %v2849 = vadd.f32 %v2539, %v2786
      %v2850 = vadd.f32 %v2540, %v2789
      %v2851 = vadd.f32 %v2541, %v2792
      %v2852 = vadd.f32 %v2542, %v2795
      %v2853 = vadd.f32 %v2543, %v2798
      %v2854 = vadd.f32 %v2544, %v2801
      %v2855 = vadd.f32 %v2545, %v2804
      %v2856 = vadd.f32 %v2546, %v2807
      %v2857 = vadd.f32 %v2547, %v2810
      %v2858 = vadd.f32 %v2548, %v2813
      %v2859 = vadd.f32 %v2549, %v2816
      %v2860 = vadd.f32 %v2550, %v2819
      %v2861 = vadd.f32 %v2551, %v2822
      %v2862 = vadd.f32 %v2552, %v2825
      %v2863 = vld [vmem:[#allocation2 + $0x26] sm:$0xff]
      %v2864 = vld [vmem:[#allocation2 + $0x2e] sm:$0xff]
      %v2865 = vld [vmem:[#allocation2 + $0x36] sm:$0xff]
      %v2866 = vld [vmem:[#allocation2 + $0x3e] sm:$0xff]
      %v2867 = vld [vmem:[#allocation2 + $0x46] sm:$0xff]
      %v2868 = vld [vmem:[#allocation2 + $0x4e] sm:$0xff]
      %v2869 = vld [vmem:[#allocation2 + $0x56] sm:$0xff]
      %v2870 = vld [vmem:[#allocation2 + $0x5e] sm:$0xff]
      %v2871 = vld [vmem:[#allocation2 + $0x66] sm:$0xff]
      %v2872 = vld [vmem:[#allocation2 + $0x6e] sm:$0xff]
      %v2873 = vld [vmem:[#allocation2 + $0x76] sm:$0xff]
      %v2874 = vld [vmem:[#allocation2 + $0x7e] sm:$0xff]
      %v2875 = vld [vmem:[#allocation2 + $0x86] sm:$0xff]
      %v2876 = vld [vmem:[#allocation2 + $0x8e] sm:$0xff]
      %v2877 = vld [vmem:[#allocation2 + $0x96] sm:$0xff]
      %v2878 = vld [vmem:[#allocation2 + $0x9e] sm:$0xff]
      %v2879 = vld [vmem:[#allocation2 + $0xa6] sm:$0xff]
      %v2880 = vld [vmem:[#allocation2 + $0xae] sm:$0xff]
      %v2881 = vld [vmem:[#allocation2 + $0xb6] sm:$0xff]
      %v2882 = vld [vmem:[#allocation2 + $0xbe] sm:$0xff]
      %v2883 = vld [vmem:[#allocation2 + $0xc6] sm:$0xff]
      %v2884 = vld [vmem:[#allocation2 + $0xce] sm:$0xff]
      %v2885 = vld [vmem:[#allocation2 + $0xd6] sm:$0xff]
      %v2886 = vld [vmem:[#allocation2 + $0xde] sm:$0xff]
      %v2887 = vld [vmem:[#allocation2 + $0xe6] sm:$0xff]
      %v2888 = vld [vmem:[#allocation2 + $0xee] sm:$0xff]
      %v2889 = vld [vmem:[#allocation2 + $0xf6] sm:$0xff]
      %v2890 = vld [vmem:[#allocation2 + $0xfe] sm:$0xff]
      %v2891 = vld [vmem:[#allocation2 + $0x106] sm:$0xff]
      %v2892 = vld [vmem:[#allocation2 + $0x10e] sm:$0xff]
      %v2893 = vld [vmem:[#allocation2 + $0x116] sm:$0xff]
      %v2894 = vld [vmem:[#allocation2 + $0x11e] sm:$0xff]
      %v2895 = vld [vmem:[#allocation2 + $0x126] sm:$0xff]
      %v2896 = vld [vmem:[#allocation2 + $0x12e] sm:$0xff]
      %v2897 = vld [vmem:[#allocation2 + $0x136] sm:$0xff]
      %v2898 = vld [vmem:[#allocation2 + $0x13e] sm:$0xff]
      %s2899 = scalar_lea.vmem %s2, 32
      %v2900 = vld [vmem:[%s2899] sm:$0xf]
      %v2902 = vsel %vm252, %v2863, 0
      %v2905 = vsel %vm252, %v2864, 0
      %v2908 = vsel %vm252, %v2865, 0
      %v2911 = vsel %vm252, %v2866, 0
      %v2914 = vsel %vm252, %v2867, 0
      %v2917 = vsel %vm252, %v2868, 0
      %v2920 = vsel %vm252, %v2869, 0
      %v2923 = vsel %vm252, %v2870, 0
      %v2926 = vsel %vm252, %v2871, 0
      %v2929 = vsel %vm252, %v2872, 0
      %v2932 = vsel %vm252, %v2873, 0
      %v2935 = vsel %vm252, %v2874, 0
      %v2938 = vsel %vm252, %v2875, 0
      %v2941 = vsel %vm252, %v2876, 0
      %v2944 = vsel %vm252, %v2877, 0
      %v2947 = vsel %vm252, %v2878, 0
      %v2950 = vsel %vm252, %v2879, 0
      %v2953 = vsel %vm252, %v2880, 0
      %v2956 = vsel %vm252, %v2881, 0
      %v2959 = vsel %vm252, %v2882, 0
      %v2962 = vsel %vm252, %v2883, 0
      %v2965 = vsel %vm252, %v2884, 0
      %v2968 = vsel %vm252, %v2885, 0
      %v2971 = vsel %vm252, %v2886, 0
      %v2974 = vsel %vm252, %v2887, 0
      %v2977 = vsel %vm252, %v2888, 0
      %v2980 = vsel %vm252, %v2889, 0
      %v2983 = vsel %vm252, %v2890, 0
      %v2986 = vsel %vm252, %v2891, 0
      %v2989 = vsel %vm252, %v2892, 0
      %v2992 = vsel %vm252, %v2893, 0
      %v2995 = vsel %vm252, %v2894, 0
      %v2998 = vsel %vm252, %v2895, 0
      %v3001 = vsel %vm252, %v2896, 0
      %v3004 = vsel %vm252, %v2897, 0
      %v3007 = vsel %vm252, %v2898, 0
      %v3010 = vsel %vm638, %v2900, 0
      %3012 = vmatpush.msra.mxu0 0.0
      %3013 = vmatpush.msra.mxu0 0.0
      %3014 = vmatpush.msra.mxu0 0.0
      %3015 = vmatpush.msra.mxu0 0.0
      %3016 = vmatpush.msra.mxu0 0.0
      %3017 = vmatpush.msra.mxu0 0.0
      %3018 = vmatpush.msra.mxu0 0.0
      %3019 = vmatpush.msra.mxu0 0.0
      %3020 = vmatpush.msra.mxu0 0.0
      %3021 = vmatpush.msra.mxu0 0.0
      %3022 = vmatpush.msra.mxu0 0.0
      %3023 = vmatpush.msra.mxu0 0.0
      %3024 = vmatpush.msra.mxu0 0.0
      %3025 = vmatpush.msra.mxu0 0.0
      %3026 = vmatpush.msra.mxu0 0.0
      %3027 = vmatpush.msra.mxu0 %v3010
      %3028 = vmatmul.f32.gmra.mxu0 %v2902
      %v3029 = vpop.f32.mrf.mxu0
      %v3030 = vadd.f32 0.0, %v3029
      %3031 = vmatmul.f32.gmra.mxu0 %v2905
      %v3032 = vpop.f32.mrf.mxu0
      %v3033 = vadd.f32 0.0, %v3032
      %3034 = vmatmul.f32.gmra.mxu0 %v2908
      %v3035 = vpop.f32.mrf.mxu0
      %v3036 = vadd.f32 0.0, %v3035
      %3037 = vmatmul.f32.gmra.mxu0 %v2911
      %v3038 = vpop.f32.mrf.mxu0
      %v3039 = vadd.f32 0.0, %v3038
      %3040 = vmatmul.f32.gmra.mxu0 %v2914
      %v3041 = vpop.f32.mrf.mxu0
      %v3042 = vadd.f32 0.0, %v3041
      %3043 = vmatmul.f32.gmra.mxu0 %v2917
      %v3044 = vpop.f32.mrf.mxu0
      %v3045 = vadd.f32 0.0, %v3044
      %3046 = vmatmul.f32.gmra.mxu0 %v2920
      %v3047 = vpop.f32.mrf.mxu0
      %v3048 = vadd.f32 0.0, %v3047
      %3049 = vmatmul.f32.gmra.mxu0 %v2923
      %v3050 = vpop.f32.mrf.mxu0
      %v3051 = vadd.f32 0.0, %v3050
      %3052 = vmatmul.f32.gmra.mxu0 %v2926
      %v3053 = vpop.f32.mrf.mxu0
      %v3054 = vadd.f32 0.0, %v3053
      %3055 = vmatmul.f32.gmra.mxu0 %v2929
      %v3056 = vpop.f32.mrf.mxu0
      %v3057 = vadd.f32 0.0, %v3056
      %3058 = vmatmul.f32.gmra.mxu0 %v2932
      %v3059 = vpop.f32.mrf.mxu0
      %v3060 = vadd.f32 0.0, %v3059
      %3061 = vmatmul.f32.gmra.mxu0 %v2935
      %v3062 = vpop.f32.mrf.mxu0
      %v3063 = vadd.f32 0.0, %v3062
      %3064 = vmatmul.f32.gmra.mxu0 %v2938
      %v3065 = vpop.f32.mrf.mxu0
      %v3066 = vadd.f32 0.0, %v3065
      %3067 = vmatmul.f32.gmra.mxu0 %v2941
      %v3068 = vpop.f32.mrf.mxu0
      %v3069 = vadd.f32 0.0, %v3068
      %3070 = vmatmul.f32.gmra.mxu0 %v2944
      %v3071 = vpop.f32.mrf.mxu0
      %v3072 = vadd.f32 0.0, %v3071
      %3073 = vmatmul.f32.gmra.mxu0 %v2947
      %v3074 = vpop.f32.mrf.mxu0
      %v3075 = vadd.f32 0.0, %v3074
      %3076 = vmatmul.f32.gmra.mxu0 %v2950
      %v3077 = vpop.f32.mrf.mxu0
      %v3078 = vadd.f32 0.0, %v3077
      %3079 = vmatmul.f32.gmra.mxu0 %v2953
      %v3080 = vpop.f32.mrf.mxu0
      %v3081 = vadd.f32 0.0, %v3080
      %3082 = vmatmul.f32.gmra.mxu0 %v2956
      %v3083 = vpop.f32.mrf.mxu0
      %v3084 = vadd.f32 0.0, %v3083
      %3085 = vmatmul.f32.gmra.mxu0 %v2959
      %v3086 = vpop.f32.mrf.mxu0
      %v3087 = vadd.f32 0.0, %v3086
      %3088 = vmatmul.f32.gmra.mxu0 %v2962
      %v3089 = vpop.f32.mrf.mxu0
      %v3090 = vadd.f32 0.0, %v3089
      %3091 = vmatmul.f32.gmra.mxu0 %v2965
      %v3092 = vpop.f32.mrf.mxu0
      %v3093 = vadd.f32 0.0, %v3092
      %3094 = vmatmul.f32.gmra.mxu0 %v2968
      %v3095 = vpop.f32.mrf.mxu0
      %v3096 = vadd.f32 0.0, %v3095
      %3097 = vmatmul.f32.gmra.mxu0 %v2971
      %v3098 = vpop.f32.mrf.mxu0
      %v3099 = vadd.f32 0.0, %v3098
      %3100 = vmatmul.f32.gmra.mxu0 %v2974
      %v3101 = vpop.f32.mrf.mxu0
      %v3102 = vadd.f32 0.0, %v3101
      %3103 = vmatmul.f32.gmra.mxu0 %v2977
      %v3104 = vpop.f32.mrf.mxu0
      %v3105 = vadd.f32 0.0, %v3104
      %3106 = vmatmul.f32.gmra.mxu0 %v2980
      %v3107 = vpop.f32.mrf.mxu0
      %v3108 = vadd.f32 0.0, %v3107
      %3109 = vmatmul.f32.gmra.mxu0 %v2983
      %v3110 = vpop.f32.mrf.mxu0
      %v3111 = vadd.f32 0.0, %v3110
      %3112 = vmatmul.f32.gmra.mxu0 %v2986
      %v3113 = vpop.f32.mrf.mxu0
      %v3114 = vadd.f32 0.0, %v3113
      %3115 = vmatmul.f32.gmra.mxu0 %v2989
      %v3116 = vpop.f32.mrf.mxu0
      %v3117 = vadd.f32 0.0, %v3116
      %3118 = vmatmul.f32.gmra.mxu0 %v2992
      %v3119 = vpop.f32.mrf.mxu0
      %v3120 = vadd.f32 0.0, %v3119
      %3121 = vmatmul.f32.gmra.mxu0 %v2995
      %v3122 = vpop.f32.mrf.mxu0
      %v3123 = vadd.f32 0.0, %v3122
      %3124 = vmatmul.f32.gmra.mxu0 %v2998
      %v3125 = vpop.f32.mrf.mxu0
      %v3126 = vadd.f32 0.0, %v3125
      %3127 = vmatmul.f32.gmra.mxu0 %v3001
      %v3128 = vpop.f32.mrf.mxu0
      %v3129 = vadd.f32 0.0, %v3128
      %3130 = vmatmul.f32.gmra.mxu0 %v3004
      %v3131 = vpop.f32.mrf.mxu0
      %v3132 = vadd.f32 0.0, %v3131
      %3133 = vmatmul.f32.gmra.mxu0 %v3007
      %v3134 = vpop.f32.mrf.mxu0
      %v3135 = vadd.f32 0.0, %v3134
      %3136 = vdwg.mxu0
      %v3137 = vadd.f32 %v2827, %v3030
      %v3138 = vadd.f32 %v2828, %v3033
      %v3139 = vadd.f32 %v2829, %v3036
      %v3140 = vadd.f32 %v2830, %v3039
      %v3141 = vadd.f32 %v2831, %v3042
      %v3142 = vadd.f32 %v2832, %v3045
      %v3143 = vadd.f32 %v2833, %v3048
      %v3144 = vadd.f32 %v2834, %v3051
      %v3145 = vadd.f32 %v2835, %v3054
      %v3146 = vadd.f32 %v2836, %v3057
      %v3147 = vadd.f32 %v2837, %v3060
      %v3148 = vadd.f32 %v2838, %v3063
      %v3149 = vadd.f32 %v2839, %v3066
      %v3150 = vadd.f32 %v2840, %v3069
      %v3151 = vadd.f32 %v2841, %v3072
      %v3152 = vadd.f32 %v2842, %v3075
      %v3153 = vadd.f32 %v2843, %v3078
      %v3154 = vadd.f32 %v2844, %v3081
      %v3155 = vadd.f32 %v2845, %v3084
      %v3156 = vadd.f32 %v2846, %v3087
      %v3157 = vadd.f32 %v2847, %v3090
      %v3158 = vadd.f32 %v2848, %v3093
      %v3159 = vadd.f32 %v2849, %v3096
      %v3160 = vadd.f32 %v2850, %v3099
      %v3161 = vadd.f32 %v2851, %v3102
      %v3162 = vadd.f32 %v2852, %v3105
      %v3163 = vadd.f32 %v2853, %v3108
      %v3164 = vadd.f32 %v2854, %v3111
      %v3165 = vadd.f32 %v2855, %v3114
      %v3166 = vadd.f32 %v2856, %v3117
      %v3167 = vadd.f32 %v2857, %v3120
      %v3168 = vadd.f32 %v2858, %v3123
      %v3169 = vadd.f32 %v2859, %v3126
      %v3170 = vadd.f32 %v2860, %v3129
      %v3171 = vadd.f32 %v2861, %v3132
      %v3172 = vadd.f32 %v2862, %v3135
      %v3173 = vld [vmem:[%s3] sm:$0x1]
      %v3175 = vperm.slane %v3173, 0
      %v3177 = vadd.f32 %v3137, %v3175
      %v3178 = vadd.f32 %v3138, %v3175
      %v3179 = vadd.f32 %v3139, %v3175
      %v3180 = vadd.f32 %v3140, %v3175
      %v3181 = vadd.f32 %v3141, %v3175
      %v3182 = vadd.f32 %v3142, %v3175
      %v3183 = vadd.f32 %v3143, %v3175
      %v3184 = vadd.f32 %v3144, %v3175
      %v3185 = vadd.f32 %v3145, %v3175
      %v3186 = vadd.f32 %v3146, %v3175
      %v3187 = vadd.f32 %v3147, %v3175
      %v3188 = vadd.f32 %v3148, %v3175
      %v3189 = vadd.f32 %v3149, %v3175
      %v3190 = vadd.f32 %v3150, %v3175
      %v3191 = vadd.f32 %v3151, %v3175
      %v3192 = vadd.f32 %v3152, %v3175
      %v3193 = vadd.f32 %v3153, %v3175
      %v3194 = vadd.f32 %v3154, %v3175
      %v3195 = vadd.f32 %v3155, %v3175
      %v3196 = vadd.f32 %v3156, %v3175
      %v3197 = vadd.f32 %v3157, %v3175
      %v3198 = vadd.f32 %v3158, %v3175
      %v3199 = vadd.f32 %v3159, %v3175
      %v3200 = vadd.f32 %v3160, %v3175
      %v3201 = vadd.f32 %v3161, %v3175
      %v3202 = vadd.f32 %v3162, %v3175
      %v3203 = vadd.f32 %v3163, %v3175
      %v3204 = vadd.f32 %v3164, %v3175
      %v3205 = vadd.f32 %v3165, %v3175
      %v3206 = vadd.f32 %v3166, %v3175
      %v3207 = vadd.f32 %v3167, %v3175
      %v3208 = vadd.f32 %v3168, %v3175
      %v3209 = vadd.f32 %v3169, %v3175
      %v3210 = vadd.f32 %v3170, %v3175
      %v3211 = vadd.f32 %v3171, %v3175
      %v3212 = vadd.f32 %v3172, %v3175
      %v3213 = vmax.f32 %v3177, 0.0
      %v3214 = vmax.f32 %v3178, 0.0
      %v3215 = vmax.f32 %v3179, 0.0
      %v3216 = vmax.f32 %v3180, 0.0
      %v3217 = vmax.f32 %v3181, 0.0
      %v3218 = vmax.f32 %v3182, 0.0
      %v3219 = vmax.f32 %v3183, 0.0
      %v3220 = vmax.f32 %v3184, 0.0
      %v3221 = vmax.f32 %v3185, 0.0
      %v3222 = vmax.f32 %v3186, 0.0
      %v3223 = vmax.f32 %v3187, 0.0
      %v3224 = vmax.f32 %v3188, 0.0
      %v3225 = vmax.f32 %v3189, 0.0
      %v3226 = vmax.f32 %v3190, 0.0
      %v3227 = vmax.f32 %v3191, 0.0
      %v3228 = vmax.f32 %v3192, 0.0
      %v3229 = vmax.f32 %v3193, 0.0
      %v3230 = vmax.f32 %v3194, 0.0
      %v3231 = vmax.f32 %v3195, 0.0
      %v3232 = vmax.f32 %v3196, 0.0
      %v3233 = vmax.f32 %v3197, 0.0
      %v3234 = vmax.f32 %v3198, 0.0
      %v3235 = vmax.f32 %v3199, 0.0
      %v3236 = vmax.f32 %v3200, 0.0
      %v3237 = vmax.f32 %v3201, 0.0
      %v3238 = vmax.f32 %v3202, 0.0
      %v3239 = vmax.f32 %v3203, 0.0
      %v3240 = vmax.f32 %v3204, 0.0
      %v3241 = vmax.f32 %v3205, 0.0
      %v3242 = vmax.f32 %v3206, 0.0
      %v3243 = vmax.f32 %v3207, 0.0
      %v3244 = vmax.f32 %v3208, 0.0
      %v3245 = vmax.f32 %v3209, 0.0
      %v3246 = vmax.f32 %v3210, 0.0
      %v3247 = vmax.f32 %v3211, 0.0
      %v3248 = vmax.f32 %v3212, 0.0
      %3250 = vset.pattern.permute.xlu0 0
      %3251 = vperm.xlu0 %3250, %v419
      %v3252 = vpop.permute.xlu0 %3251
      %3255 = vset.pattern.permute.xlu0 0
      %3256 = vperm.xlu0 %3255, %v420
      %v3257 = vpop.permute.xlu0 %3256
      %3260 = vset.pattern.permute.xlu0 0
      %3261 = vperm.xlu0 %3260, %v421
      %v3262 = vpop.permute.xlu0 %3261
      %3265 = vset.pattern.permute.xlu0 0
      %3266 = vperm.xlu0 %3265, %v422
      %v3267 = vpop.permute.xlu0 %3266
      %3270 = vset.pattern.permute.xlu0 0
      %3271 = vperm.xlu0 %3270, %v423
      %v3272 = vpop.permute.xlu0 %3271
      %3275 = vset.pattern.permute.xlu0 0
      %3276 = vperm.xlu0 %3275, %v424
      %v3277 = vpop.permute.xlu0 %3276
      %3280 = vset.pattern.permute.xlu0 0
      %3281 = vperm.xlu0 %3280, %v425
      %v3282 = vpop.permute.xlu0 %3281
      %3285 = vset.pattern.permute.xlu0 0
      %3286 = vperm.xlu0 %3285, %v426
      %v3287 = vpop.permute.xlu0 %3286
      %3290 = vset.pattern.permute.xlu0 0
      %3291 = vperm.xlu0 %3290, %v427
      %v3292 = vpop.permute.xlu0 %3291
      %3295 = vset.pattern.permute.xlu0 0
      %3296 = vperm.xlu0 %3295, %v428
      %v3297 = vpop.permute.xlu0 %3296
      %3300 = vset.pattern.permute.xlu0 0
      %3301 = vperm.xlu0 %3300, %v429
      %v3302 = vpop.permute.xlu0 %3301
      %3305 = vset.pattern.permute.xlu0 0
      %3306 = vperm.xlu0 %3305, %v430
      %v3307 = vpop.permute.xlu0 %3306
      %3310 = vset.pattern.permute.xlu0 0
      %3311 = vperm.xlu0 %3310, %v431
      %v3312 = vpop.permute.xlu0 %3311
      %3315 = vset.pattern.permute.xlu0 0
      %3316 = vperm.xlu0 %3315, %v432
      %v3317 = vpop.permute.xlu0 %3316
      %3320 = vset.pattern.permute.xlu0 0
      %3321 = vperm.xlu0 %3320, %v433
      %v3322 = vpop.permute.xlu0 %3321
      %3325 = vset.pattern.permute.xlu0 0
      %3326 = vperm.xlu0 %3325, %v434
      %v3327 = vpop.permute.xlu0 %3326
      %3330 = vset.pattern.permute.xlu0 0
      %3331 = vperm.xlu0 %3330, %v435
      %v3332 = vpop.permute.xlu0 %3331
      %3335 = vset.pattern.permute.xlu0 0
      %3336 = vperm.xlu0 %3335, %v436
      %v3337 = vpop.permute.xlu0 %3336
      %3340 = vset.pattern.permute.xlu0 0
      %3341 = vperm.xlu0 %3340, %v437
      %v3342 = vpop.permute.xlu0 %3341
      %3345 = vset.pattern.permute.xlu0 0
      %3346 = vperm.xlu0 %3345, %v438
      %v3347 = vpop.permute.xlu0 %3346
      %3350 = vset.pattern.permute.xlu0 0
      %3351 = vperm.xlu0 %3350, %v439
      %v3352 = vpop.permute.xlu0 %3351
      %3355 = vset.pattern.permute.xlu0 0
      %3356 = vperm.xlu0 %3355, %v440
      %v3357 = vpop.permute.xlu0 %3356
      %3360 = vset.pattern.permute.xlu0 0
      %3361 = vperm.xlu0 %3360, %v441
      %v3362 = vpop.permute.xlu0 %3361
      %3365 = vset.pattern.permute.xlu0 0
      %3366 = vperm.xlu0 %3365, %v442
      %v3367 = vpop.permute.xlu0 %3366
      %3370 = vset.pattern.permute.xlu0 0
      %3371 = vperm.xlu0 %3370, %v443
      %v3372 = vpop.permute.xlu0 %3371
      %3375 = vset.pattern.permute.xlu0 0
      %3376 = vperm.xlu0 %3375, %v444
      %v3377 = vpop.permute.xlu0 %3376
      %3380 = vset.pattern.permute.xlu0 0
      %3381 = vperm.xlu0 %3380, %v445
      %v3382 = vpop.permute.xlu0 %3381
      %3385 = vset.pattern.permute.xlu0 0
      %3386 = vperm.xlu0 %3385, %v446
      %v3387 = vpop.permute.xlu0 %3386
      %3390 = vset.pattern.permute.xlu0 0
      %3391 = vperm.xlu0 %3390, %v447
      %v3392 = vpop.permute.xlu0 %3391
      %3395 = vset.pattern.permute.xlu0 0
      %3396 = vperm.xlu0 %3395, %v448
      %v3397 = vpop.permute.xlu0 %3396
      %3400 = vset.pattern.permute.xlu0 0
      %3401 = vperm.xlu0 %3400, %v449
      %v3402 = vpop.permute.xlu0 %3401
      %3405 = vset.pattern.permute.xlu0 0
      %3406 = vperm.xlu0 %3405, %v450
      %v3407 = vpop.permute.xlu0 %3406
      %3410 = vset.pattern.permute.xlu0 0
      %3411 = vperm.xlu0 %3410, %v451
      %v3412 = vpop.permute.xlu0 %3411
      %3415 = vset.pattern.permute.xlu0 0
      %3416 = vperm.xlu0 %3415, %v452
      %v3417 = vpop.permute.xlu0 %3416
      %3420 = vset.pattern.permute.xlu0 0
      %3421 = vperm.xlu0 %3420, %v453
      %v3422 = vpop.permute.xlu0 %3421
      %3425 = vset.pattern.permute.xlu0 0
      %3426 = vperm.xlu0 %3425, %v454
      %v3427 = vpop.permute.xlu0 %3426
      %v3429 = vmul.f32 %v3213, %v3252
      %v3430 = vmul.f32 %v3214, %v3257
      %v3431 = vmul.f32 %v3215, %v3262
      %v3432 = vmul.f32 %v3216, %v3267
      %v3433 = vmul.f32 %v3217, %v3272
      %v3434 = vmul.f32 %v3218, %v3277
      %v3435 = vmul.f32 %v3219, %v3282
      %v3436 = vmul.f32 %v3220, %v3287
      %v3437 = vmul.f32 %v3221, %v3292
      %v3438 = vmul.f32 %v3222, %v3297
      %v3439 = vmul.f32 %v3223, %v3302
      %v3440 = vmul.f32 %v3224, %v3307
      %v3441 = vmul.f32 %v3225, %v3312
      %v3442 = vmul.f32 %v3226, %v3317
      %v3443 = vmul.f32 %v3227, %v3322
      %v3444 = vmul.f32 %v3228, %v3327
      %v3445 = vmul.f32 %v3229, %v3332
      %v3446 = vmul.f32 %v3230, %v3337
      %v3447 = vmul.f32 %v3231, %v3342
      %v3448 = vmul.f32 %v3232, %v3347
      %v3449 = vmul.f32 %v3233, %v3352
      %v3450 = vmul.f32 %v3234, %v3357
      %v3451 = vmul.f32 %v3235, %v3362
      %v3452 = vmul.f32 %v3236, %v3367
      %v3453 = vmul.f32 %v3237, %v3372
      %v3454 = vmul.f32 %v3238, %v3377
      %v3455 = vmul.f32 %v3239, %v3382
      %v3456 = vmul.f32 %v3240, %v3387
      %v3457 = vmul.f32 %v3241, %v3392
      %v3458 = vmul.f32 %v3242, %v3397
      %v3459 = vmul.f32 %v3243, %v3402
      %v3460 = vmul.f32 %v3244, %v3407
      %v3461 = vmul.f32 %v3245, %v3412
      %v3462 = vmul.f32 %v3246, %v3417
      %v3463 = vmul.f32 %v3247, %v3422
      %v3464 = vmul.f32 %v3248, %v3427
      %3465 = vst.msk [vmem:[#allocation3 + $0x13] sm:$0xff] %vm296, %v3429
      %3466 = vst.msk [vmem:[#allocation3 + $0x1b] sm:$0xff] %vm296, %v3430
      %3467 = vst.msk [vmem:[#allocation3 + $0x23] sm:$0xff] %vm296, %v3431
      %3468 = vst.msk [vmem:[#allocation3 + $0x2b] sm:$0xff] %vm296, %v3432
      %3469 = vst.msk [vmem:[#allocation3 + $0x33] sm:$0xff] %vm296, %v3433
      %3470 = vst.msk [vmem:[#allocation3 + $0x3b] sm:$0xff] %vm296, %v3434
      %3471 = vst.msk [vmem:[#allocation3 + $0x43] sm:$0xff] %vm296, %v3435
      %3472 = vst.msk [vmem:[#allocation3 + $0x4b] sm:$0xff] %vm296, %v3436
      %3473 = vst.msk [vmem:[#allocation3 + $0x53] sm:$0xff] %vm296, %v3437
      %3474 = vst.msk [vmem:[#allocation3 + $0x5b] sm:$0xff] %vm296, %v3438
      %3475 = vst.msk [vmem:[#allocation3 + $0x63] sm:$0xff] %vm296, %v3439
      %3476 = vst.msk [vmem:[#allocation3 + $0x6b] sm:$0xff] %vm296, %v3440
      %3477 = vst.msk [vmem:[#allocation3 + $0x73] sm:$0xff] %vm296, %v3441
      %3478 = vst.msk [vmem:[#allocation3 + $0x7b] sm:$0xff] %vm296, %v3442
      %3479 = vst.msk [vmem:[#allocation3 + $0x83] sm:$0xff] %vm296, %v3443
      %3480 = vst.msk [vmem:[#allocation3 + $0x8b] sm:$0xff] %vm296, %v3444
      %3481 = vst.msk [vmem:[#allocation3 + $0x93] sm:$0xff] %vm296, %v3445
      %3482 = vst.msk [vmem:[#allocation3 + $0x9b] sm:$0xff] %vm296, %v3446
      %3483 = vst.msk [vmem:[#allocation3 + $0xa3] sm:$0xff] %vm296, %v3447
      %3484 = vst.msk [vmem:[#allocation3 + $0xab] sm:$0xff] %vm296, %v3448
      %3485 = vst.msk [vmem:[#allocation3 + $0xb3] sm:$0xff] %vm296, %v3449
      %3486 = vst.msk [vmem:[#allocation3 + $0xbb] sm:$0xff] %vm296, %v3450
      %3487 = vst.msk [vmem:[#allocation3 + $0xc3] sm:$0xff] %vm296, %v3451
      %3488 = vst.msk [vmem:[#allocation3 + $0xcb] sm:$0xff] %vm296, %v3452
      %3489 = vst.msk [vmem:[#allocation3 + $0xd3] sm:$0xff] %vm296, %v3453
      %3490 = vst.msk [vmem:[#allocation3 + $0xdb] sm:$0xff] %vm296, %v3454
      %3491 = vst.msk [vmem:[#allocation3 + $0xe3] sm:$0xff] %vm296, %v3455
      %3492 = vst.msk [vmem:[#allocation3 + $0xeb] sm:$0xff] %vm296, %v3456
      %3493 = vst.msk [vmem:[#allocation3 + $0xf3] sm:$0xff] %vm296, %v3457
      %3494 = vst.msk [vmem:[#allocation3 + $0xfb] sm:$0xff] %vm296, %v3458
      %3495 = vst.msk [vmem:[#allocation3 + $0x103] sm:$0xff] %vm296, %v3459
      %3496 = vst.msk [vmem:[#allocation3 + $0x10b] sm:$0xff] %vm296, %v3460
      %3497 = vst.msk [vmem:[#allocation3 + $0x113] sm:$0xff] %vm296, %v3461
      %3498 = vst.msk [vmem:[#allocation3 + $0x11b] sm:$0xff] %vm296, %v3462
      %3499 = vst.msk [vmem:[#allocation3 + $0x123] sm:$0xff] %vm296, %v3463
      %3500 = vst.msk [vmem:[#allocation3 + $0x12b] sm:$0xff] %vm296, %v3464
      %v3501 = vld [vmem:[#allocation3] sm:$0xff]
      %v3502 = vld [vmem:[#allocation3 + $0x8] sm:$0xff]
      %v3503 = vld [vmem:[#allocation3 + $0x10] sm:$0xff]
      %v3504 = vld [vmem:[#allocation3 + $0x18] sm:$0xff]
      %v3505 = vld [vmem:[#allocation3 + $0x20] sm:$0xff]
      %v3506 = vld [vmem:[#allocation3 + $0x28] sm:$0xff]
      %v3507 = vld [vmem:[#allocation3 + $0x30] sm:$0xff]
      %v3508 = vld [vmem:[#allocation3 + $0x38] sm:$0xff]
      %v3509 = vld [vmem:[#allocation3 + $0x40] sm:$0xff]
      %v3510 = vld [vmem:[#allocation3 + $0x48] sm:$0xff]
      %v3511 = vld [vmem:[#allocation3 + $0x50] sm:$0xff]
      %v3512 = vld [vmem:[#allocation3 + $0x58] sm:$0xff]
      %v3513 = vld [vmem:[#allocation3 + $0x60] sm:$0xff]
      %v3514 = vld [vmem:[#allocation3 + $0x68] sm:$0xff]
      %v3515 = vld [vmem:[#allocation3 + $0x70] sm:$0xff]
      %v3516 = vld [vmem:[#allocation3 + $0x78] sm:$0xff]
      %v3517 = vld [vmem:[#allocation3 + $0x80] sm:$0xff]
      %v3518 = vld [vmem:[#allocation3 + $0x88] sm:$0xff]
      %v3519 = vld [vmem:[#allocation3 + $0x90] sm:$0xff]
      %v3520 = vld [vmem:[#allocation3 + $0x98] sm:$0xff]
      %v3521 = vld [vmem:[#allocation3 + $0xa0] sm:$0xff]
      %v3522 = vld [vmem:[#allocation3 + $0xa8] sm:$0xff]
      %v3523 = vld [vmem:[#allocation3 + $0xb0] sm:$0xff]
      %v3524 = vld [vmem:[#allocation3 + $0xb8] sm:$0xff]
      %v3525 = vld [vmem:[#allocation3 + $0xc0] sm:$0xff]
      %v3526 = vld [vmem:[#allocation3 + $0xc8] sm:$0xff]
      %v3527 = vld [vmem:[#allocation3 + $0xd0] sm:$0xff]
      %v3528 = vld [vmem:[#allocation3 + $0xd8] sm:$0xff]
      %v3529 = vld [vmem:[#allocation3 + $0xe0] sm:$0xff]
      %v3530 = vld [vmem:[#allocation3 + $0xe8] sm:$0xff]
      %v3531 = vld [vmem:[#allocation3 + $0xf0] sm:$0xff]
      %v3532 = vld [vmem:[#allocation3 + $0xf8] sm:$0xff]
      %v3533 = vld [vmem:[#allocation3 + $0x100] sm:$0xff]
      %v3534 = vld [vmem:[#allocation3 + $0x108] sm:$0xff]
      %v3535 = vld [vmem:[#allocation3 + $0x110] sm:$0xff]
      %v3536 = vld [vmem:[#allocation3 + $0x118] sm:$0xff]
      %v3537 = vld [vmem:[%s4] sm:$0xff]
      %v3538 = vld [vmem:[#allocation3 + $0x1] sm:$0xff]
      %v3539 = vld [vmem:[#allocation3 + $0x9] sm:$0xff]
      %v3540 = vld [vmem:[#allocation3 + $0x11] sm:$0xff]
      %v3541 = vld [vmem:[#allocation3 + $0x19] sm:$0xff]
      %v3542 = vld [vmem:[#allocation3 + $0x21] sm:$0xff]
      %v3543 = vld [vmem:[#allocation3 + $0x29] sm:$0xff]
      %v3544 = vld [vmem:[#allocation3 + $0x31] sm:$0xff]
      %v3545 = vld [vmem:[#allocation3 + $0x39] sm:$0xff]
      %v3546 = vld [vmem:[#allocation3 + $0x41] sm:$0xff]
      %v3547 = vld [vmem:[#allocation3 + $0x49] sm:$0xff]
      %v3548 = vld [vmem:[#allocation3 + $0x51] sm:$0xff]
      %v3549 = vld [vmem:[#allocation3 + $0x59] sm:$0xff]
      %v3550 = vld [vmem:[#allocation3 + $0x61] sm:$0xff]
      %v3551 = vld [vmem:[#allocation3 + $0x69] sm:$0xff]
      %v3552 = vld [vmem:[#allocation3 + $0x71] sm:$0xff]
      %v3553 = vld [vmem:[#allocation3 + $0x79] sm:$0xff]
      %v3554 = vld [vmem:[#allocation3 + $0x81] sm:$0xff]
      %v3555 = vld [vmem:[#allocation3 + $0x89] sm:$0xff]
      %v3556 = vld [vmem:[#allocation3 + $0x91] sm:$0xff]
      %v3557 = vld [vmem:[#allocation3 + $0x99] sm:$0xff]
      %v3558 = vld [vmem:[#allocation3 + $0xa1] sm:$0xff]
      %v3559 = vld [vmem:[#allocation3 + $0xa9] sm:$0xff]
      %v3560 = vld [vmem:[#allocation3 + $0xb1] sm:$0xff]
      %v3561 = vld [vmem:[#allocation3 + $0xb9] sm:$0xff]
      %v3562 = vld [vmem:[#allocation3 + $0xc1] sm:$0xff]
      %v3563 = vld [vmem:[#allocation3 + $0xc9] sm:$0xff]
      %v3564 = vld [vmem:[#allocation3 + $0xd1] sm:$0xff]
      %v3565 = vld [vmem:[#allocation3 + $0xd9] sm:$0xff]
      %v3566 = vld [vmem:[#allocation3 + $0xe1] sm:$0xff]
      %v3567 = vld [vmem:[#allocation3 + $0xe9] sm:$0xff]
      %v3568 = vld [vmem:[#allocation3 + $0xf1] sm:$0xff]
      %v3569 = vld [vmem:[#allocation3 + $0xf9] sm:$0xff]
      %v3570 = vld [vmem:[#allocation3 + $0x101] sm:$0xff]
      %v3571 = vld [vmem:[#allocation3 + $0x109] sm:$0xff]
      %v3572 = vld [vmem:[#allocation3 + $0x111] sm:$0xff]
      %v3573 = vld [vmem:[#allocation3 + $0x119] sm:$0xff]
      %s3574 = scalar_lea.vmem %s4, 8
      %v3575 = vld [vmem:[%s3574] sm:$0xff]
      %v3577 = vsel %vm296, %v3538, 0
      %v3580 = vsel %vm296, %v3539, 0
      %v3583 = vsel %vm296, %v3540, 0
      %v3586 = vsel %vm296, %v3541, 0
      %v3589 = vsel %vm296, %v3542, 0
      %v3592 = vsel %vm296, %v3543, 0
      %v3595 = vsel %vm296, %v3544, 0
      %v3598 = vsel %vm296, %v3545, 0
      %v3601 = vsel %vm296, %v3546, 0
      %v3604 = vsel %vm296, %v3547, 0
      %v3607 = vsel %vm296, %v3548, 0
      %v3610 = vsel %vm296, %v3549, 0
      %v3613 = vsel %vm296, %v3550, 0
      %v3616 = vsel %vm296, %v3551, 0
      %v3619 = vsel %vm296, %v3552, 0
      %v3622 = vsel %vm296, %v3553, 0
      %v3625 = vsel %vm296, %v3554, 0
      %v3628 = vsel %vm296, %v3555, 0
      %v3631 = vsel %vm296, %v3556, 0
      %v3634 = vsel %vm296, %v3557, 0
      %v3637 = vsel %vm296, %v3558, 0
      %v3640 = vsel %vm296, %v3559, 0
      %v3643 = vsel %vm296, %v3560, 0
      %v3646 = vsel %vm296, %v3561, 0
      %v3649 = vsel %vm296, %v3562, 0
      %v3652 = vsel %vm296, %v3563, 0
      %v3655 = vsel %vm296, %v3564, 0
      %v3658 = vsel %vm296, %v3565, 0
      %v3661 = vsel %vm296, %v3566, 0
      %v3664 = vsel %vm296, %v3567, 0
      %v3667 = vsel %vm296, %v3568, 0
      %v3670 = vsel %vm296, %v3569, 0
      %v3673 = vsel %vm296, %v3570, 0
      %v3676 = vsel %vm296, %v3571, 0
      %v3679 = vsel %vm296, %v3572, 0
      %v3682 = vsel %vm296, %v3573, 0
      %3684 = vmatpush.msra.mxu0 0.0
      %3685 = vmatpush.msra.mxu0 0.0
      %3686 = vmatpush.msra.mxu0 0.0
      %3687 = vmatpush.msra.mxu0 0.0
      %3688 = vmatpush.msra.mxu0 0.0
      %3689 = vmatpush.msra.mxu0 0.0
      %3690 = vmatpush.msra.mxu0 0.0
      %3691 = vmatpush.msra.mxu0 0.0
      %3692 = vmatpush.msra.mxu0 0.0
      %3693 = vmatpush.msra.mxu0 0.0
      %3694 = vmatpush.msra.mxu0 0.0
      %3695 = vmatpush.msra.mxu0 0.0
      %3696 = vmatpush.msra.mxu0 0.0
      %3697 = vmatpush.msra.mxu0 0.0
      %3698 = vmatpush.msra.mxu0 0.0
      %3699 = vmatpush.msra.mxu0 %v3575
      %3700 = vmatmul.f32.gmra.mxu0 %v3577
      %v3701 = vpop.f32.mrf.mxu0
      %v3702 = vadd.f32 0.0, %v3701
      %3703 = vmatmul.f32.gmra.mxu0 %v3580
      %v3704 = vpop.f32.mrf.mxu0
      %v3705 = vadd.f32 0.0, %v3704
      %3706 = vmatmul.f32.gmra.mxu0 %v3583
      %v3707 = vpop.f32.mrf.mxu0
      %v3708 = vadd.f32 0.0, %v3707
      %3709 = vmatmul.f32.gmra.mxu0 %v3586
      %v3710 = vpop.f32.mrf.mxu0
      %v3711 = vadd.f32 0.0, %v3710
      %3712 = vmatmul.f32.gmra.mxu0 %v3589
      %v3713 = vpop.f32.mrf.mxu0
      %v3714 = vadd.f32 0.0, %v3713
      %3715 = vmatmul.f32.gmra.mxu0 %v3592
      %v3716 = vpop.f32.mrf.mxu0
      %v3717 = vadd.f32 0.0, %v3716
      %3718 = vmatmul.f32.gmra.mxu0 %v3595
      %v3719 = vpop.f32.mrf.mxu0
      %v3720 = vadd.f32 0.0, %v3719
      %3721 = vmatmul.f32.gmra.mxu0 %v3598
      %v3722 = vpop.f32.mrf.mxu0
      %v3723 = vadd.f32 0.0, %v3722
      %3724 = vmatmul.f32.gmra.mxu0 %v3601
      %v3725 = vpop.f32.mrf.mxu0
      %v3726 = vadd.f32 0.0, %v3725
      %3727 = vmatmul.f32.gmra.mxu0 %v3604
      %v3728 = vpop.f32.mrf.mxu0
      %v3729 = vadd.f32 0.0, %v3728
      %3730 = vmatmul.f32.gmra.mxu0 %v3607
      %v3731 = vpop.f32.mrf.mxu0
      %v3732 = vadd.f32 0.0, %v3731
      %3733 = vmatmul.f32.gmra.mxu0 %v3610
      %v3734 = vpop.f32.mrf.mxu0
      %v3735 = vadd.f32 0.0, %v3734
      %3736 = vmatmul.f32.gmra.mxu0 %v3613
      %v3737 = vpop.f32.mrf.mxu0
      %v3738 = vadd.f32 0.0, %v3737
      %3739 = vmatmul.f32.gmra.mxu0 %v3616
      %v3740 = vpop.f32.mrf.mxu0
      %v3741 = vadd.f32 0.0, %v3740
      %3742 = vmatmul.f32.gmra.mxu0 %v3619
      %v3743 = vpop.f32.mrf.mxu0
      %v3744 = vadd.f32 0.0, %v3743
      %3745 = vmatmul.f32.gmra.mxu0 %v3622
      %v3746 = vpop.f32.mrf.mxu0
      %v3747 = vadd.f32 0.0, %v3746
      %3748 = vmatmul.f32.gmra.mxu0 %v3625
      %v3749 = vpop.f32.mrf.mxu0
      %v3750 = vadd.f32 0.0, %v3749
      %3751 = vmatmul.f32.gmra.mxu0 %v3628
      %v3752 = vpop.f32.mrf.mxu0
      %v3753 = vadd.f32 0.0, %v3752
      %3754 = vmatmul.f32.gmra.mxu0 %v3631
      %v3755 = vpop.f32.mrf.mxu0
      %v3756 = vadd.f32 0.0, %v3755
      %3757 = vmatmul.f32.gmra.mxu0 %v3634
      %v3758 = vpop.f32.mrf.mxu0
      %v3759 = vadd.f32 0.0, %v3758
      %3760 = vmatmul.f32.gmra.mxu0 %v3637
      %v3761 = vpop.f32.mrf.mxu0
      %v3762 = vadd.f32 0.0, %v3761
      %3763 = vmatmul.f32.gmra.mxu0 %v3640
      %v3764 = vpop.f32.mrf.mxu0
      %v3765 = vadd.f32 0.0, %v3764
      %3766 = vmatmul.f32.gmra.mxu0 %v3643
      %v3767 = vpop.f32.mrf.mxu0
      %v3768 = vadd.f32 0.0, %v3767
      %3769 = vmatmul.f32.gmra.mxu0 %v3646
      %v3770 = vpop.f32.mrf.mxu0
      %v3771 = vadd.f32 0.0, %v3770
      %3772 = vmatmul.f32.gmra.mxu0 %v3649
      %v3773 = vpop.f32.mrf.mxu0
      %v3774 = vadd.f32 0.0, %v3773
      %3775 = vmatmul.f32.gmra.mxu0 %v3652
      %v3776 = vpop.f32.mrf.mxu0
      %v3777 = vadd.f32 0.0, %v3776
      %3778 = vmatmul.f32.gmra.mxu0 %v3655
      %v3779 = vpop.f32.mrf.mxu0
      %v3780 = vadd.f32 0.0, %v3779
      %3781 = vmatmul.f32.gmra.mxu0 %v3658
      %v3782 = vpop.f32.mrf.mxu0
      %v3783 = vadd.f32 0.0, %v3782
      %3784 = vmatmul.f32.gmra.mxu0 %v3661
      %v3785 = vpop.f32.mrf.mxu0
      %v3786 = vadd.f32 0.0, %v3785
      %3787 = vmatmul.f32.gmra.mxu0 %v3664
      %v3788 = vpop.f32.mrf.mxu0
      %v3789 = vadd.f32 0.0, %v3788
      %3790 = vmatmul.f32.gmra.mxu0 %v3667
      %v3791 = vpop.f32.mrf.mxu0
      %v3792 = vadd.f32 0.0, %v3791
      %3793 = vmatmul.f32.gmra.mxu0 %v3670
      %v3794 = vpop.f32.mrf.mxu0
      %v3795 = vadd.f32 0.0, %v3794
      %3796 = vmatmul.f32.gmra.mxu0 %v3673
      %v3797 = vpop.f32.mrf.mxu0
      %v3798 = vadd.f32 0.0, %v3797
      %3799 = vmatmul.f32.gmra.mxu0 %v3676
      %v3800 = vpop.f32.mrf.mxu0
      %v3801 = vadd.f32 0.0, %v3800
      %3802 = vmatmul.f32.gmra.mxu0 %v3679
      %v3803 = vpop.f32.mrf.mxu0
      %v3804 = vadd.f32 0.0, %v3803
      %3805 = vmatmul.f32.gmra.mxu0 %v3682
      %v3806 = vpop.f32.mrf.mxu0
      %v3807 = vadd.f32 0.0, %v3806
      %3808 = vdwg.mxu0
      %v3810 = vsel %vm296, %v3501, 0
      %v3813 = vsel %vm296, %v3502, 0
      %v3816 = vsel %vm296, %v3503, 0
      %v3819 = vsel %vm296, %v3504, 0
      %v3822 = vsel %vm296, %v3505, 0
      %v3825 = vsel %vm296, %v3506, 0
      %v3828 = vsel %vm296, %v3507, 0
      %v3831 = vsel %vm296, %v3508, 0
      %v3834 = vsel %vm296, %v3509, 0
      %v3837 = vsel %vm296, %v3510, 0
      %v3840 = vsel %vm296, %v3511, 0
      %v3843 = vsel %vm296, %v3512, 0
      %v3846 = vsel %vm296, %v3513, 0
      %v3849 = vsel %vm296, %v3514, 0
      %v3852 = vsel %vm296, %v3515, 0
      %v3855 = vsel %vm296, %v3516, 0
      %v3858 = vsel %vm296, %v3517, 0
      %v3861 = vsel %vm296, %v3518, 0
      %v3864 = vsel %vm296, %v3519, 0
      %v3867 = vsel %vm296, %v3520, 0
      %v3870 = vsel %vm296, %v3521, 0
      %v3873 = vsel %vm296, %v3522, 0
      %v3876 = vsel %vm296, %v3523, 0
      %v3879 = vsel %vm296, %v3524, 0
      %v3882 = vsel %vm296, %v3525, 0
      %v3885 = vsel %vm296, %v3526, 0
      %v3888 = vsel %vm296, %v3527, 0
      %v3891 = vsel %vm296, %v3528, 0
      %v3894 = vsel %vm296, %v3529, 0
      %v3897 = vsel %vm296, %v3530, 0
      %v3900 = vsel %vm296, %v3531, 0
      %v3903 = vsel %vm296, %v3532, 0
      %v3906 = vsel %vm296, %v3533, 0
      %v3909 = vsel %vm296, %v3534, 0
      %v3912 = vsel %vm296, %v3535, 0
      %v3915 = vsel %vm296, %v3536, 0
      %3917 = vmatpush.msra.mxu0 0.0
      %3918 = vmatpush.msra.mxu0 0.0
      %3919 = vmatpush.msra.mxu0 0.0
      %3920 = vmatpush.msra.mxu0 0.0
      %3921 = vmatpush.msra.mxu0 0.0
      %3922 = vmatpush.msra.mxu0 0.0
      %3923 = vmatpush.msra.mxu0 0.0
      %3924 = vmatpush.msra.mxu0 0.0
      %3925 = vmatpush.msra.mxu0 0.0
      %3926 = vmatpush.msra.mxu0 0.0
      %3927 = vmatpush.msra.mxu0 0.0
      %3928 = vmatpush.msra.mxu0 0.0
      %3929 = vmatpush.msra.mxu0 0.0
      %3930 = vmatpush.msra.mxu0 0.0
      %3931 = vmatpush.msra.mxu0 0.0
      %3932 = vmatpush.msra.mxu0 %v3537
      %3933 = vmatmul.f32.gmra.mxu0 %v3810
      %v3934 = vpop.f32.mrf.mxu0
      %v3935 = vadd.f32 %v3702, %v3934
      %3936 = vmatmul.f32.gmra.mxu0 %v3813
      %v3937 = vpop.f32.mrf.mxu0
      %v3938 = vadd.f32 %v3705, %v3937
      %3939 = vmatmul.f32.gmra.mxu0 %v3816
      %v3940 = vpop.f32.mrf.mxu0
      %v3941 = vadd.f32 %v3708, %v3940
      %3942 = vmatmul.f32.gmra.mxu0 %v3819
      %v3943 = vpop.f32.mrf.mxu0
      %v3944 = vadd.f32 %v3711, %v3943
      %3945 = vmatmul.f32.gmra.mxu0 %v3822
      %v3946 = vpop.f32.mrf.mxu0
      %v3947 = vadd.f32 %v3714, %v3946
      %3948 = vmatmul.f32.gmra.mxu0 %v3825
      %v3949 = vpop.f32.mrf.mxu0
      %v3950 = vadd.f32 %v3717, %v3949
      %3951 = vmatmul.f32.gmra.mxu0 %v3828
      %v3952 = vpop.f32.mrf.mxu0
      %v3953 = vadd.f32 %v3720, %v3952
      %3954 = vmatmul.f32.gmra.mxu0 %v3831
      %v3955 = vpop.f32.mrf.mxu0
      %v3956 = vadd.f32 %v3723, %v3955
      %3957 = vmatmul.f32.gmra.mxu0 %v3834
      %v3958 = vpop.f32.mrf.mxu0
      %v3959 = vadd.f32 %v3726, %v3958
      %3960 = vmatmul.f32.gmra.mxu0 %v3837
      %v3961 = vpop.f32.mrf.mxu0
      %v3962 = vadd.f32 %v3729, %v3961
      %3963 = vmatmul.f32.gmra.mxu0 %v3840
      %v3964 = vpop.f32.mrf.mxu0
      %v3965 = vadd.f32 %v3732, %v3964
      %3966 = vmatmul.f32.gmra.mxu0 %v3843
      %v3967 = vpop.f32.mrf.mxu0
      %v3968 = vadd.f32 %v3735, %v3967
      %3969 = vmatmul.f32.gmra.mxu0 %v3846
      %v3970 = vpop.f32.mrf.mxu0
      %v3971 = vadd.f32 %v3738, %v3970
      %3972 = vmatmul.f32.gmra.mxu0 %v3849
      %v3973 = vpop.f32.mrf.mxu0
      %v3974 = vadd.f32 %v3741, %v3973
      %3975 = vmatmul.f32.gmra.mxu0 %v3852
      %v3976 = vpop.f32.mrf.mxu0
      %v3977 = vadd.f32 %v3744, %v3976
      %3978 = vmatmul.f32.gmra.mxu0 %v3855
      %v3979 = vpop.f32.mrf.mxu0
      %v3980 = vadd.f32 %v3747, %v3979
      %3981 = vmatmul.f32.gmra.mxu0 %v3858
      %v3982 = vpop.f32.mrf.mxu0
      %v3983 = vadd.f32 %v3750, %v3982
      %3984 = vmatmul.f32.gmra.mxu0 %v3861
      %v3985 = vpop.f32.mrf.mxu0
      %v3986 = vadd.f32 %v3753, %v3985
      %3987 = vmatmul.f32.gmra.mxu0 %v3864
      %v3988 = vpop.f32.mrf.mxu0
      %v3989 = vadd.f32 %v3756, %v3988
      %3990 = vmatmul.f32.gmra.mxu0 %v3867
      %v3991 = vpop.f32.mrf.mxu0
      %v3992 = vadd.f32 %v3759, %v3991
      %3993 = vmatmul.f32.gmra.mxu0 %v3870
      %v3994 = vpop.f32.mrf.mxu0
      %v3995 = vadd.f32 %v3762, %v3994
      %3996 = vmatmul.f32.gmra.mxu0 %v3873
      %v3997 = vpop.f32.mrf.mxu0
      %v3998 = vadd.f32 %v3765, %v3997
      %3999 = vmatmul.f32.gmra.mxu0 %v3876
      %v4000 = vpop.f32.mrf.mxu0
      %v4001 = vadd.f32 %v3768, %v4000
      %4002 = vmatmul.f32.gmra.mxu0 %v3879
      %v4003 = vpop.f32.mrf.mxu0
      %v4004 = vadd.f32 %v3771, %v4003
      %4005 = vmatmul.f32.gmra.mxu0 %v3882
      %v4006 = vpop.f32.mrf.mxu0
      %v4007 = vadd.f32 %v3774, %v4006
      %4008 = vmatmul.f32.gmra.mxu0 %v3885
      %v4009 = vpop.f32.mrf.mxu0
      %v4010 = vadd.f32 %v3777, %v4009
      %4011 = vmatmul.f32.gmra.mxu0 %v3888
      %v4012 = vpop.f32.mrf.mxu0
      %v4013 = vadd.f32 %v3780, %v4012
      %4014 = vmatmul.f32.gmra.mxu0 %v3891
      %v4015 = vpop.f32.mrf.mxu0
      %v4016 = vadd.f32 %v3783, %v4015
      %4017 = vmatmul.f32.gmra.mxu0 %v3894
      %v4018 = vpop.f32.mrf.mxu0
      %v4019 = vadd.f32 %v3786, %v4018
      %4020 = vmatmul.f32.gmra.mxu0 %v3897
      %v4021 = vpop.f32.mrf.mxu0
      %v4022 = vadd.f32 %v3789, %v4021
      %4023 = vmatmul.f32.gmra.mxu0 %v3900
      %v4024 = vpop.f32.mrf.mxu0
      %v4025 = vadd.f32 %v3792, %v4024
      %4026 = vmatmul.f32.gmra.mxu0 %v3903
      %v4027 = vpop.f32.mrf.mxu0
      %v4028 = vadd.f32 %v3795, %v4027
      %4029 = vmatmul.f32.gmra.mxu0 %v3906
      %v4030 = vpop.f32.mrf.mxu0
      %v4031 = vadd.f32 %v3798, %v4030
      %4032 = vmatmul.f32.gmra.mxu0 %v3909
      %v4033 = vpop.f32.mrf.mxu0
      %v4034 = vadd.f32 %v3801, %v4033
      %4035 = vmatmul.f32.gmra.mxu0 %v3912
      %v4036 = vpop.f32.mrf.mxu0
      %v4037 = vadd.f32 %v3804, %v4036
      %4038 = vmatmul.f32.gmra.mxu0 %v3915
      %v4039 = vpop.f32.mrf.mxu0
      %v4040 = vadd.f32 %v3807, %v4039
      %4041 = vdwg.mxu0
      %v4042 = vld [vmem:[#allocation3 + $0x2] sm:$0xff]
      %v4043 = vld [vmem:[#allocation3 + $0xa] sm:$0xff]
      %v4044 = vld [vmem:[#allocation3 + $0x12] sm:$0xff]
      %v4045 = vld [vmem:[#allocation3 + $0x1a] sm:$0xff]
      %v4046 = vld [vmem:[#allocation3 + $0x22] sm:$0xff]
      %v4047 = vld [vmem:[#allocation3 + $0x2a] sm:$0xff]
      %v4048 = vld [vmem:[#allocation3 + $0x32] sm:$0xff]
      %v4049 = vld [vmem:[#allocation3 + $0x3a] sm:$0xff]
      %v4050 = vld [vmem:[#allocation3 + $0x42] sm:$0xff]
      %v4051 = vld [vmem:[#allocation3 + $0x4a] sm:$0xff]
      %v4052 = vld [vmem:[#allocation3 + $0x52] sm:$0xff]
      %v4053 = vld [vmem:[#allocation3 + $0x5a] sm:$0xff]
      %v4054 = vld [vmem:[#allocation3 + $0x62] sm:$0xff]
      %v4055 = vld [vmem:[#allocation3 + $0x6a] sm:$0xff]
      %v4056 = vld [vmem:[#allocation3 + $0x72] sm:$0xff]
      %v4057 = vld [vmem:[#allocation3 + $0x7a] sm:$0xff]
      %v4058 = vld [vmem:[#allocation3 + $0x82] sm:$0xff]
      %v4059 = vld [vmem:[#allocation3 + $0x8a] sm:$0xff]
      %v4060 = vld [vmem:[#allocation3 + $0x92] sm:$0xff]
      %v4061 = vld [vmem:[#allocation3 + $0x9a] sm:$0xff]
      %v4062 = vld [vmem:[#allocation3 + $0xa2] sm:$0xff]
      %v4063 = vld [vmem:[#allocation3 + $0xaa] sm:$0xff]
      %v4064 = vld [vmem:[#allocation3 + $0xb2] sm:$0xff]
      %v4065 = vld [vmem:[#allocation3 + $0xba] sm:$0xff]
      %v4066 = vld [vmem:[#allocation3 + $0xc2] sm:$0xff]
      %v4067 = vld [vmem:[#allocation3 + $0xca] sm:$0xff]
      %v4068 = vld [vmem:[#allocation3 + $0xd2] sm:$0xff]
      %v4069 = vld [vmem:[#allocation3 + $0xda] sm:$0xff]
      %v4070 = vld [vmem:[#allocation3 + $0xe2] sm:$0xff]
      %v4071 = vld [vmem:[#allocation3 + $0xea] sm:$0xff]
      %v4072 = vld [vmem:[#allocation3 + $0xf2] sm:$0xff]
      %v4073 = vld [vmem:[#allocation3 + $0xfa] sm:$0xff]
      %v4074 = vld [vmem:[#allocation3 + $0x102] sm:$0xff]
      %v4075 = vld [vmem:[#allocation3 + $0x10a] sm:$0xff]
      %v4076 = vld [vmem:[#allocation3 + $0x112] sm:$0xff]
      %v4077 = vld [vmem:[#allocation3 + $0x11a] sm:$0xff]
      %s4078 = scalar_lea.vmem %s4, 16
      %v4079 = vld [vmem:[%s4078] sm:$0xff]
      %v4081 = vsel %vm296, %v4042, 0
      %v4084 = vsel %vm296, %v4043, 0
      %v4087 = vsel %vm296, %v4044, 0
      %v4090 = vsel %vm296, %v4045, 0
      %v4093 = vsel %vm296, %v4046, 0
      %v4096 = vsel %vm296, %v4047, 0
      %v4099 = vsel %vm296, %v4048, 0
      %v4102 = vsel %vm296, %v4049, 0
      %v4105 = vsel %vm296, %v4050, 0
      %v4108 = vsel %vm296, %v4051, 0
      %v4111 = vsel %vm296, %v4052, 0
      %v4114 = vsel %vm296, %v4053, 0
      %v4117 = vsel %vm296, %v4054, 0
      %v4120 = vsel %vm296, %v4055, 0
      %v4123 = vsel %vm296, %v4056, 0
      %v4126 = vsel %vm296, %v4057, 0
      %v4129 = vsel %vm296, %v4058, 0
      %v4132 = vsel %vm296, %v4059, 0
      %v4135 = vsel %vm296, %v4060, 0
      %v4138 = vsel %vm296, %v4061, 0
      %v4141 = vsel %vm296, %v4062, 0
      %v4144 = vsel %vm296, %v4063, 0
      %v4147 = vsel %vm296, %v4064, 0
      %v4150 = vsel %vm296, %v4065, 0
      %v4153 = vsel %vm296, %v4066, 0
      %v4156 = vsel %vm296, %v4067, 0
      %v4159 = vsel %vm296, %v4068, 0
      %v4162 = vsel %vm296, %v4069, 0
      %v4165 = vsel %vm296, %v4070, 0
      %v4168 = vsel %vm296, %v4071, 0
      %v4171 = vsel %vm296, %v4072, 0
      %v4174 = vsel %vm296, %v4073, 0
      %v4177 = vsel %vm296, %v4074, 0
      %v4180 = vsel %vm296, %v4075, 0
      %v4183 = vsel %vm296, %v4076, 0
      %v4186 = vsel %vm296, %v4077, 0
      %4188 = vmatpush.msra.mxu0 0.0
      %4189 = vmatpush.msra.mxu0 0.0
      %4190 = vmatpush.msra.mxu0 0.0
      %4191 = vmatpush.msra.mxu0 0.0
      %4192 = vmatpush.msra.mxu0 0.0
      %4193 = vmatpush.msra.mxu0 0.0
      %4194 = vmatpush.msra.mxu0 0.0
      %4195 = vmatpush.msra.mxu0 0.0
      %4196 = vmatpush.msra.mxu0 0.0
      %4197 = vmatpush.msra.mxu0 0.0
      %4198 = vmatpush.msra.mxu0 0.0
      %4199 = vmatpush.msra.mxu0 0.0
      %4200 = vmatpush.msra.mxu0 0.0
      %4201 = vmatpush.msra.mxu0 0.0
      %4202 = vmatpush.msra.mxu0 0.0
      %4203 = vmatpush.msra.mxu0 %v4079
      %4204 = vmatmul.f32.gmra.mxu0 %v4081
      %v4205 = vpop.f32.mrf.mxu0
      %v4206 = vadd.f32 0.0, %v4205
      %4207 = vmatmul.f32.gmra.mxu0 %v4084
      %v4208 = vpop.f32.mrf.mxu0
      %v4209 = vadd.f32 0.0, %v4208
      %4210 = vmatmul.f32.gmra.mxu0 %v4087
      %v4211 = vpop.f32.mrf.mxu0
      %v4212 = vadd.f32 0.0, %v4211
      %4213 = vmatmul.f32.gmra.mxu0 %v4090
      %v4214 = vpop.f32.mrf.mxu0
      %v4215 = vadd.f32 0.0, %v4214
      %4216 = vmatmul.f32.gmra.mxu0 %v4093
      %v4217 = vpop.f32.mrf.mxu0
      %v4218 = vadd.f32 0.0, %v4217
      %4219 = vmatmul.f32.gmra.mxu0 %v4096
      %v4220 = vpop.f32.mrf.mxu0
      %v4221 = vadd.f32 0.0, %v4220
      %4222 = vmatmul.f32.gmra.mxu0 %v4099
      %v4223 = vpop.f32.mrf.mxu0
      %v4224 = vadd.f32 0.0, %v4223
      %4225 = vmatmul.f32.gmra.mxu0 %v4102
      %v4226 = vpop.f32.mrf.mxu0
      %v4227 = vadd.f32 0.0, %v4226
      %4228 = vmatmul.f32.gmra.mxu0 %v4105
      %v4229 = vpop.f32.mrf.mxu0
      %v4230 = vadd.f32 0.0, %v4229
      %4231 = vmatmul.f32.gmra.mxu0 %v4108
      %v4232 = vpop.f32.mrf.mxu0
      %v4233 = vadd.f32 0.0, %v4232
      %4234 = vmatmul.f32.gmra.mxu0 %v4111
      %v4235 = vpop.f32.mrf.mxu0
      %v4236 = vadd.f32 0.0, %v4235
      %4237 = vmatmul.f32.gmra.mxu0 %v4114
      %v4238 = vpop.f32.mrf.mxu0
      %v4239 = vadd.f32 0.0, %v4238
      %4240 = vmatmul.f32.gmra.mxu0 %v4117
      %v4241 = vpop.f32.mrf.mxu0
      %v4242 = vadd.f32 0.0, %v4241
      %4243 = vmatmul.f32.gmra.mxu0 %v4120
      %v4244 = vpop.f32.mrf.mxu0
      %v4245 = vadd.f32 0.0, %v4244
      %4246 = vmatmul.f32.gmra.mxu0 %v4123
      %v4247 = vpop.f32.mrf.mxu0
      %v4248 = vadd.f32 0.0, %v4247
      %4249 = vmatmul.f32.gmra.mxu0 %v4126
      %v4250 = vpop.f32.mrf.mxu0
      %v4251 = vadd.f32 0.0, %v4250
      %4252 = vmatmul.f32.gmra.mxu0 %v4129
      %v4253 = vpop.f32.mrf.mxu0
      %v4254 = vadd.f32 0.0, %v4253
      %4255 = vmatmul.f32.gmra.mxu0 %v4132
      %v4256 = vpop.f32.mrf.mxu0
      %v4257 = vadd.f32 0.0, %v4256
      %4258 = vmatmul.f32.gmra.mxu0 %v4135
      %v4259 = vpop.f32.mrf.mxu0
      %v4260 = vadd.f32 0.0, %v4259
      %4261 = vmatmul.f32.gmra.mxu0 %v4138
      %v4262 = vpop.f32.mrf.mxu0
      %v4263 = vadd.f32 0.0, %v4262
      %4264 = vmatmul.f32.gmra.mxu0 %v4141
      %v4265 = vpop.f32.mrf.mxu0
      %v4266 = vadd.f32 0.0, %v4265
      %4267 = vmatmul.f32.gmra.mxu0 %v4144
      %v4268 = vpop.f32.mrf.mxu0
      %v4269 = vadd.f32 0.0, %v4268
      %4270 = vmatmul.f32.gmra.mxu0 %v4147
      %v4271 = vpop.f32.mrf.mxu0
      %v4272 = vadd.f32 0.0, %v4271
      %4273 = vmatmul.f32.gmra.mxu0 %v4150
      %v4274 = vpop.f32.mrf.mxu0
      %v4275 = vadd.f32 0.0, %v4274
      %4276 = vmatmul.f32.gmra.mxu0 %v4153
      %v4277 = vpop.f32.mrf.mxu0
      %v4278 = vadd.f32 0.0, %v4277
      %4279 = vmatmul.f32.gmra.mxu0 %v4156
      %v4280 = vpop.f32.mrf.mxu0
      %v4281 = vadd.f32 0.0, %v4280
      %4282 = vmatmul.f32.gmra.mxu0 %v4159
      %v4283 = vpop.f32.mrf.mxu0
      %v4284 = vadd.f32 0.0, %v4283
      %4285 = vmatmul.f32.gmra.mxu0 %v4162
      %v4286 = vpop.f32.mrf.mxu0
      %v4287 = vadd.f32 0.0, %v4286
      %4288 = vmatmul.f32.gmra.mxu0 %v4165
      %v4289 = vpop.f32.mrf.mxu0
      %v4290 = vadd.f32 0.0, %v4289
      %4291 = vmatmul.f32.gmra.mxu0 %v4168
      %v4292 = vpop.f32.mrf.mxu0
      %v4293 = vadd.f32 0.0, %v4292
      %4294 = vmatmul.f32.gmra.mxu0 %v4171
      %v4295 = vpop.f32.mrf.mxu0
      %v4296 = vadd.f32 0.0, %v4295
      %4297 = vmatmul.f32.gmra.mxu0 %v4174
      %v4298 = vpop.f32.mrf.mxu0
      %v4299 = vadd.f32 0.0, %v4298
      %4300 = vmatmul.f32.gmra.mxu0 %v4177
      %v4301 = vpop.f32.mrf.mxu0
      %v4302 = vadd.f32 0.0, %v4301
      %4303 = vmatmul.f32.gmra.mxu0 %v4180
      %v4304 = vpop.f32.mrf.mxu0
      %v4305 = vadd.f32 0.0, %v4304
      %4306 = vmatmul.f32.gmra.mxu0 %v4183
      %v4307 = vpop.f32.mrf.mxu0
      %v4308 = vadd.f32 0.0, %v4307
      %4309 = vmatmul.f32.gmra.mxu0 %v4186
      %v4310 = vpop.f32.mrf.mxu0
      %v4311 = vadd.f32 0.0, %v4310
      %4312 = vdwg.mxu0
      %v4313 = vadd.f32 %v3935, %v4206
      %v4314 = vadd.f32 %v3938, %v4209
      %v4315 = vadd.f32 %v3941, %v4212
      %v4316 = vadd.f32 %v3944, %v4215
      %v4317 = vadd.f32 %v3947, %v4218
      %v4318 = vadd.f32 %v3950, %v4221
      %v4319 = vadd.f32 %v3953, %v4224
      %v4320 = vadd.f32 %v3956, %v4227
      %v4321 = vadd.f32 %v3959, %v4230
      %v4322 = vadd.f32 %v3962, %v4233
      %v4323 = vadd.f32 %v3965, %v4236
      %v4324 = vadd.f32 %v3968, %v4239
      %v4325 = vadd.f32 %v3971, %v4242
      %v4326 = vadd.f32 %v3974, %v4245
      %v4327 = vadd.f32 %v3977, %v4248
      %v4328 = vadd.f32 %v3980, %v4251
      %v4329 = vadd.f32 %v3983, %v4254
      %v4330 = vadd.f32 %v3986, %v4257
      %v4331 = vadd.f32 %v3989, %v4260
      %v4332 = vadd.f32 %v3992, %v4263
      %v4333 = vadd.f32 %v3995, %v4266
      %v4334 = vadd.f32 %v3998, %v4269
      %v4335 = vadd.f32 %v4001, %v4272
      %v4336 = vadd.f32 %v4004, %v4275
      %v4337 = vadd.f32 %v4007, %v4278
      %v4338 = vadd.f32 %v4010, %v4281
      %v4339 = vadd.f32 %v4013, %v4284
      %v4340 = vadd.f32 %v4016, %v4287
      %v4341 = vadd.f32 %v4019, %v4290
      %v4342 = vadd.f32 %v4022, %v4293
      %v4343 = vadd.f32 %v4025, %v4296
      %v4344 = vadd.f32 %v4028, %v4299
      %v4345 = vadd.f32 %v4031, %v4302
      %v4346 = vadd.f32 %v4034, %v4305
      %v4347 = vadd.f32 %v4037, %v4308
      %v4348 = vadd.f32 %v4040, %v4311
      %v4349 = vld [vmem:[#allocation3 + $0x12] sm:$0xff]
      %v4350 = vld [vmem:[#allocation3 + $0x1a] sm:$0xff]
      %v4351 = vld [vmem:[#allocation3 + $0x22] sm:$0xff]
      %v4352 = vld [vmem:[#allocation3 + $0x2a] sm:$0xff]
      %v4353 = vld [vmem:[#allocation3 + $0x32] sm:$0xff]
      %v4354 = vld [vmem:[#allocation3 + $0x3a] sm:$0xff]
      %v4355 = vld [vmem:[#allocation3 + $0x42] sm:$0xff]
      %v4356 = vld [vmem:[#allocation3 + $0x4a] sm:$0xff]
      %v4357 = vld [vmem:[#allocation3 + $0x52] sm:$0xff]
      %v4358 = vld [vmem:[#allocation3 + $0x5a] sm:$0xff]
      %v4359 = vld [vmem:[#allocation3 + $0x62] sm:$0xff]
      %v4360 = vld [vmem:[#allocation3 + $0x6a] sm:$0xff]
      %v4361 = vld [vmem:[#allocation3 + $0x72] sm:$0xff]
      %v4362 = vld [vmem:[#allocation3 + $0x7a] sm:$0xff]
      %v4363 = vld [vmem:[#allocation3 + $0x82] sm:$0xff]
      %v4364 = vld [vmem:[#allocation3 + $0x8a] sm:$0xff]
      %v4365 = vld [vmem:[#allocation3 + $0x92] sm:$0xff]
      %v4366 = vld [vmem:[#allocation3 + $0x9a] sm:$0xff]
      %v4367 = vld [vmem:[#allocation3 + $0xa2] sm:$0xff]
      %v4368 = vld [vmem:[#allocation3 + $0xaa] sm:$0xff]
      %v4369 = vld [vmem:[#allocation3 + $0xb2] sm:$0xff]
      %v4370 = vld [vmem:[#allocation3 + $0xba] sm:$0xff]
      %v4371 = vld [vmem:[#allocation3 + $0xc2] sm:$0xff]
      %v4372 = vld [vmem:[#allocation3 + $0xca] sm:$0xff]
      %v4373 = vld [vmem:[#allocation3 + $0xd2] sm:$0xff]
      %v4374 = vld [vmem:[#allocation3 + $0xda] sm:$0xff]
      %v4375 = vld [vmem:[#allocation3 + $0xe2] sm:$0xff]
      %v4376 = vld [vmem:[#allocation3 + $0xea] sm:$0xff]
      %v4377 = vld [vmem:[#allocation3 + $0xf2] sm:$0xff]
      %v4378 = vld [vmem:[#allocation3 + $0xfa] sm:$0xff]
      %v4379 = vld [vmem:[#allocation3 + $0x102] sm:$0xff]
      %v4380 = vld [vmem:[#allocation3 + $0x10a] sm:$0xff]
      %v4381 = vld [vmem:[#allocation3 + $0x112] sm:$0xff]
      %v4382 = vld [vmem:[#allocation3 + $0x11a] sm:$0xff]
      %v4383 = vld [vmem:[#allocation3 + $0x122] sm:$0xff]
      %v4384 = vld [vmem:[#allocation3 + $0x12a] sm:$0xff]
      %s4385 = scalar_lea.vmem %s4, 24
      %v4386 = vld [vmem:[%s4385] sm:$0xff]
      %v4388 = vsel %vm296, %v4349, 0
      %v4391 = vsel %vm296, %v4350, 0
      %v4394 = vsel %vm296, %v4351, 0
      %v4397 = vsel %vm296, %v4352, 0
      %v4400 = vsel %vm296, %v4353, 0
      %v4403 = vsel %vm296, %v4354, 0
      %v4406 = vsel %vm296, %v4355, 0
      %v4409 = vsel %vm296, %v4356, 0
      %v4412 = vsel %vm296, %v4357, 0
      %v4415 = vsel %vm296, %v4358, 0
      %v4418 = vsel %vm296, %v4359, 0
      %v4421 = vsel %vm296, %v4360, 0
      %v4424 = vsel %vm296, %v4361, 0
      %v4427 = vsel %vm296, %v4362, 0
      %v4430 = vsel %vm296, %v4363, 0
      %v4433 = vsel %vm296, %v4364, 0
      %v4436 = vsel %vm296, %v4365, 0
      %v4439 = vsel %vm296, %v4366, 0
      %v4442 = vsel %vm296, %v4367, 0
      %v4445 = vsel %vm296, %v4368, 0
      %v4448 = vsel %vm296, %v4369, 0
      %v4451 = vsel %vm296, %v4370, 0
      %v4454 = vsel %vm296, %v4371, 0
      %v4457 = vsel %vm296, %v4372, 0
      %v4460 = vsel %vm296, %v4373, 0
      %v4463 = vsel %vm296, %v4374, 0
      %v4466 = vsel %vm296, %v4375, 0
      %v4469 = vsel %vm296, %v4376, 0
      %v4472 = vsel %vm296, %v4377, 0
      %v4475 = vsel %vm296, %v4378, 0
      %v4478 = vsel %vm296, %v4379, 0
      %v4481 = vsel %vm296, %v4380, 0
      %v4484 = vsel %vm296, %v4381, 0
      %v4487 = vsel %vm296, %v4382, 0
      %v4490 = vsel %vm296, %v4383, 0
      %v4493 = vsel %vm296, %v4384, 0
      %4495 = vmatpush.msra.mxu0 0.0
      %4496 = vmatpush.msra.mxu0 0.0
      %4497 = vmatpush.msra.mxu0 0.0
      %4498 = vmatpush.msra.mxu0 0.0
      %4499 = vmatpush.msra.mxu0 0.0
      %4500 = vmatpush.msra.mxu0 0.0
      %4501 = vmatpush.msra.mxu0 0.0
      %4502 = vmatpush.msra.mxu0 0.0
      %4503 = vmatpush.msra.mxu0 0.0
      %4504 = vmatpush.msra.mxu0 0.0
      %4505 = vmatpush.msra.mxu0 0.0
      %4506 = vmatpush.msra.mxu0 0.0
      %4507 = vmatpush.msra.mxu0 0.0
      %4508 = vmatpush.msra.mxu0 0.0
      %4509 = vmatpush.msra.mxu0 0.0
      %4510 = vmatpush.msra.mxu0 %v4386
      %4511 = vmatmul.f32.gmra.mxu0 %v4388
      %v4512 = vpop.f32.mrf.mxu0
      %v4513 = vadd.f32 0.0, %v4512
      %4514 = vmatmul.f32.gmra.mxu0 %v4391
      %v4515 = vpop.f32.mrf.mxu0
      %v4516 = vadd.f32 0.0, %v4515
      %4517 = vmatmul.f32.gmra.mxu0 %v4394
      %v4518 = vpop.f32.mrf.mxu0
      %v4519 = vadd.f32 0.0, %v4518
      %4520 = vmatmul.f32.gmra.mxu0 %v4397
      %v4521 = vpop.f32.mrf.mxu0
      %v4522 = vadd.f32 0.0, %v4521
      %4523 = vmatmul.f32.gmra.mxu0 %v4400
      %v4524 = vpop.f32.mrf.mxu0
      %v4525 = vadd.f32 0.0, %v4524
      %4526 = vmatmul.f32.gmra.mxu0 %v4403
      %v4527 = vpop.f32.mrf.mxu0
      %v4528 = vadd.f32 0.0, %v4527
      %4529 = vmatmul.f32.gmra.mxu0 %v4406
      %v4530 = vpop.f32.mrf.mxu0
      %v4531 = vadd.f32 0.0, %v4530
      %4532 = vmatmul.f32.gmra.mxu0 %v4409
      %v4533 = vpop.f32.mrf.mxu0
      %v4534 = vadd.f32 0.0, %v4533
      %4535 = vmatmul.f32.gmra.mxu0 %v4412
      %v4536 = vpop.f32.mrf.mxu0
      %v4537 = vadd.f32 0.0, %v4536
      %4538 = vmatmul.f32.gmra.mxu0 %v4415
      %v4539 = vpop.f32.mrf.mxu0
      %v4540 = vadd.f32 0.0, %v4539
      %4541 = vmatmul.f32.gmra.mxu0 %v4418
      %v4542 = vpop.f32.mrf.mxu0
      %v4543 = vadd.f32 0.0, %v4542
      %4544 = vmatmul.f32.gmra.mxu0 %v4421
      %v4545 = vpop.f32.mrf.mxu0
      %v4546 = vadd.f32 0.0, %v4545
      %4547 = vmatmul.f32.gmra.mxu0 %v4424
      %v4548 = vpop.f32.mrf.mxu0
      %v4549 = vadd.f32 0.0, %v4548
      %4550 = vmatmul.f32.gmra.mxu0 %v4427
      %v4551 = vpop.f32.mrf.mxu0
      %v4552 = vadd.f32 0.0, %v4551
      %4553 = vmatmul.f32.gmra.mxu0 %v4430
      %v4554 = vpop.f32.mrf.mxu0
      %v4555 = vadd.f32 0.0, %v4554
      %4556 = vmatmul.f32.gmra.mxu0 %v4433
      %v4557 = vpop.f32.mrf.mxu0
      %v4558 = vadd.f32 0.0, %v4557
      %4559 = vmatmul.f32.gmra.mxu0 %v4436
      %v4560 = vpop.f32.mrf.mxu0
      %v4561 = vadd.f32 0.0, %v4560
      %4562 = vmatmul.f32.gmra.mxu0 %v4439
      %v4563 = vpop.f32.mrf.mxu0
      %v4564 = vadd.f32 0.0, %v4563
      %4565 = vmatmul.f32.gmra.mxu0 %v4442
      %v4566 = vpop.f32.mrf.mxu0
      %v4567 = vadd.f32 0.0, %v4566
      %4568 = vmatmul.f32.gmra.mxu0 %v4445
      %v4569 = vpop.f32.mrf.mxu0
      %v4570 = vadd.f32 0.0, %v4569
      %4571 = vmatmul.f32.gmra.mxu0 %v4448
      %v4572 = vpop.f32.mrf.mxu0
      %v4573 = vadd.f32 0.0, %v4572
      %4574 = vmatmul.f32.gmra.mxu0 %v4451
      %v4575 = vpop.f32.mrf.mxu0
      %v4576 = vadd.f32 0.0, %v4575
      %4577 = vmatmul.f32.gmra.mxu0 %v4454
      %v4578 = vpop.f32.mrf.mxu0
      %v4579 = vadd.f32 0.0, %v4578
      %4580 = vmatmul.f32.gmra.mxu0 %v4457
      %v4581 = vpop.f32.mrf.mxu0
      %v4582 = vadd.f32 0.0, %v4581
      %4583 = vmatmul.f32.gmra.mxu0 %v4460
      %v4584 = vpop.f32.mrf.mxu0
      %v4585 = vadd.f32 0.0, %v4584
      %4586 = vmatmul.f32.gmra.mxu0 %v4463
      %v4587 = vpop.f32.mrf.mxu0
      %v4588 = vadd.f32 0.0, %v4587
      %4589 = vmatmul.f32.gmra.mxu0 %v4466
      %v4590 = vpop.f32.mrf.mxu0
      %v4591 = vadd.f32 0.0, %v4590
      %4592 = vmatmul.f32.gmra.mxu0 %v4469
      %v4593 = vpop.f32.mrf.mxu0
      %v4594 = vadd.f32 0.0, %v4593
      %4595 = vmatmul.f32.gmra.mxu0 %v4472
      %v4596 = vpop.f32.mrf.mxu0
      %v4597 = vadd.f32 0.0, %v4596
      %4598 = vmatmul.f32.gmra.mxu0 %v4475
      %v4599 = vpop.f32.mrf.mxu0
      %v4600 = vadd.f32 0.0, %v4599
      %4601 = vmatmul.f32.gmra.mxu0 %v4478
      %v4602 = vpop.f32.mrf.mxu0
      %v4603 = vadd.f32 0.0, %v4602
      %4604 = vmatmul.f32.gmra.mxu0 %v4481
      %v4605 = vpop.f32.mrf.mxu0
      %v4606 = vadd.f32 0.0, %v4605
      %4607 = vmatmul.f32.gmra.mxu0 %v4484
      %v4608 = vpop.f32.mrf.mxu0
      %v4609 = vadd.f32 0.0, %v4608
      %4610 = vmatmul.f32.gmra.mxu0 %v4487
      %v4611 = vpop.f32.mrf.mxu0
      %v4612 = vadd.f32 0.0, %v4611
      %4613 = vmatmul.f32.gmra.mxu0 %v4490
      %v4614 = vpop.f32.mrf.mxu0
      %v4615 = vadd.f32 0.0, %v4614
      %4616 = vmatmul.f32.gmra.mxu0 %v4493
      %v4617 = vpop.f32.mrf.mxu0
      %v4618 = vadd.f32 0.0, %v4617
      %4619 = vdwg.mxu0
      %v4620 = vadd.f32 %v4313, %v4513
      %v4621 = vadd.f32 %v4314, %v4516
      %v4622 = vadd.f32 %v4315, %v4519
      %v4623 = vadd.f32 %v4316, %v4522
      %v4624 = vadd.f32 %v4317, %v4525
      %v4625 = vadd.f32 %v4318, %v4528
      %v4626 = vadd.f32 %v4319, %v4531
      %v4627 = vadd.f32 %v4320, %v4534
      %v4628 = vadd.f32 %v4321, %v4537
      %v4629 = vadd.f32 %v4322, %v4540
      %v4630 = vadd.f32 %v4323, %v4543
      %v4631 = vadd.f32 %v4324, %v4546
      %v4632 = vadd.f32 %v4325, %v4549
      %v4633 = vadd.f32 %v4326, %v4552
      %v4634 = vadd.f32 %v4327, %v4555
      %v4635 = vadd.f32 %v4328, %v4558
      %v4636 = vadd.f32 %v4329, %v4561
      %v4637 = vadd.f32 %v4330, %v4564
      %v4638 = vadd.f32 %v4331, %v4567
      %v4639 = vadd.f32 %v4332, %v4570
      %v4640 = vadd.f32 %v4333, %v4573
      %v4641 = vadd.f32 %v4334, %v4576
      %v4642 = vadd.f32 %v4335, %v4579
      %v4643 = vadd.f32 %v4336, %v4582
      %v4644 = vadd.f32 %v4337, %v4585
      %v4645 = vadd.f32 %v4338, %v4588
      %v4646 = vadd.f32 %v4339, %v4591
      %v4647 = vadd.f32 %v4340, %v4594
      %v4648 = vadd.f32 %v4341, %v4597
      %v4649 = vadd.f32 %v4342, %v4600
      %v4650 = vadd.f32 %v4343, %v4603
      %v4651 = vadd.f32 %v4344, %v4606
      %v4652 = vadd.f32 %v4345, %v4609
      %v4653 = vadd.f32 %v4346, %v4612
      %v4654 = vadd.f32 %v4347, %v4615
      %v4655 = vadd.f32 %v4348, %v4618
      %v4656 = vld [vmem:[#allocation3 + $0x13] sm:$0xff]
      %v4657 = vld [vmem:[#allocation3 + $0x1b] sm:$0xff]
      %v4658 = vld [vmem:[#allocation3 + $0x23] sm:$0xff]
      %v4659 = vld [vmem:[#allocation3 + $0x2b] sm:$0xff]
      %v4660 = vld [vmem:[#allocation3 + $0x33] sm:$0xff]
      %v4661 = vld [vmem:[#allocation3 + $0x3b] sm:$0xff]
      %v4662 = vld [vmem:[#allocation3 + $0x43] sm:$0xff]
      %v4663 = vld [vmem:[#allocation3 + $0x4b] sm:$0xff]
      %v4664 = vld [vmem:[#allocation3 + $0x53] sm:$0xff]
      %v4665 = vld [vmem:[#allocation3 + $0x5b] sm:$0xff]
      %v4666 = vld [vmem:[#allocation3 + $0x63] sm:$0xff]
      %v4667 = vld [vmem:[#allocation3 + $0x6b] sm:$0xff]
      %v4668 = vld [vmem:[#allocation3 + $0x73] sm:$0xff]
      %v4669 = vld [vmem:[#allocation3 + $0x7b] sm:$0xff]
      %v4670 = vld [vmem:[#allocation3 + $0x83] sm:$0xff]
      %v4671 = vld [vmem:[#allocation3 + $0x8b] sm:$0xff]
      %v4672 = vld [vmem:[#allocation3 + $0x93] sm:$0xff]
      %v4673 = vld [vmem:[#allocation3 + $0x9b] sm:$0xff]
      %v4674 = vld [vmem:[#allocation3 + $0xa3] sm:$0xff]
      %v4675 = vld [vmem:[#allocation3 + $0xab] sm:$0xff]
      %v4676 = vld [vmem:[#allocation3 + $0xb3] sm:$0xff]
      %v4677 = vld [vmem:[#allocation3 + $0xbb] sm:$0xff]
      %v4678 = vld [vmem:[#allocation3 + $0xc3] sm:$0xff]
      %v4679 = vld [vmem:[#allocation3 + $0xcb] sm:$0xff]
      %v4680 = vld [vmem:[#allocation3 + $0xd3] sm:$0xff]
      %v4681 = vld [vmem:[#allocation3 + $0xdb] sm:$0xff]
      %v4682 = vld [vmem:[#allocation3 + $0xe3] sm:$0xff]
      %v4683 = vld [vmem:[#allocation3 + $0xeb] sm:$0xff]
      %v4684 = vld [vmem:[#allocation3 + $0xf3] sm:$0xff]
      %v4685 = vld [vmem:[#allocation3 + $0xfb] sm:$0xff]
      %v4686 = vld [vmem:[#allocation3 + $0x103] sm:$0xff]
      %v4687 = vld [vmem:[#allocation3 + $0x10b] sm:$0xff]
      %v4688 = vld [vmem:[#allocation3 + $0x113] sm:$0xff]
      %v4689 = vld [vmem:[#allocation3 + $0x11b] sm:$0xff]
      %v4690 = vld [vmem:[#allocation3 + $0x123] sm:$0xff]
      %v4691 = vld [vmem:[#allocation3 + $0x12b] sm:$0xff]
      %s4692 = scalar_lea.vmem %s4, 32
      %v4693 = vld [vmem:[%s4692] sm:$0xff]
      %v4695 = vsel %vm296, %v4656, 0
      %v4698 = vsel %vm296, %v4657, 0
      %v4701 = vsel %vm296, %v4658, 0
      %v4704 = vsel %vm296, %v4659, 0
      %v4707 = vsel %vm296, %v4660, 0
      %v4710 = vsel %vm296, %v4661, 0
      %v4713 = vsel %vm296, %v4662, 0
      %v4716 = vsel %vm296, %v4663, 0
      %v4719 = vsel %vm296, %v4664, 0
      %v4722 = vsel %vm296, %v4665, 0
      %v4725 = vsel %vm296, %v4666, 0
      %v4728 = vsel %vm296, %v4667, 0
      %v4731 = vsel %vm296, %v4668, 0
      %v4734 = vsel %vm296, %v4669, 0
      %v4737 = vsel %vm296, %v4670, 0
      %v4740 = vsel %vm296, %v4671, 0
      %v4743 = vsel %vm296, %v4672, 0
      %v4746 = vsel %vm296, %v4673, 0
      %v4749 = vsel %vm296, %v4674, 0
      %v4752 = vsel %vm296, %v4675, 0
      %v4755 = vsel %vm296, %v4676, 0
      %v4758 = vsel %vm296, %v4677, 0
      %v4761 = vsel %vm296, %v4678, 0
      %v4764 = vsel %vm296, %v4679, 0
      %v4767 = vsel %vm296, %v4680, 0
      %v4770 = vsel %vm296, %v4681, 0
      %v4773 = vsel %vm296, %v4682, 0
      %v4776 = vsel %vm296, %v4683, 0
      %v4779 = vsel %vm296, %v4684, 0
      %v4782 = vsel %vm296, %v4685, 0
      %v4785 = vsel %vm296, %v4686, 0
      %v4788 = vsel %vm296, %v4687, 0
      %v4791 = vsel %vm296, %v4688, 0
      %v4794 = vsel %vm296, %v4689, 0
      %v4797 = vsel %vm296, %v4690, 0
      %v4800 = vsel %vm296, %v4691, 0
      %4802 = vmatpush.msra.mxu0 0.0
      %4803 = vmatpush.msra.mxu0 0.0
      %4804 = vmatpush.msra.mxu0 0.0
      %4805 = vmatpush.msra.mxu0 0.0
      %4806 = vmatpush.msra.mxu0 0.0
      %4807 = vmatpush.msra.mxu0 0.0
      %4808 = vmatpush.msra.mxu0 0.0
      %4809 = vmatpush.msra.mxu0 0.0
      %4810 = vmatpush.msra.mxu0 0.0
      %4811 = vmatpush.msra.mxu0 0.0
      %4812 = vmatpush.msra.mxu0 0.0
      %4813 = vmatpush.msra.mxu0 0.0
      %4814 = vmatpush.msra.mxu0 0.0
      %4815 = vmatpush.msra.mxu0 0.0
      %4816 = vmatpush.msra.mxu0 0.0
      %4817 = vmatpush.msra.mxu0 %v4693
      %4818 = vmatmul.f32.gmra.mxu0 %v4695
      %v4819 = vpop.f32.mrf.mxu0
      %v4820 = vadd.f32 0.0, %v4819
      %4821 = vmatmul.f32.gmra.mxu0 %v4698
      %v4822 = vpop.f32.mrf.mxu0
      %v4823 = vadd.f32 0.0, %v4822
      %4824 = vmatmul.f32.gmra.mxu0 %v4701
      %v4825 = vpop.f32.mrf.mxu0
      %v4826 = vadd.f32 0.0, %v4825
      %4827 = vmatmul.f32.gmra.mxu0 %v4704
      %v4828 = vpop.f32.mrf.mxu0
      %v4829 = vadd.f32 0.0, %v4828
      %4830 = vmatmul.f32.gmra.mxu0 %v4707
      %v4831 = vpop.f32.mrf.mxu0
      %v4832 = vadd.f32 0.0, %v4831
      %4833 = vmatmul.f32.gmra.mxu0 %v4710
      %v4834 = vpop.f32.mrf.mxu0
      %v4835 = vadd.f32 0.0, %v4834
      %4836 = vmatmul.f32.gmra.mxu0 %v4713
      %v4837 = vpop.f32.mrf.mxu0
      %v4838 = vadd.f32 0.0, %v4837
      %4839 = vmatmul.f32.gmra.mxu0 %v4716
      %v4840 = vpop.f32.mrf.mxu0
      %v4841 = vadd.f32 0.0, %v4840
      %4842 = vmatmul.f32.gmra.mxu0 %v4719
      %v4843 = vpop.f32.mrf.mxu0
      %v4844 = vadd.f32 0.0, %v4843
      %4845 = vmatmul.f32.gmra.mxu0 %v4722
      %v4846 = vpop.f32.mrf.mxu0
      %v4847 = vadd.f32 0.0, %v4846
      %4848 = vmatmul.f32.gmra.mxu0 %v4725
      %v4849 = vpop.f32.mrf.mxu0
      %v4850 = vadd.f32 0.0, %v4849
      %4851 = vmatmul.f32.gmra.mxu0 %v4728
      %v4852 = vpop.f32.mrf.mxu0
      %v4853 = vadd.f32 0.0, %v4852
      %4854 = vmatmul.f32.gmra.mxu0 %v4731
      %v4855 = vpop.f32.mrf.mxu0
      %v4856 = vadd.f32 0.0, %v4855
      %4857 = vmatmul.f32.gmra.mxu0 %v4734
      %v4858 = vpop.f32.mrf.mxu0
      %v4859 = vadd.f32 0.0, %v4858
      %4860 = vmatmul.f32.gmra.mxu0 %v4737
      %v4861 = vpop.f32.mrf.mxu0
      %v4862 = vadd.f32 0.0, %v4861
      %4863 = vmatmul.f32.gmra.mxu0 %v4740
      %v4864 = vpop.f32.mrf.mxu0
      %v4865 = vadd.f32 0.0, %v4864
      %4866 = vmatmul.f32.gmra.mxu0 %v4743
      %v4867 = vpop.f32.mrf.mxu0
      %v4868 = vadd.f32 0.0, %v4867
      %4869 = vmatmul.f32.gmra.mxu0 %v4746
      %v4870 = vpop.f32.mrf.mxu0
      %v4871 = vadd.f32 0.0, %v4870
      %4872 = vmatmul.f32.gmra.mxu0 %v4749
      %v4873 = vpop.f32.mrf.mxu0
      %v4874 = vadd.f32 0.0, %v4873
      %4875 = vmatmul.f32.gmra.mxu0 %v4752
      %v4876 = vpop.f32.mrf.mxu0
      %v4877 = vadd.f32 0.0, %v4876
      %4878 = vmatmul.f32.gmra.mxu0 %v4755
      %v4879 = vpop.f32.mrf.mxu0
      %v4880 = vadd.f32 0.0, %v4879
      %4881 = vmatmul.f32.gmra.mxu0 %v4758
      %v4882 = vpop.f32.mrf.mxu0
      %v4883 = vadd.f32 0.0, %v4882
      %4884 = vmatmul.f32.gmra.mxu0 %v4761
      %v4885 = vpop.f32.mrf.mxu0
      %v4886 = vadd.f32 0.0, %v4885
      %4887 = vmatmul.f32.gmra.mxu0 %v4764
      %v4888 = vpop.f32.mrf.mxu0
      %v4889 = vadd.f32 0.0, %v4888
      %4890 = vmatmul.f32.gmra.mxu0 %v4767
      %v4891 = vpop.f32.mrf.mxu0
      %v4892 = vadd.f32 0.0, %v4891
      %4893 = vmatmul.f32.gmra.mxu0 %v4770
      %v4894 = vpop.f32.mrf.mxu0
      %v4895 = vadd.f32 0.0, %v4894
      %4896 = vmatmul.f32.gmra.mxu0 %v4773
      %v4897 = vpop.f32.mrf.mxu0
      %v4898 = vadd.f32 0.0, %v4897
      %4899 = vmatmul.f32.gmra.mxu0 %v4776
      %v4900 = vpop.f32.mrf.mxu0
      %v4901 = vadd.f32 0.0, %v4900
      %4902 = vmatmul.f32.gmra.mxu0 %v4779
      %v4903 = vpop.f32.mrf.mxu0
      %v4904 = vadd.f32 0.0, %v4903
      %4905 = vmatmul.f32.gmra.mxu0 %v4782
      %v4906 = vpop.f32.mrf.mxu0
      %v4907 = vadd.f32 0.0, %v4906
      %4908 = vmatmul.f32.gmra.mxu0 %v4785
      %v4909 = vpop.f32.mrf.mxu0
      %v4910 = vadd.f32 0.0, %v4909
      %4911 = vmatmul.f32.gmra.mxu0 %v4788
      %v4912 = vpop.f32.mrf.mxu0
      %v4913 = vadd.f32 0.0, %v4912
      %4914 = vmatmul.f32.gmra.mxu0 %v4791
      %v4915 = vpop.f32.mrf.mxu0
      %v4916 = vadd.f32 0.0, %v4915
      %4917 = vmatmul.f32.gmra.mxu0 %v4794
      %v4918 = vpop.f32.mrf.mxu0
      %v4919 = vadd.f32 0.0, %v4918
      %4920 = vmatmul.f32.gmra.mxu0 %v4797
      %v4921 = vpop.f32.mrf.mxu0
      %v4922 = vadd.f32 0.0, %v4921
      %4923 = vmatmul.f32.gmra.mxu0 %v4800
      %v4924 = vpop.f32.mrf.mxu0
      %v4925 = vadd.f32 0.0, %v4924
      %4926 = vdwg.mxu0
      %v4927 = vadd.f32 %v4620, %v4820
      %v4928 = vadd.f32 %v4621, %v4823
      %v4929 = vadd.f32 %v4622, %v4826
      %v4930 = vadd.f32 %v4623, %v4829
      %v4931 = vadd.f32 %v4624, %v4832
      %v4932 = vadd.f32 %v4625, %v4835
      %v4933 = vadd.f32 %v4626, %v4838
      %v4934 = vadd.f32 %v4627, %v4841
      %v4935 = vadd.f32 %v4628, %v4844
      %v4936 = vadd.f32 %v4629, %v4847
      %v4937 = vadd.f32 %v4630, %v4850
      %v4938 = vadd.f32 %v4631, %v4853
      %v4939 = vadd.f32 %v4632, %v4856
      %v4940 = vadd.f32 %v4633, %v4859
      %v4941 = vadd.f32 %v4634, %v4862
      %v4942 = vadd.f32 %v4635, %v4865
      %v4943 = vadd.f32 %v4636, %v4868
      %v4944 = vadd.f32 %v4637, %v4871
      %v4945 = vadd.f32 %v4638, %v4874
      %v4946 = vadd.f32 %v4639, %v4877
      %v4947 = vadd.f32 %v4640, %v4880
      %v4948 = vadd.f32 %v4641, %v4883
      %v4949 = vadd.f32 %v4642, %v4886
      %v4950 = vadd.f32 %v4643, %v4889
      %v4951 = vadd.f32 %v4644, %v4892
      %v4952 = vadd.f32 %v4645, %v4895
      %v4953 = vadd.f32 %v4646, %v4898
      %v4954 = vadd.f32 %v4647, %v4901
      %v4955 = vadd.f32 %v4648, %v4904
      %v4956 = vadd.f32 %v4649, %v4907
      %v4957 = vadd.f32 %v4650, %v4910
      %v4958 = vadd.f32 %v4651, %v4913
      %v4959 = vadd.f32 %v4652, %v4916
      %v4960 = vadd.f32 %v4653, %v4919
      %v4961 = vadd.f32 %v4654, %v4922
      %v4962 = vadd.f32 %v4655, %v4925
      %v4963 = vld [vmem:[#allocation3 + $0x14] sm:$0xff]
      %v4964 = vld [vmem:[#allocation3 + $0x1c] sm:$0xff]
      %v4965 = vld [vmem:[#allocation3 + $0x24] sm:$0xff]
      %v4966 = vld [vmem:[#allocation3 + $0x2c] sm:$0xff]
      %v4967 = vld [vmem:[#allocation3 + $0x34] sm:$0xff]
      %v4968 = vld [vmem:[#allocation3 + $0x3c] sm:$0xff]
      %v4969 = vld [vmem:[#allocation3 + $0x44] sm:$0xff]
      %v4970 = vld [vmem:[#allocation3 + $0x4c] sm:$0xff]
      %v4971 = vld [vmem:[#allocation3 + $0x54] sm:$0xff]
      %v4972 = vld [vmem:[#allocation3 + $0x5c] sm:$0xff]
      %v4973 = vld [vmem:[#allocation3 + $0x64] sm:$0xff]
      %v4974 = vld [vmem:[#allocation3 + $0x6c] sm:$0xff]
      %v4975 = vld [vmem:[#allocation3 + $0x74] sm:$0xff]
      %v4976 = vld [vmem:[#allocation3 + $0x7c] sm:$0xff]
      %v4977 = vld [vmem:[#allocation3 + $0x84] sm:$0xff]
      %v4978 = vld [vmem:[#allocation3 + $0x8c] sm:$0xff]
      %v4979 = vld [vmem:[#allocation3 + $0x94] sm:$0xff]
      %v4980 = vld [vmem:[#allocation3 + $0x9c] sm:$0xff]
      %v4981 = vld [vmem:[#allocation3 + $0xa4] sm:$0xff]
      %v4982 = vld [vmem:[#allocation3 + $0xac] sm:$0xff]
      %v4983 = vld [vmem:[#allocation3 + $0xb4] sm:$0xff]
      %v4984 = vld [vmem:[#allocation3 + $0xbc] sm:$0xff]
      %v4985 = vld [vmem:[#allocation3 + $0xc4] sm:$0xff]
      %v4986 = vld [vmem:[#allocation3 + $0xcc] sm:$0xff]
      %v4987 = vld [vmem:[#allocation3 + $0xd4] sm:$0xff]
      %v4988 = vld [vmem:[#allocation3 + $0xdc] sm:$0xff]
      %v4989 = vld [vmem:[#allocation3 + $0xe4] sm:$0xff]
      %v4990 = vld [vmem:[#allocation3 + $0xec] sm:$0xff]
      %v4991 = vld [vmem:[#allocation3 + $0xf4] sm:$0xff]
      %v4992 = vld [vmem:[#allocation3 + $0xfc] sm:$0xff]
      %v4993 = vld [vmem:[#allocation3 + $0x104] sm:$0xff]
      %v4994 = vld [vmem:[#allocation3 + $0x10c] sm:$0xff]
      %v4995 = vld [vmem:[#allocation3 + $0x114] sm:$0xff]
      %v4996 = vld [vmem:[#allocation3 + $0x11c] sm:$0xff]
      %v4997 = vld [vmem:[#allocation3 + $0x124] sm:$0xff]
      %v4998 = vld [vmem:[#allocation3 + $0x12c] sm:$0xff]
      %s4999 = scalar_lea.vmem %s4, 40
      %v5000 = vld [vmem:[%s4999] sm:$0xff]
      %v5002 = vsel %vm296, %v4963, 0
      %v5005 = vsel %vm296, %v4964, 0
      %v5008 = vsel %vm296, %v4965, 0
      %v5011 = vsel %vm296, %v4966, 0
      %v5014 = vsel %vm296, %v4967, 0
      %v5017 = vsel %vm296, %v4968, 0
      %v5020 = vsel %vm296, %v4969, 0
      %v5023 = vsel %vm296, %v4970, 0
      %v5026 = vsel %vm296, %v4971, 0
      %v5029 = vsel %vm296, %v4972, 0
      %v5032 = vsel %vm296, %v4973, 0
      %v5035 = vsel %vm296, %v4974, 0
      %v5038 = vsel %vm296, %v4975, 0
      %v5041 = vsel %vm296, %v4976, 0
      %v5044 = vsel %vm296, %v4977, 0
      %v5047 = vsel %vm296, %v4978, 0
      %v5050 = vsel %vm296, %v4979, 0
      %v5053 = vsel %vm296, %v4980, 0
      %v5056 = vsel %vm296, %v4981, 0
      %v5059 = vsel %vm296, %v4982, 0
      %v5062 = vsel %vm296, %v4983, 0
      %v5065 = vsel %vm296, %v4984, 0
      %v5068 = vsel %vm296, %v4985, 0
      %v5071 = vsel %vm296, %v4986, 0
      %v5074 = vsel %vm296, %v4987, 0
      %v5077 = vsel %vm296, %v4988, 0
      %v5080 = vsel %vm296, %v4989, 0
      %v5083 = vsel %vm296, %v4990, 0
      %v5086 = vsel %vm296, %v4991, 0
      %v5089 = vsel %vm296, %v4992, 0
      %v5092 = vsel %vm296, %v4993, 0
      %v5095 = vsel %vm296, %v4994, 0
      %v5098 = vsel %vm296, %v4995, 0
      %v5101 = vsel %vm296, %v4996, 0
      %v5104 = vsel %vm296, %v4997, 0
      %v5107 = vsel %vm296, %v4998, 0
      %5109 = vmatpush.msra.mxu0 0.0
      %5110 = vmatpush.msra.mxu0 0.0
      %5111 = vmatpush.msra.mxu0 0.0
      %5112 = vmatpush.msra.mxu0 0.0
      %5113 = vmatpush.msra.mxu0 0.0
      %5114 = vmatpush.msra.mxu0 0.0
      %5115 = vmatpush.msra.mxu0 0.0
      %5116 = vmatpush.msra.mxu0 0.0
      %5117 = vmatpush.msra.mxu0 0.0
      %5118 = vmatpush.msra.mxu0 0.0
      %5119 = vmatpush.msra.mxu0 0.0
      %5120 = vmatpush.msra.mxu0 0.0
      %5121 = vmatpush.msra.mxu0 0.0
      %5122 = vmatpush.msra.mxu0 0.0
      %5123 = vmatpush.msra.mxu0 0.0
      %5124 = vmatpush.msra.mxu0 %v5000
      %5125 = vmatmul.f32.gmra.mxu0 %v5002
      %v5126 = vpop.f32.mrf.mxu0
      %v5127 = vadd.f32 0.0, %v5126
      %5128 = vmatmul.f32.gmra.mxu0 %v5005
      %v5129 = vpop.f32.mrf.mxu0
      %v5130 = vadd.f32 0.0, %v5129
      %5131 = vmatmul.f32.gmra.mxu0 %v5008
      %v5132 = vpop.f32.mrf.mxu0
      %v5133 = vadd.f32 0.0, %v5132
      %5134 = vmatmul.f32.gmra.mxu0 %v5011
      %v5135 = vpop.f32.mrf.mxu0
      %v5136 = vadd.f32 0.0, %v5135
      %5137 = vmatmul.f32.gmra.mxu0 %v5014
      %v5138 = vpop.f32.mrf.mxu0
      %v5139 = vadd.f32 0.0, %v5138
      %5140 = vmatmul.f32.gmra.mxu0 %v5017
      %v5141 = vpop.f32.mrf.mxu0
      %v5142 = vadd.f32 0.0, %v5141
      %5143 = vmatmul.f32.gmra.mxu0 %v5020
      %v5144 = vpop.f32.mrf.mxu0
      %v5145 = vadd.f32 0.0, %v5144
      %5146 = vmatmul.f32.gmra.mxu0 %v5023
      %v5147 = vpop.f32.mrf.mxu0
      %v5148 = vadd.f32 0.0, %v5147
      %5149 = vmatmul.f32.gmra.mxu0 %v5026
      %v5150 = vpop.f32.mrf.mxu0
      %v5151 = vadd.f32 0.0, %v5150
      %5152 = vmatmul.f32.gmra.mxu0 %v5029
      %v5153 = vpop.f32.mrf.mxu0
      %v5154 = vadd.f32 0.0, %v5153
      %5155 = vmatmul.f32.gmra.mxu0 %v5032
      %v5156 = vpop.f32.mrf.mxu0
      %v5157 = vadd.f32 0.0, %v5156
      %5158 = vmatmul.f32.gmra.mxu0 %v5035
      %v5159 = vpop.f32.mrf.mxu0
      %v5160 = vadd.f32 0.0, %v5159
      %5161 = vmatmul.f32.gmra.mxu0 %v5038
      %v5162 = vpop.f32.mrf.mxu0
      %v5163 = vadd.f32 0.0, %v5162
      %5164 = vmatmul.f32.gmra.mxu0 %v5041
      %v5165 = vpop.f32.mrf.mxu0
      %v5166 = vadd.f32 0.0, %v5165
      %5167 = vmatmul.f32.gmra.mxu0 %v5044
      %v5168 = vpop.f32.mrf.mxu0
      %v5169 = vadd.f32 0.0, %v5168
      %5170 = vmatmul.f32.gmra.mxu0 %v5047
      %v5171 = vpop.f32.mrf.mxu0
      %v5172 = vadd.f32 0.0, %v5171
      %5173 = vmatmul.f32.gmra.mxu0 %v5050
      %v5174 = vpop.f32.mrf.mxu0
      %v5175 = vadd.f32 0.0, %v5174
      %5176 = vmatmul.f32.gmra.mxu0 %v5053
      %v5177 = vpop.f32.mrf.mxu0
      %v5178 = vadd.f32 0.0, %v5177
      %5179 = vmatmul.f32.gmra.mxu0 %v5056
      %v5180 = vpop.f32.mrf.mxu0
      %v5181 = vadd.f32 0.0, %v5180
      %5182 = vmatmul.f32.gmra.mxu0 %v5059
      %v5183 = vpop.f32.mrf.mxu0
      %v5184 = vadd.f32 0.0, %v5183
      %5185 = vmatmul.f32.gmra.mxu0 %v5062
      %v5186 = vpop.f32.mrf.mxu0
      %v5187 = vadd.f32 0.0, %v5186
      %5188 = vmatmul.f32.gmra.mxu0 %v5065
      %v5189 = vpop.f32.mrf.mxu0
      %v5190 = vadd.f32 0.0, %v5189
      %5191 = vmatmul.f32.gmra.mxu0 %v5068
      %v5192 = vpop.f32.mrf.mxu0
      %v5193 = vadd.f32 0.0, %v5192
      %5194 = vmatmul.f32.gmra.mxu0 %v5071
      %v5195 = vpop.f32.mrf.mxu0
      %v5196 = vadd.f32 0.0, %v5195
      %5197 = vmatmul.f32.gmra.mxu0 %v5074
      %v5198 = vpop.f32.mrf.mxu0
      %v5199 = vadd.f32 0.0, %v5198
      %5200 = vmatmul.f32.gmra.mxu0 %v5077
      %v5201 = vpop.f32.mrf.mxu0
      %v5202 = vadd.f32 0.0, %v5201
      %5203 = vmatmul.f32.gmra.mxu0 %v5080
      %v5204 = vpop.f32.mrf.mxu0
      %v5205 = vadd.f32 0.0, %v5204
      %5206 = vmatmul.f32.gmra.mxu0 %v5083
      %v5207 = vpop.f32.mrf.mxu0
      %v5208 = vadd.f32 0.0, %v5207
      %5209 = vmatmul.f32.gmra.mxu0 %v5086
      %v5210 = vpop.f32.mrf.mxu0
      %v5211 = vadd.f32 0.0, %v5210
      %5212 = vmatmul.f32.gmra.mxu0 %v5089
      %v5213 = vpop.f32.mrf.mxu0
      %v5214 = vadd.f32 0.0, %v5213
      %5215 = vmatmul.f32.gmra.mxu0 %v5092
      %v5216 = vpop.f32.mrf.mxu0
      %v5217 = vadd.f32 0.0, %v5216
      %5218 = vmatmul.f32.gmra.mxu0 %v5095
      %v5219 = vpop.f32.mrf.mxu0
      %v5220 = vadd.f32 0.0, %v5219
      %5221 = vmatmul.f32.gmra.mxu0 %v5098
      %v5222 = vpop.f32.mrf.mxu0
      %v5223 = vadd.f32 0.0, %v5222
      %5224 = vmatmul.f32.gmra.mxu0 %v5101
      %v5225 = vpop.f32.mrf.mxu0
      %v5226 = vadd.f32 0.0, %v5225
      %5227 = vmatmul.f32.gmra.mxu0 %v5104
      %v5228 = vpop.f32.mrf.mxu0
      %v5229 = vadd.f32 0.0, %v5228
      %5230 = vmatmul.f32.gmra.mxu0 %v5107
      %v5231 = vpop.f32.mrf.mxu0
      %v5232 = vadd.f32 0.0, %v5231
      %5233 = vdwg.mxu0
      %v5234 = vadd.f32 %v4927, %v5127
      %v5235 = vadd.f32 %v4928, %v5130
      %v5236 = vadd.f32 %v4929, %v5133
      %v5237 = vadd.f32 %v4930, %v5136
      %v5238 = vadd.f32 %v4931, %v5139
      %v5239 = vadd.f32 %v4932, %v5142
      %v5240 = vadd.f32 %v4933, %v5145
      %v5241 = vadd.f32 %v4934, %v5148
      %v5242 = vadd.f32 %v4935, %v5151
      %v5243 = vadd.f32 %v4936, %v5154
      %v5244 = vadd.f32 %v4937, %v5157
      %v5245 = vadd.f32 %v4938, %v5160
      %v5246 = vadd.f32 %v4939, %v5163
      %v5247 = vadd.f32 %v4940, %v5166
      %v5248 = vadd.f32 %v4941, %v5169
      %v5249 = vadd.f32 %v4942, %v5172
      %v5250 = vadd.f32 %v4943, %v5175
      %v5251 = vadd.f32 %v4944, %v5178
      %v5252 = vadd.f32 %v4945, %v5181
      %v5253 = vadd.f32 %v4946, %v5184
      %v5254 = vadd.f32 %v4947, %v5187
      %v5255 = vadd.f32 %v4948, %v5190
      %v5256 = vadd.f32 %v4949, %v5193
      %v5257 = vadd.f32 %v4950, %v5196
      %v5258 = vadd.f32 %v4951, %v5199
      %v5259 = vadd.f32 %v4952, %v5202
      %v5260 = vadd.f32 %v4953, %v5205
      %v5261 = vadd.f32 %v4954, %v5208
      %v5262 = vadd.f32 %v4955, %v5211
      %v5263 = vadd.f32 %v4956, %v5214
      %v5264 = vadd.f32 %v4957, %v5217
      %v5265 = vadd.f32 %v4958, %v5220
      %v5266 = vadd.f32 %v4959, %v5223
      %v5267 = vadd.f32 %v4960, %v5226
      %v5268 = vadd.f32 %v4961, %v5229
      %v5269 = vadd.f32 %v4962, %v5232
      %v5270 = vld [vmem:[#allocation3 + $0x24] sm:$0xff]
      %v5271 = vld [vmem:[#allocation3 + $0x2c] sm:$0xff]
      %v5272 = vld [vmem:[#allocation3 + $0x34] sm:$0xff]
      %v5273 = vld [vmem:[#allocation3 + $0x3c] sm:$0xff]
      %v5274 = vld [vmem:[#allocation3 + $0x44] sm:$0xff]
      %v5275 = vld [vmem:[#allocation3 + $0x4c] sm:$0xff]
      %v5276 = vld [vmem:[#allocation3 + $0x54] sm:$0xff]
      %v5277 = vld [vmem:[#allocation3 + $0x5c] sm:$0xff]
      %v5278 = vld [vmem:[#allocation3 + $0x64] sm:$0xff]
      %v5279 = vld [vmem:[#allocation3 + $0x6c] sm:$0xff]
      %v5280 = vld [vmem:[#allocation3 + $0x74] sm:$0xff]
      %v5281 = vld [vmem:[#allocation3 + $0x7c] sm:$0xff]
      %v5282 = vld [vmem:[#allocation3 + $0x84] sm:$0xff]
      %v5283 = vld [vmem:[#allocation3 + $0x8c] sm:$0xff]
      %v5284 = vld [vmem:[#allocation3 + $0x94] sm:$0xff]
      %v5285 = vld [vmem:[#allocation3 + $0x9c] sm:$0xff]
      %v5286 = vld [vmem:[#allocation3 + $0xa4] sm:$0xff]
      %v5287 = vld [vmem:[#allocation3 + $0xac] sm:$0xff]
      %v5288 = vld [vmem:[#allocation3 + $0xb4] sm:$0xff]
      %v5289 = vld [vmem:[#allocation3 + $0xbc] sm:$0xff]
      %v5290 = vld [vmem:[#allocation3 + $0xc4] sm:$0xff]
      %v5291 = vld [vmem:[#allocation3 + $0xcc] sm:$0xff]
      %v5292 = vld [vmem:[#allocation3 + $0xd4] sm:$0xff]
      %v5293 = vld [vmem:[#allocation3 + $0xdc] sm:$0xff]
      %v5294 = vld [vmem:[#allocation3 + $0xe4] sm:$0xff]
      %v5295 = vld [vmem:[#allocation3 + $0xec] sm:$0xff]
      %v5296 = vld [vmem:[#allocation3 + $0xf4] sm:$0xff]
      %v5297 = vld [vmem:[#allocation3 + $0xfc] sm:$0xff]
      %v5298 = vld [vmem:[#allocation3 + $0x104] sm:$0xff]
      %v5299 = vld [vmem:[#allocation3 + $0x10c] sm:$0xff]
      %v5300 = vld [vmem:[#allocation3 + $0x114] sm:$0xff]
      %v5301 = vld [vmem:[#allocation3 + $0x11c] sm:$0xff]
      %v5302 = vld [vmem:[#allocation3 + $0x124] sm:$0xff]
      %v5303 = vld [vmem:[#allocation3 + $0x12c] sm:$0xff]
      %v5304 = vld [vmem:[#allocation3 + $0x134] sm:$0xff]
      %v5305 = vld [vmem:[#allocation3 + $0x13c] sm:$0xff]
      %s5306 = scalar_lea.vmem %s4, 48
      %v5307 = vld [vmem:[%s5306] sm:$0xff]
      %v5309 = vsel %vm296, %v5270, 0
      %v5312 = vsel %vm296, %v5271, 0
      %v5315 = vsel %vm296, %v5272, 0
      %v5318 = vsel %vm296, %v5273, 0
      %v5321 = vsel %vm296, %v5274, 0
      %v5324 = vsel %vm296, %v5275, 0
      %v5327 = vsel %vm296, %v5276, 0
      %v5330 = vsel %vm296, %v5277, 0
      %v5333 = vsel %vm296, %v5278, 0
      %v5336 = vsel %vm296, %v5279, 0
      %v5339 = vsel %vm296, %v5280, 0
      %v5342 = vsel %vm296, %v5281, 0
      %v5345 = vsel %vm296, %v5282, 0
      %v5348 = vsel %vm296, %v5283, 0
      %v5351 = vsel %vm296, %v5284, 0
      %v5354 = vsel %vm296, %v5285, 0
      %v5357 = vsel %vm296, %v5286, 0
      %v5360 = vsel %vm296, %v5287, 0
      %v5363 = vsel %vm296, %v5288, 0
      %v5366 = vsel %vm296, %v5289, 0
      %v5369 = vsel %vm296, %v5290, 0
      %v5372 = vsel %vm296, %v5291, 0
      %v5375 = vsel %vm296, %v5292, 0
      %v5378 = vsel %vm296, %v5293, 0
      %v5381 = vsel %vm296, %v5294, 0
      %v5384 = vsel %vm296, %v5295, 0
      %v5387 = vsel %vm296, %v5296, 0
      %v5390 = vsel %vm296, %v5297, 0
      %v5393 = vsel %vm296, %v5298, 0
      %v5396 = vsel %vm296, %v5299, 0
      %v5399 = vsel %vm296, %v5300, 0
      %v5402 = vsel %vm296, %v5301, 0
      %v5405 = vsel %vm296, %v5302, 0
      %v5408 = vsel %vm296, %v5303, 0
      %v5411 = vsel %vm296, %v5304, 0
      %v5414 = vsel %vm296, %v5305, 0
      %5416 = vmatpush.msra.mxu0 0.0
      %5417 = vmatpush.msra.mxu0 0.0
      %5418 = vmatpush.msra.mxu0 0.0
      %5419 = vmatpush.msra.mxu0 0.0
      %5420 = vmatpush.msra.mxu0 0.0
      %5421 = vmatpush.msra.mxu0 0.0
      %5422 = vmatpush.msra.mxu0 0.0
      %5423 = vmatpush.msra.mxu0 0.0
      %5424 = vmatpush.msra.mxu0 0.0
      %5425 = vmatpush.msra.mxu0 0.0
      %5426 = vmatpush.msra.mxu0 0.0
      %5427 = vmatpush.msra.mxu0 0.0
      %5428 = vmatpush.msra.mxu0 0.0
      %5429 = vmatpush.msra.mxu0 0.0
      %5430 = vmatpush.msra.mxu0 0.0
      %5431 = vmatpush.msra.mxu0 %v5307
      %5432 = vmatmul.f32.gmra.mxu0 %v5309
      %v5433 = vpop.f32.mrf.mxu0
      %v5434 = vadd.f32 0.0, %v5433
      %5435 = vmatmul.f32.gmra.mxu0 %v5312
      %v5436 = vpop.f32.mrf.mxu0
      %v5437 = vadd.f32 0.0, %v5436
      %5438 = vmatmul.f32.gmra.mxu0 %v5315
      %v5439 = vpop.f32.mrf.mxu0
      %v5440 = vadd.f32 0.0, %v5439
      %5441 = vmatmul.f32.gmra.mxu0 %v5318
      %v5442 = vpop.f32.mrf.mxu0
      %v5443 = vadd.f32 0.0, %v5442
      %5444 = vmatmul.f32.gmra.mxu0 %v5321
      %v5445 = vpop.f32.mrf.mxu0
      %v5446 = vadd.f32 0.0, %v5445
      %5447 = vmatmul.f32.gmra.mxu0 %v5324
      %v5448 = vpop.f32.mrf.mxu0
      %v5449 = vadd.f32 0.0, %v5448
      %5450 = vmatmul.f32.gmra.mxu0 %v5327
      %v5451 = vpop.f32.mrf.mxu0
      %v5452 = vadd.f32 0.0, %v5451
      %5453 = vmatmul.f32.gmra.mxu0 %v5330
      %v5454 = vpop.f32.mrf.mxu0
      %v5455 = vadd.f32 0.0, %v5454
      %5456 = vmatmul.f32.gmra.mxu0 %v5333
      %v5457 = vpop.f32.mrf.mxu0
      %v5458 = vadd.f32 0.0, %v5457
      %5459 = vmatmul.f32.gmra.mxu0 %v5336
      %v5460 = vpop.f32.mrf.mxu0
      %v5461 = vadd.f32 0.0, %v5460
      %5462 = vmatmul.f32.gmra.mxu0 %v5339
      %v5463 = vpop.f32.mrf.mxu0
      %v5464 = vadd.f32 0.0, %v5463
      %5465 = vmatmul.f32.gmra.mxu0 %v5342
      %v5466 = vpop.f32.mrf.mxu0
      %v5467 = vadd.f32 0.0, %v5466
      %5468 = vmatmul.f32.gmra.mxu0 %v5345
      %v5469 = vpop.f32.mrf.mxu0
      %v5470 = vadd.f32 0.0, %v5469
      %5471 = vmatmul.f32.gmra.mxu0 %v5348
      %v5472 = vpop.f32.mrf.mxu0
      %v5473 = vadd.f32 0.0, %v5472
      %5474 = vmatmul.f32.gmra.mxu0 %v5351
      %v5475 = vpop.f32.mrf.mxu0
      %v5476 = vadd.f32 0.0, %v5475
      %5477 = vmatmul.f32.gmra.mxu0 %v5354
      %v5478 = vpop.f32.mrf.mxu0
      %v5479 = vadd.f32 0.0, %v5478
      %5480 = vmatmul.f32.gmra.mxu0 %v5357
      %v5481 = vpop.f32.mrf.mxu0
      %v5482 = vadd.f32 0.0, %v5481
      %5483 = vmatmul.f32.gmra.mxu0 %v5360
      %v5484 = vpop.f32.mrf.mxu0
      %v5485 = vadd.f32 0.0, %v5484
      %5486 = vmatmul.f32.gmra.mxu0 %v5363
      %v5487 = vpop.f32.mrf.mxu0
      %v5488 = vadd.f32 0.0, %v5487
      %5489 = vmatmul.f32.gmra.mxu0 %v5366
      %v5490 = vpop.f32.mrf.mxu0
      %v5491 = vadd.f32 0.0, %v5490
      %5492 = vmatmul.f32.gmra.mxu0 %v5369
      %v5493 = vpop.f32.mrf.mxu0
      %v5494 = vadd.f32 0.0, %v5493
      %5495 = vmatmul.f32.gmra.mxu0 %v5372
      %v5496 = vpop.f32.mrf.mxu0
      %v5497 = vadd.f32 0.0, %v5496
      %5498 = vmatmul.f32.gmra.mxu0 %v5375
      %v5499 = vpop.f32.mrf.mxu0
      %v5500 = vadd.f32 0.0, %v5499
      %5501 = vmatmul.f32.gmra.mxu0 %v5378
      %v5502 = vpop.f32.mrf.mxu0
      %v5503 = vadd.f32 0.0, %v5502
      %5504 = vmatmul.f32.gmra.mxu0 %v5381
      %v5505 = vpop.f32.mrf.mxu0
      %v5506 = vadd.f32 0.0, %v5505
      %5507 = vmatmul.f32.gmra.mxu0 %v5384
      %v5508 = vpop.f32.mrf.mxu0
      %v5509 = vadd.f32 0.0, %v5508
      %5510 = vmatmul.f32.gmra.mxu0 %v5387
      %v5511 = vpop.f32.mrf.mxu0
      %v5512 = vadd.f32 0.0, %v5511
      %5513 = vmatmul.f32.gmra.mxu0 %v5390
      %v5514 = vpop.f32.mrf.mxu0
      %v5515 = vadd.f32 0.0, %v5514
      %5516 = vmatmul.f32.gmra.mxu0 %v5393
      %v5517 = vpop.f32.mrf.mxu0
      %v5518 = vadd.f32 0.0, %v5517
      %5519 = vmatmul.f32.gmra.mxu0 %v5396
      %v5520 = vpop.f32.mrf.mxu0
      %v5521 = vadd.f32 0.0, %v5520
      %5522 = vmatmul.f32.gmra.mxu0 %v5399
      %v5523 = vpop.f32.mrf.mxu0
      %v5524 = vadd.f32 0.0, %v5523
      %5525 = vmatmul.f32.gmra.mxu0 %v5402
      %v5526 = vpop.f32.mrf.mxu0
      %v5527 = vadd.f32 0.0, %v5526
      %5528 = vmatmul.f32.gmra.mxu0 %v5405
      %v5529 = vpop.f32.mrf.mxu0
      %v5530 = vadd.f32 0.0, %v5529
      %5531 = vmatmul.f32.gmra.mxu0 %v5408
      %v5532 = vpop.f32.mrf.mxu0
      %v5533 = vadd.f32 0.0, %v5532
      %5534 = vmatmul.f32.gmra.mxu0 %v5411
      %v5535 = vpop.f32.mrf.mxu0
      %v5536 = vadd.f32 0.0, %v5535
      %5537 = vmatmul.f32.gmra.mxu0 %v5414
      %v5538 = vpop.f32.mrf.mxu0
      %v5539 = vadd.f32 0.0, %v5538
      %5540 = vdwg.mxu0
      %v5541 = vadd.f32 %v5234, %v5434
      %v5542 = vadd.f32 %v5235, %v5437
      %v5543 = vadd.f32 %v5236, %v5440
      %v5544 = vadd.f32 %v5237, %v5443
      %v5545 = vadd.f32 %v5238, %v5446
      %v5546 = vadd.f32 %v5239, %v5449
      %v5547 = vadd.f32 %v5240, %v5452
      %v5548 = vadd.f32 %v5241, %v5455
      %v5549 = vadd.f32 %v5242, %v5458
      %v5550 = vadd.f32 %v5243, %v5461
      %v5551 = vadd.f32 %v5244, %v5464
      %v5552 = vadd.f32 %v5245, %v5467
      %v5553 = vadd.f32 %v5246, %v5470
      %v5554 = vadd.f32 %v5247, %v5473
      %v5555 = vadd.f32 %v5248, %v5476
      %v5556 = vadd.f32 %v5249, %v5479
      %v5557 = vadd.f32 %v5250, %v5482
      %v5558 = vadd.f32 %v5251, %v5485
      %v5559 = vadd.f32 %v5252, %v5488
      %v5560 = vadd.f32 %v5253, %v5491
      %v5561 = vadd.f32 %v5254, %v5494
      %v5562 = vadd.f32 %v5255, %v5497
      %v5563 = vadd.f32 %v5256, %v5500
      %v5564 = vadd.f32 %v5257, %v5503
      %v5565 = vadd.f32 %v5258, %v5506
      %v5566 = vadd.f32 %v5259, %v5509
      %v5567 = vadd.f32 %v5260, %v5512
      %v5568 = vadd.f32 %v5261, %v5515
      %v5569 = vadd.f32 %v5262, %v5518
      %v5570 = vadd.f32 %v5263, %v5521
      %v5571 = vadd.f32 %v5264, %v5524
      %v5572 = vadd.f32 %v5265, %v5527
      %v5573 = vadd.f32 %v5266, %v5530
      %v5574 = vadd.f32 %v5267, %v5533
      %v5575 = vadd.f32 %v5268, %v5536
      %v5576 = vadd.f32 %v5269, %v5539
      %v5577 = vld [vmem:[#allocation3 + $0x25] sm:$0xff]
      %v5578 = vld [vmem:[#allocation3 + $0x2d] sm:$0xff]
      %v5579 = vld [vmem:[#allocation3 + $0x35] sm:$0xff]
      %v5580 = vld [vmem:[#allocation3 + $0x3d] sm:$0xff]
      %v5581 = vld [vmem:[#allocation3 + $0x45] sm:$0xff]
      %v5582 = vld [vmem:[#allocation3 + $0x4d] sm:$0xff]
      %v5583 = vld [vmem:[#allocation3 + $0x55] sm:$0xff]
      %v5584 = vld [vmem:[#allocation3 + $0x5d] sm:$0xff]
      %v5585 = vld [vmem:[#allocation3 + $0x65] sm:$0xff]
      %v5586 = vld [vmem:[#allocation3 + $0x6d] sm:$0xff]
      %v5587 = vld [vmem:[#allocation3 + $0x75] sm:$0xff]
      %v5588 = vld [vmem:[#allocation3 + $0x7d] sm:$0xff]
      %v5589 = vld [vmem:[#allocation3 + $0x85] sm:$0xff]
      %v5590 = vld [vmem:[#allocation3 + $0x8d] sm:$0xff]
      %v5591 = vld [vmem:[#allocation3 + $0x95] sm:$0xff]
      %v5592 = vld [vmem:[#allocation3 + $0x9d] sm:$0xff]
      %v5593 = vld [vmem:[#allocation3 + $0xa5] sm:$0xff]
      %v5594 = vld [vmem:[#allocation3 + $0xad] sm:$0xff]
      %v5595 = vld [vmem:[#allocation3 + $0xb5] sm:$0xff]
      %v5596 = vld [vmem:[#allocation3 + $0xbd] sm:$0xff]
      %v5597 = vld [vmem:[#allocation3 + $0xc5] sm:$0xff]
      %v5598 = vld [vmem:[#allocation3 + $0xcd] sm:$0xff]
      %v5599 = vld [vmem:[#allocation3 + $0xd5] sm:$0xff]
      %v5600 = vld [vmem:[#allocation3 + $0xdd] sm:$0xff]
      %v5601 = vld [vmem:[#allocation3 + $0xe5] sm:$0xff]
      %v5602 = vld [vmem:[#allocation3 + $0xed] sm:$0xff]
      %v5603 = vld [vmem:[#allocation3 + $0xf5] sm:$0xff]
      %v5604 = vld [vmem:[#allocation3 + $0xfd] sm:$0xff]
      %v5605 = vld [vmem:[#allocation3 + $0x105] sm:$0xff]
      %v5606 = vld [vmem:[#allocation3 + $0x10d] sm:$0xff]
      %v5607 = vld [vmem:[#allocation3 + $0x115] sm:$0xff]
      %v5608 = vld [vmem:[#allocation3 + $0x11d] sm:$0xff]
      %v5609 = vld [vmem:[#allocation3 + $0x125] sm:$0xff]
      %v5610 = vld [vmem:[#allocation3 + $0x12d] sm:$0xff]
      %v5611 = vld [vmem:[#allocation3 + $0x135] sm:$0xff]
      %v5612 = vld [vmem:[#allocation3 + $0x13d] sm:$0xff]
      %s5613 = scalar_lea.vmem %s4, 56
      %v5614 = vld [vmem:[%s5613] sm:$0xff]
      %v5616 = vsel %vm296, %v5577, 0
      %v5619 = vsel %vm296, %v5578, 0
      %v5622 = vsel %vm296, %v5579, 0
      %v5625 = vsel %vm296, %v5580, 0
      %v5628 = vsel %vm296, %v5581, 0
      %v5631 = vsel %vm296, %v5582, 0
      %v5634 = vsel %vm296, %v5583, 0
      %v5637 = vsel %vm296, %v5584, 0
      %v5640 = vsel %vm296, %v5585, 0
      %v5643 = vsel %vm296, %v5586, 0
      %v5646 = vsel %vm296, %v5587, 0
      %v5649 = vsel %vm296, %v5588, 0
      %v5652 = vsel %vm296, %v5589, 0
      %v5655 = vsel %vm296, %v5590, 0
      %v5658 = vsel %vm296, %v5591, 0
      %v5661 = vsel %vm296, %v5592, 0
      %v5664 = vsel %vm296, %v5593, 0
      %v5667 = vsel %vm296, %v5594, 0
      %v5670 = vsel %vm296, %v5595, 0
      %v5673 = vsel %vm296, %v5596, 0
      %v5676 = vsel %vm296, %v5597, 0
      %v5679 = vsel %vm296, %v5598, 0
      %v5682 = vsel %vm296, %v5599, 0
      %v5685 = vsel %vm296, %v5600, 0
      %v5688 = vsel %vm296, %v5601, 0
      %v5691 = vsel %vm296, %v5602, 0
      %v5694 = vsel %vm296, %v5603, 0
      %v5697 = vsel %vm296, %v5604, 0
      %v5700 = vsel %vm296, %v5605, 0
      %v5703 = vsel %vm296, %v5606, 0
      %v5706 = vsel %vm296, %v5607, 0
      %v5709 = vsel %vm296, %v5608, 0
      %v5712 = vsel %vm296, %v5609, 0
      %v5715 = vsel %vm296, %v5610, 0
      %v5718 = vsel %vm296, %v5611, 0
      %v5721 = vsel %vm296, %v5612, 0
      %5723 = vmatpush.msra.mxu0 0.0
      %5724 = vmatpush.msra.mxu0 0.0
      %5725 = vmatpush.msra.mxu0 0.0
      %5726 = vmatpush.msra.mxu0 0.0
      %5727 = vmatpush.msra.mxu0 0.0
      %5728 = vmatpush.msra.mxu0 0.0
      %5729 = vmatpush.msra.mxu0 0.0
      %5730 = vmatpush.msra.mxu0 0.0
      %5731 = vmatpush.msra.mxu0 0.0
      %5732 = vmatpush.msra.mxu0 0.0
      %5733 = vmatpush.msra.mxu0 0.0
      %5734 = vmatpush.msra.mxu0 0.0
      %5735 = vmatpush.msra.mxu0 0.0
      %5736 = vmatpush.msra.mxu0 0.0
      %5737 = vmatpush.msra.mxu0 0.0
      %5738 = vmatpush.msra.mxu0 %v5614
      %5739 = vmatmul.f32.gmra.mxu0 %v5616
      %v5740 = vpop.f32.mrf.mxu0
      %v5741 = vadd.f32 0.0, %v5740
      %5742 = vmatmul.f32.gmra.mxu0 %v5619
      %v5743 = vpop.f32.mrf.mxu0
      %v5744 = vadd.f32 0.0, %v5743
      %5745 = vmatmul.f32.gmra.mxu0 %v5622
      %v5746 = vpop.f32.mrf.mxu0
      %v5747 = vadd.f32 0.0, %v5746
      %5748 = vmatmul.f32.gmra.mxu0 %v5625
      %v5749 = vpop.f32.mrf.mxu0
      %v5750 = vadd.f32 0.0, %v5749
      %5751 = vmatmul.f32.gmra.mxu0 %v5628
      %v5752 = vpop.f32.mrf.mxu0
      %v5753 = vadd.f32 0.0, %v5752
      %5754 = vmatmul.f32.gmra.mxu0 %v5631
      %v5755 = vpop.f32.mrf.mxu0
      %v5756 = vadd.f32 0.0, %v5755
      %5757 = vmatmul.f32.gmra.mxu0 %v5634
      %v5758 = vpop.f32.mrf.mxu0
      %v5759 = vadd.f32 0.0, %v5758
      %5760 = vmatmul.f32.gmra.mxu0 %v5637
      %v5761 = vpop.f32.mrf.mxu0
      %v5762 = vadd.f32 0.0, %v5761
      %5763 = vmatmul.f32.gmra.mxu0 %v5640
      %v5764 = vpop.f32.mrf.mxu0
      %v5765 = vadd.f32 0.0, %v5764
      %5766 = vmatmul.f32.gmra.mxu0 %v5643
      %v5767 = vpop.f32.mrf.mxu0
      %v5768 = vadd.f32 0.0, %v5767
      %5769 = vmatmul.f32.gmra.mxu0 %v5646
      %v5770 = vpop.f32.mrf.mxu0
      %v5771 = vadd.f32 0.0, %v5770
      %5772 = vmatmul.f32.gmra.mxu0 %v5649
      %v5773 = vpop.f32.mrf.mxu0
      %v5774 = vadd.f32 0.0, %v5773
      %5775 = vmatmul.f32.gmra.mxu0 %v5652
      %v5776 = vpop.f32.mrf.mxu0
      %v5777 = vadd.f32 0.0, %v5776
      %5778 = vmatmul.f32.gmra.mxu0 %v5655
      %v5779 = vpop.f32.mrf.mxu0
      %v5780 = vadd.f32 0.0, %v5779
      %5781 = vmatmul.f32.gmra.mxu0 %v5658
      %v5782 = vpop.f32.mrf.mxu0
      %v5783 = vadd.f32 0.0, %v5782
      %5784 = vmatmul.f32.gmra.mxu0 %v5661
      %v5785 = vpop.f32.mrf.mxu0
      %v5786 = vadd.f32 0.0, %v5785
      %5787 = vmatmul.f32.gmra.mxu0 %v5664
      %v5788 = vpop.f32.mrf.mxu0
      %v5789 = vadd.f32 0.0, %v5788
      %5790 = vmatmul.f32.gmra.mxu0 %v5667
      %v5791 = vpop.f32.mrf.mxu0
      %v5792 = vadd.f32 0.0, %v5791
      %5793 = vmatmul.f32.gmra.mxu0 %v5670
      %v5794 = vpop.f32.mrf.mxu0
      %v5795 = vadd.f32 0.0, %v5794
      %5796 = vmatmul.f32.gmra.mxu0 %v5673
      %v5797 = vpop.f32.mrf.mxu0
      %v5798 = vadd.f32 0.0, %v5797
      %5799 = vmatmul.f32.gmra.mxu0 %v5676
      %v5800 = vpop.f32.mrf.mxu0
      %v5801 = vadd.f32 0.0, %v5800
      %5802 = vmatmul.f32.gmra.mxu0 %v5679
      %v5803 = vpop.f32.mrf.mxu0
      %v5804 = vadd.f32 0.0, %v5803
      %5805 = vmatmul.f32.gmra.mxu0 %v5682
      %v5806 = vpop.f32.mrf.mxu0
      %v5807 = vadd.f32 0.0, %v5806
      %5808 = vmatmul.f32.gmra.mxu0 %v5685
      %v5809 = vpop.f32.mrf.mxu0
      %v5810 = vadd.f32 0.0, %v5809
      %5811 = vmatmul.f32.gmra.mxu0 %v5688
      %v5812 = vpop.f32.mrf.mxu0
      %v5813 = vadd.f32 0.0, %v5812
      %5814 = vmatmul.f32.gmra.mxu0 %v5691
      %v5815 = vpop.f32.mrf.mxu0
      %v5816 = vadd.f32 0.0, %v5815
      %5817 = vmatmul.f32.gmra.mxu0 %v5694
      %v5818 = vpop.f32.mrf.mxu0
      %v5819 = vadd.f32 0.0, %v5818
      %5820 = vmatmul.f32.gmra.mxu0 %v5697
      %v5821 = vpop.f32.mrf.mxu0
      %v5822 = vadd.f32 0.0, %v5821
      %5823 = vmatmul.f32.gmra.mxu0 %v5700
      %v5824 = vpop.f32.mrf.mxu0
      %v5825 = vadd.f32 0.0, %v5824
      %5826 = vmatmul.f32.gmra.mxu0 %v5703
      %v5827 = vpop.f32.mrf.mxu0
      %v5828 = vadd.f32 0.0, %v5827
      %5829 = vmatmul.f32.gmra.mxu0 %v5706
      %v5830 = vpop.f32.mrf.mxu0
      %v5831 = vadd.f32 0.0, %v5830
      %5832 = vmatmul.f32.gmra.mxu0 %v5709
      %v5833 = vpop.f32.mrf.mxu0
      %v5834 = vadd.f32 0.0, %v5833
      %5835 = vmatmul.f32.gmra.mxu0 %v5712
      %v5836 = vpop.f32.mrf.mxu0
      %v5837 = vadd.f32 0.0, %v5836
      %5838 = vmatmul.f32.gmra.mxu0 %v5715
      %v5839 = vpop.f32.mrf.mxu0
      %v5840 = vadd.f32 0.0, %v5839
      %5841 = vmatmul.f32.gmra.mxu0 %v5718
      %v5842 = vpop.f32.mrf.mxu0
      %v5843 = vadd.f32 0.0, %v5842
      %5844 = vmatmul.f32.gmra.mxu0 %v5721
      %v5845 = vpop.f32.mrf.mxu0
      %v5846 = vadd.f32 0.0, %v5845
      %5847 = vdwg.mxu0
      %v5848 = vadd.f32 %v5541, %v5741
      %v5849 = vadd.f32 %v5542, %v5744
      %v5850 = vadd.f32 %v5543, %v5747
      %v5851 = vadd.f32 %v5544, %v5750
      %v5852 = vadd.f32 %v5545, %v5753
      %v5853 = vadd.f32 %v5546, %v5756
      %v5854 = vadd.f32 %v5547, %v5759
      %v5855 = vadd.f32 %v5548, %v5762
      %v5856 = vadd.f32 %v5549, %v5765
      %v5857 = vadd.f32 %v5550, %v5768
      %v5858 = vadd.f32 %v5551, %v5771
      %v5859 = vadd.f32 %v5552, %v5774
      %v5860 = vadd.f32 %v5553, %v5777
      %v5861 = vadd.f32 %v5554, %v5780
      %v5862 = vadd.f32 %v5555, %v5783
      %v5863 = vadd.f32 %v5556, %v5786
      %v5864 = vadd.f32 %v5557, %v5789
      %v5865 = vadd.f32 %v5558, %v5792
      %v5866 = vadd.f32 %v5559, %v5795
      %v5867 = vadd.f32 %v5560, %v5798
      %v5868 = vadd.f32 %v5561, %v5801
      %v5869 = vadd.f32 %v5562, %v5804
      %v5870 = vadd.f32 %v5563, %v5807
      %v5871 = vadd.f32 %v5564, %v5810
      %v5872 = vadd.f32 %v5565, %v5813
      %v5873 = vadd.f32 %v5566, %v5816
      %v5874 = vadd.f32 %v5567, %v5819
      %v5875 = vadd.f32 %v5568, %v5822
      %v5876 = vadd.f32 %v5569, %v5825
      %v5877 = vadd.f32 %v5570, %v5828
      %v5878 = vadd.f32 %v5571, %v5831
      %v5879 = vadd.f32 %v5572, %v5834
      %v5880 = vadd.f32 %v5573, %v5837
      %v5881 = vadd.f32 %v5574, %v5840
      %v5882 = vadd.f32 %v5575, %v5843
      %v5883 = vadd.f32 %v5576, %v5846
      %v5884 = vld [vmem:[#allocation3 + $0x26] sm:$0xff]
      %v5885 = vld [vmem:[#allocation3 + $0x2e] sm:$0xff]
      %v5886 = vld [vmem:[#allocation3 + $0x36] sm:$0xff]
      %v5887 = vld [vmem:[#allocation3 + $0x3e] sm:$0xff]
      %v5888 = vld [vmem:[#allocation3 + $0x46] sm:$0xff]
      %v5889 = vld [vmem:[#allocation3 + $0x4e] sm:$0xff]
      %v5890 = vld [vmem:[#allocation3 + $0x56] sm:$0xff]
      %v5891 = vld [vmem:[#allocation3 + $0x5e] sm:$0xff]
      %v5892 = vld [vmem:[#allocation3 + $0x66] sm:$0xff]
      %v5893 = vld [vmem:[#allocation3 + $0x6e] sm:$0xff]
      %v5894 = vld [vmem:[#allocation3 + $0x76] sm:$0xff]
      %v5895 = vld [vmem:[#allocation3 + $0x7e] sm:$0xff]
      %v5896 = vld [vmem:[#allocation3 + $0x86] sm:$0xff]
      %v5897 = vld [vmem:[#allocation3 + $0x8e] sm:$0xff]
      %v5898 = vld [vmem:[#allocation3 + $0x96] sm:$0xff]
      %v5899 = vld [vmem:[#allocation3 + $0x9e] sm:$0xff]
      %v5900 = vld [vmem:[#allocation3 + $0xa6] sm:$0xff]
      %v5901 = vld [vmem:[#allocation3 + $0xae] sm:$0xff]
      %v5902 = vld [vmem:[#allocation3 + $0xb6] sm:$0xff]
      %v5903 = vld [vmem:[#allocation3 + $0xbe] sm:$0xff]
      %v5904 = vld [vmem:[#allocation3 + $0xc6] sm:$0xff]
      %v5905 = vld [vmem:[#allocation3 + $0xce] sm:$0xff]
      %v5906 = vld [vmem:[#allocation3 + $0xd6] sm:$0xff]
      %v5907 = vld [vmem:[#allocation3 + $0xde] sm:$0xff]
      %v5908 = vld [vmem:[#allocation3 + $0xe6] sm:$0xff]
      %v5909 = vld [vmem:[#allocation3 + $0xee] sm:$0xff]
      %v5910 = vld [vmem:[#allocation3 + $0xf6] sm:$0xff]
      %v5911 = vld [vmem:[#allocation3 + $0xfe] sm:$0xff]
      %v5912 = vld [vmem:[#allocation3 + $0x106] sm:$0xff]
      %v5913 = vld [vmem:[#allocation3 + $0x10e] sm:$0xff]
      %v5914 = vld [vmem:[#allocation3 + $0x116] sm:$0xff]
      %v5915 = vld [vmem:[#allocation3 + $0x11e] sm:$0xff]
      %v5916 = vld [vmem:[#allocation3 + $0x126] sm:$0xff]
      %v5917 = vld [vmem:[#allocation3 + $0x12e] sm:$0xff]
      %v5918 = vld [vmem:[#allocation3 + $0x136] sm:$0xff]
      %v5919 = vld [vmem:[#allocation3 + $0x13e] sm:$0xff]
      %s5920 = scalar_lea.vmem %s4, 64
      %v5921 = vld [vmem:[%s5920] sm:$0xff]
      %v5923 = vsel %vm296, %v5884, 0
      %v5926 = vsel %vm296, %v5885, 0
      %v5929 = vsel %vm296, %v5886, 0
      %v5932 = vsel %vm296, %v5887, 0
      %v5935 = vsel %vm296, %v5888, 0
      %v5938 = vsel %vm296, %v5889, 0
      %v5941 = vsel %vm296, %v5890, 0
      %v5944 = vsel %vm296, %v5891, 0
      %v5947 = vsel %vm296, %v5892, 0
      %v5950 = vsel %vm296, %v5893, 0
      %v5953 = vsel %vm296, %v5894, 0
      %v5956 = vsel %vm296, %v5895, 0
      %v5959 = vsel %vm296, %v5896, 0
      %v5962 = vsel %vm296, %v5897, 0
      %v5965 = vsel %vm296, %v5898, 0
      %v5968 = vsel %vm296, %v5899, 0
      %v5971 = vsel %vm296, %v5900, 0
      %v5974 = vsel %vm296, %v5901, 0
      %v5977 = vsel %vm296, %v5902, 0
      %v5980 = vsel %vm296, %v5903, 0
      %v5983 = vsel %vm296, %v5904, 0
      %v5986 = vsel %vm296, %v5905, 0
      %v5989 = vsel %vm296, %v5906, 0
      %v5992 = vsel %vm296, %v5907, 0
      %v5995 = vsel %vm296, %v5908, 0
      %v5998 = vsel %vm296, %v5909, 0
      %v6001 = vsel %vm296, %v5910, 0
      %v6004 = vsel %vm296, %v5911, 0
      %v6007 = vsel %vm296, %v5912, 0
      %v6010 = vsel %vm296, %v5913, 0
      %v6013 = vsel %vm296, %v5914, 0
      %v6016 = vsel %vm296, %v5915, 0
      %v6019 = vsel %vm296, %v5916, 0
      %v6022 = vsel %vm296, %v5917, 0
      %v6025 = vsel %vm296, %v5918, 0
      %v6028 = vsel %vm296, %v5919, 0
      %6030 = vmatpush.msra.mxu0 0.0
      %6031 = vmatpush.msra.mxu0 0.0
      %6032 = vmatpush.msra.mxu0 0.0
      %6033 = vmatpush.msra.mxu0 0.0
      %6034 = vmatpush.msra.mxu0 0.0
      %6035 = vmatpush.msra.mxu0 0.0
      %6036 = vmatpush.msra.mxu0 0.0
      %6037 = vmatpush.msra.mxu0 0.0
      %6038 = vmatpush.msra.mxu0 0.0
      %6039 = vmatpush.msra.mxu0 0.0
      %6040 = vmatpush.msra.mxu0 0.0
      %6041 = vmatpush.msra.mxu0 0.0
      %6042 = vmatpush.msra.mxu0 0.0
      %6043 = vmatpush.msra.mxu0 0.0
      %6044 = vmatpush.msra.mxu0 0.0
      %6045 = vmatpush.msra.mxu0 %v5921
      %6046 = vmatmul.f32.gmra.mxu0 %v5923
      %v6047 = vpop.f32.mrf.mxu0
      %v6048 = vadd.f32 0.0, %v6047
      %6049 = vmatmul.f32.gmra.mxu0 %v5926
      %v6050 = vpop.f32.mrf.mxu0
      %v6051 = vadd.f32 0.0, %v6050
      %6052 = vmatmul.f32.gmra.mxu0 %v5929
      %v6053 = vpop.f32.mrf.mxu0
      %v6054 = vadd.f32 0.0, %v6053
      %6055 = vmatmul.f32.gmra.mxu0 %v5932
      %v6056 = vpop.f32.mrf.mxu0
      %v6057 = vadd.f32 0.0, %v6056
      %6058 = vmatmul.f32.gmra.mxu0 %v5935
      %v6059 = vpop.f32.mrf.mxu0
      %v6060 = vadd.f32 0.0, %v6059
      %6061 = vmatmul.f32.gmra.mxu0 %v5938
      %v6062 = vpop.f32.mrf.mxu0
      %v6063 = vadd.f32 0.0, %v6062
      %6064 = vmatmul.f32.gmra.mxu0 %v5941
      %v6065 = vpop.f32.mrf.mxu0
      %v6066 = vadd.f32 0.0, %v6065
      %6067 = vmatmul.f32.gmra.mxu0 %v5944
      %v6068 = vpop.f32.mrf.mxu0
      %v6069 = vadd.f32 0.0, %v6068
      %6070 = vmatmul.f32.gmra.mxu0 %v5947
      %v6071 = vpop.f32.mrf.mxu0
      %v6072 = vadd.f32 0.0, %v6071
      %6073 = vmatmul.f32.gmra.mxu0 %v5950
      %v6074 = vpop.f32.mrf.mxu0
      %v6075 = vadd.f32 0.0, %v6074
      %6076 = vmatmul.f32.gmra.mxu0 %v5953
      %v6077 = vpop.f32.mrf.mxu0
      %v6078 = vadd.f32 0.0, %v6077
      %6079 = vmatmul.f32.gmra.mxu0 %v5956
      %v6080 = vpop.f32.mrf.mxu0
      %v6081 = vadd.f32 0.0, %v6080
      %6082 = vmatmul.f32.gmra.mxu0 %v5959
      %v6083 = vpop.f32.mrf.mxu0
      %v6084 = vadd.f32 0.0, %v6083
      %6085 = vmatmul.f32.gmra.mxu0 %v5962
      %v6086 = vpop.f32.mrf.mxu0
      %v6087 = vadd.f32 0.0, %v6086
      %6088 = vmatmul.f32.gmra.mxu0 %v5965
      %v6089 = vpop.f32.mrf.mxu0
      %v6090 = vadd.f32 0.0, %v6089
      %6091 = vmatmul.f32.gmra.mxu0 %v5968
      %v6092 = vpop.f32.mrf.mxu0
      %v6093 = vadd.f32 0.0, %v6092
      %6094 = vmatmul.f32.gmra.mxu0 %v5971
      %v6095 = vpop.f32.mrf.mxu0
      %v6096 = vadd.f32 0.0, %v6095
      %6097 = vmatmul.f32.gmra.mxu0 %v5974
      %v6098 = vpop.f32.mrf.mxu0
      %v6099 = vadd.f32 0.0, %v6098
      %6100 = vmatmul.f32.gmra.mxu0 %v5977
      %v6101 = vpop.f32.mrf.mxu0
      %v6102 = vadd.f32 0.0, %v6101
      %6103 = vmatmul.f32.gmra.mxu0 %v5980
      %v6104 = vpop.f32.mrf.mxu0
      %v6105 = vadd.f32 0.0, %v6104
      %6106 = vmatmul.f32.gmra.mxu0 %v5983
      %v6107 = vpop.f32.mrf.mxu0
      %v6108 = vadd.f32 0.0, %v6107
      %6109 = vmatmul.f32.gmra.mxu0 %v5986
      %v6110 = vpop.f32.mrf.mxu0
      %v6111 = vadd.f32 0.0, %v6110
      %6112 = vmatmul.f32.gmra.mxu0 %v5989
      %v6113 = vpop.f32.mrf.mxu0
      %v6114 = vadd.f32 0.0, %v6113
      %6115 = vmatmul.f32.gmra.mxu0 %v5992
      %v6116 = vpop.f32.mrf.mxu0
      %v6117 = vadd.f32 0.0, %v6116
      %6118 = vmatmul.f32.gmra.mxu0 %v5995
      %v6119 = vpop.f32.mrf.mxu0
      %v6120 = vadd.f32 0.0, %v6119
      %6121 = vmatmul.f32.gmra.mxu0 %v5998
      %v6122 = vpop.f32.mrf.mxu0
      %v6123 = vadd.f32 0.0, %v6122
      %6124 = vmatmul.f32.gmra.mxu0 %v6001
      %v6125 = vpop.f32.mrf.mxu0
      %v6126 = vadd.f32 0.0, %v6125
      %6127 = vmatmul.f32.gmra.mxu0 %v6004
      %v6128 = vpop.f32.mrf.mxu0
      %v6129 = vadd.f32 0.0, %v6128
      %6130 = vmatmul.f32.gmra.mxu0 %v6007
      %v6131 = vpop.f32.mrf.mxu0
      %v6132 = vadd.f32 0.0, %v6131
      %6133 = vmatmul.f32.gmra.mxu0 %v6010
      %v6134 = vpop.f32.mrf.mxu0
      %v6135 = vadd.f32 0.0, %v6134
      %6136 = vmatmul.f32.gmra.mxu0 %v6013
      %v6137 = vpop.f32.mrf.mxu0
      %v6138 = vadd.f32 0.0, %v6137
      %6139 = vmatmul.f32.gmra.mxu0 %v6016
      %v6140 = vpop.f32.mrf.mxu0
      %v6141 = vadd.f32 0.0, %v6140
      %6142 = vmatmul.f32.gmra.mxu0 %v6019
      %v6143 = vpop.f32.mrf.mxu0
      %v6144 = vadd.f32 0.0, %v6143
      %6145 = vmatmul.f32.gmra.mxu0 %v6022
      %v6146 = vpop.f32.mrf.mxu0
      %v6147 = vadd.f32 0.0, %v6146
      %6148 = vmatmul.f32.gmra.mxu0 %v6025
      %v6149 = vpop.f32.mrf.mxu0
      %v6150 = vadd.f32 0.0, %v6149
      %6151 = vmatmul.f32.gmra.mxu0 %v6028
      %v6152 = vpop.f32.mrf.mxu0
      %v6153 = vadd.f32 0.0, %v6152
      %6154 = vdwg.mxu0
      %v6155 = vadd.f32 %v5848, %v6048
      %v6156 = vadd.f32 %v5849, %v6051
      %v6157 = vadd.f32 %v5850, %v6054
      %v6158 = vadd.f32 %v5851, %v6057
      %v6159 = vadd.f32 %v5852, %v6060
      %v6160 = vadd.f32 %v5853, %v6063
      %v6161 = vadd.f32 %v5854, %v6066
      %v6162 = vadd.f32 %v5855, %v6069
      %v6163 = vadd.f32 %v5856, %v6072
      %v6164 = vadd.f32 %v5857, %v6075
      %v6165 = vadd.f32 %v5858, %v6078
      %v6166 = vadd.f32 %v5859, %v6081
      %v6167 = vadd.f32 %v5860, %v6084
      %v6168 = vadd.f32 %v5861, %v6087
      %v6169 = vadd.f32 %v5862, %v6090
      %v6170 = vadd.f32 %v5863, %v6093
      %v6171 = vadd.f32 %v5864, %v6096
      %v6172 = vadd.f32 %v5865, %v6099
      %v6173 = vadd.f32 %v5866, %v6102
      %v6174 = vadd.f32 %v5867, %v6105
      %v6175 = vadd.f32 %v5868, %v6108
      %v6176 = vadd.f32 %v5869, %v6111
      %v6177 = vadd.f32 %v5870, %v6114
      %v6178 = vadd.f32 %v5871, %v6117
      %v6179 = vadd.f32 %v5872, %v6120
      %v6180 = vadd.f32 %v5873, %v6123
      %v6181 = vadd.f32 %v5874, %v6126
      %v6182 = vadd.f32 %v5875, %v6129
      %v6183 = vadd.f32 %v5876, %v6132
      %v6184 = vadd.f32 %v5877, %v6135
      %v6185 = vadd.f32 %v5878, %v6138
      %v6186 = vadd.f32 %v5879, %v6141
      %v6187 = vadd.f32 %v5880, %v6144
      %v6188 = vadd.f32 %v5881, %v6147
      %v6189 = vadd.f32 %v5882, %v6150
      %v6190 = vadd.f32 %v5883, %v6153
      %v6191 = vld [vmem:[%s5] sm:$0x1]
      %v6193 = vperm.slane %v6191, 0
      %v6195 = vadd.f32 %v6155, %v6193
      %v6196 = vadd.f32 %v6156, %v6193
      %v6197 = vadd.f32 %v6157, %v6193
      %v6198 = vadd.f32 %v6158, %v6193
      %v6199 = vadd.f32 %v6159, %v6193
      %v6200 = vadd.f32 %v6160, %v6193
      %v6201 = vadd.f32 %v6161, %v6193
      %v6202 = vadd.f32 %v6162, %v6193
      %v6203 = vadd.f32 %v6163, %v6193
      %v6204 = vadd.f32 %v6164, %v6193
      %v6205 = vadd.f32 %v6165, %v6193
      %v6206 = vadd.f32 %v6166, %v6193
      %v6207 = vadd.f32 %v6167, %v6193
      %v6208 = vadd.f32 %v6168, %v6193
      %v6209 = vadd.f32 %v6169, %v6193
      %v6210 = vadd.f32 %v6170, %v6193
      %v6211 = vadd.f32 %v6171, %v6193
      %v6212 = vadd.f32 %v6172, %v6193
      %v6213 = vadd.f32 %v6173, %v6193
      %v6214 = vadd.f32 %v6174, %v6193
      %v6215 = vadd.f32 %v6175, %v6193
      %v6216 = vadd.f32 %v6176, %v6193
      %v6217 = vadd.f32 %v6177, %v6193
      %v6218 = vadd.f32 %v6178, %v6193
      %v6219 = vadd.f32 %v6179, %v6193
      %v6220 = vadd.f32 %v6180, %v6193
      %v6221 = vadd.f32 %v6181, %v6193
      %v6222 = vadd.f32 %v6182, %v6193
      %v6223 = vadd.f32 %v6183, %v6193
      %v6224 = vadd.f32 %v6184, %v6193
      %v6225 = vadd.f32 %v6185, %v6193
      %v6226 = vadd.f32 %v6186, %v6193
      %v6227 = vadd.f32 %v6187, %v6193
      %v6228 = vadd.f32 %v6188, %v6193
      %v6229 = vadd.f32 %v6189, %v6193
      %v6230 = vadd.f32 %v6190, %v6193
      %v6231 = vmax.f32 %v6195, 0.0
      %v6232 = vmax.f32 %v6196, 0.0
      %v6233 = vmax.f32 %v6197, 0.0
      %v6234 = vmax.f32 %v6198, 0.0
      %v6235 = vmax.f32 %v6199, 0.0
      %v6236 = vmax.f32 %v6200, 0.0
      %v6237 = vmax.f32 %v6201, 0.0
      %v6238 = vmax.f32 %v6202, 0.0
      %v6239 = vmax.f32 %v6203, 0.0
      %v6240 = vmax.f32 %v6204, 0.0
      %v6241 = vmax.f32 %v6205, 0.0
      %v6242 = vmax.f32 %v6206, 0.0
      %v6243 = vmax.f32 %v6207, 0.0
      %v6244 = vmax.f32 %v6208, 0.0
      %v6245 = vmax.f32 %v6209, 0.0
      %v6246 = vmax.f32 %v6210, 0.0
      %v6247 = vmax.f32 %v6211, 0.0
      %v6248 = vmax.f32 %v6212, 0.0
      %v6249 = vmax.f32 %v6213, 0.0
      %v6250 = vmax.f32 %v6214, 0.0
      %v6251 = vmax.f32 %v6215, 0.0
      %v6252 = vmax.f32 %v6216, 0.0
      %v6253 = vmax.f32 %v6217, 0.0
      %v6254 = vmax.f32 %v6218, 0.0
      %v6255 = vmax.f32 %v6219, 0.0
      %v6256 = vmax.f32 %v6220, 0.0
      %v6257 = vmax.f32 %v6221, 0.0
      %v6258 = vmax.f32 %v6222, 0.0
      %v6259 = vmax.f32 %v6223, 0.0
      %v6260 = vmax.f32 %v6224, 0.0
      %v6261 = vmax.f32 %v6225, 0.0
      %v6262 = vmax.f32 %v6226, 0.0
      %v6263 = vmax.f32 %v6227, 0.0
      %v6264 = vmax.f32 %v6228, 0.0
      %v6265 = vmax.f32 %v6229, 0.0
      %v6266 = vmax.f32 %v6230, 0.0
      %6267 = vst.msk [vmem:[%s251] sm:$0xff] %vm296, %v6231
      %6268 = vst.msk [vmem:[%s251 + $0x8] sm:$0xff] %vm296, %v6232
      %s6269 = scalar_lea.vmem %s251, 16
      %vm6270 = vcmask 64514
      %6271 = vst.msk [vmem:[%s6269 - $0x2] sm:$0xfc] %vm6270, %v6233
      %6272 = vst.msk [vmem:[%s6269 + $0x6] sm:$0xff] %vm296, %v6234
      %vm6273 = vcmask 58368
      %6274 = vst.msk [vmem:[%s6269 + $0xe] sm:$0x3] %vm6273, %v6235
      %s6275 = scalar_lea.vmem %s251, 32
      %vm6276 = vcmask 64516
      %6277 = vst.msk [vmem:[%s6275 - $0x4] sm:$0xf0] %vm6276, %v6235
      %6278 = vst.msk [vmem:[%s6275 + $0x4] sm:$0xff] %vm296, %v6236
      %6279 = vst.msk [vmem:[%s6275 + $0xc] sm:$0xf] %vm338, %v6237
      %s6280 = scalar_lea.vmem %s251, 48
      %vm6281 = vcmask 64518
      %6282 = vst.msk [vmem:[%s6280 - $0x6] sm:$0xc0] %vm6281, %v6237
      %6283 = vst.msk [vmem:[%s6280 + $0x2] sm:$0xff] %vm296, %v6238
      %vm6284 = vcmask 62464
      %6285 = vst.msk [vmem:[%s6280 + $0xa] sm:$0x3f] %vm6284, %v6239
      %s6286 = scalar_lea.vmem %s251, 64
      %6287 = vst.msk [vmem:[%s6286] sm:$0xff] %vm296, %v6240
      %6288 = vst.msk [vmem:[%s6286 + $0x8] sm:$0xff] %vm296, %v6241
      %s6289 = scalar_lea.vmem %s251, 80
      %6290 = vst.msk [vmem:[%s6289 - $0x2] sm:$0xfc] %vm6270, %v6242
      %6291 = vst.msk [vmem:[%s6289 + $0x6] sm:$0xff] %vm296, %v6243
      %6292 = vst.msk [vmem:[%s6289 + $0xe] sm:$0x3] %vm6273, %v6244
      %s6293 = scalar_lea.vmem %s251, 96
      %6294 = vst.msk [vmem:[%s6293 - $0x4] sm:$0xf0] %vm6276, %v6244
      %6295 = vst.msk [vmem:[%s6293 + $0x4] sm:$0xff] %vm296, %v6245
      %6296 = vst.msk [vmem:[%s6293 + $0xc] sm:$0xf] %vm338, %v6246
      %s6297 = scalar_lea.vmem %s251, 112
      %6298 = vst.msk [vmem:[%s6297 - $0x6] sm:$0xc0] %vm6281, %v6246
      %6299 = vst.msk [vmem:[%s6297 + $0x2] sm:$0xff] %vm296, %v6247
      %6300 = vst.msk [vmem:[%s6297 + $0xa] sm:$0x3f] %vm6284, %v6248
      %s6301 = scalar_lea.vmem %s251, 128
      %6302 = vst.msk [vmem:[%s6301] sm:$0xff] %vm296, %v6249
      %6303 = vst.msk [vmem:[%s6301 + $0x8] sm:$0xff] %vm296, %v6250
      %s6304 = scalar_lea.vmem %s251, 144
      %6305 = vst.msk [vmem:[%s6304 - $0x2] sm:$0xfc] %vm6270, %v6251
      %6306 = vst.msk [vmem:[%s6304 + $0x6] sm:$0xff] %vm296, %v6252
      %6307 = vst.msk [vmem:[%s6304 + $0xe] sm:$0x3] %vm6273, %v6253
      %s6308 = scalar_lea.vmem %s251, 160
      %6309 = vst.msk [vmem:[%s6308 - $0x4] sm:$0xf0] %vm6276, %v6253
      %6310 = vst.msk [vmem:[%s6308 + $0x4] sm:$0xff] %vm296, %v6254
      %6311 = vst.msk [vmem:[%s6308 + $0xc] sm:$0xf] %vm338, %v6255
      %s6312 = scalar_lea.vmem %s251, 176
      %6313 = vst.msk [vmem:[%s6312 - $0x6] sm:$0xc0] %vm6281, %v6255
      %6314 = vst.msk [vmem:[%s6312 + $0x2] sm:$0xff] %vm296, %v6256
      %6315 = vst.msk [vmem:[%s6312 + $0xa] sm:$0x3f] %vm6284, %v6257
      %s6316 = scalar_lea.vmem %s251, 192
      %6317 = vst.msk [vmem:[%s6316] sm:$0xff] %vm296, %v6258
      %6318 = vst.msk [vmem:[%s6316 + $0x8] sm:$0xff] %vm296, %v6259
      %s6319 = scalar_lea.vmem %s251, 208
      %6320 = vst.msk [vmem:[%s6319 - $0x2] sm:$0xfc] %vm6270, %v6260
      %6321 = vst.msk [vmem:[%s6319 + $0x6] sm:$0xff] %vm296, %v6261
      %6322 = vst.msk [vmem:[%s6319 + $0xe] sm:$0x3] %vm6273, %v6262
      %s6323 = scalar_lea.vmem %s251, 224
      %6324 = vst.msk [vmem:[%s6323 - $0x4] sm:$0xf0] %vm6276, %v6262
      %6325 = vst.msk [vmem:[%s6323 + $0x4] sm:$0xff] %vm296, %v6263
      %6326 = vst.msk [vmem:[%s6323 + $0xc] sm:$0xf] %vm338, %v6264
      %s6327 = scalar_lea.vmem %s251, 240
      %6328 = vst.msk [vmem:[%s6327 - $0x6] sm:$0xc0] %vm6281, %v6264
      %6329 = vst.msk [vmem:[%s6327 + $0x2] sm:$0xff] %vm296, %v6265
      %6330 = vst.msk [vmem:[%s6327 + $0xa] sm:$0x3f] %vm6284, %v6266
      %p6331 = scmp.lt.s32.totalorder %s17, 1
      %s6332 = scalar_select %p6331, %s17, 1
      %s6333 = smul.addr %s6332, 32
      %s6334 = smul.addr %s6333, 8
      %s6335 = scalar_lea.vmem %s6, %s6334
      // Predicated region
      $region45: #{double_conv_forward.1} parent=43 // pred_check
        %p6336 = pneg %p166
      $region46: #{double_conv_forward.1} parent=43 // pred_check_branch
        %6338 = sbr.rel (%p6336) target = $region48
      $region47: #{double_conv_forward.1} parent=43 // pred_region
        _
      $region48: #{double_conv_forward.1} parent=43 // pred_fallthru
        _
    $region44: #{double_conv_forward.1} parent=5 // pred_fallthru
      _
    %p6339 = scmp.le.s32.totalorder 2, %s12
    // Predicated region
    $region49: #{double_conv_forward.1} parent=5 // pred_check
      %p6340 = pneg %p6339
    $region50: #{double_conv_forward.1} parent=5 // pred_check_branch
      %6342 = sbr.rel (%p6340) target = $region52
    $region51: #{double_conv_forward.1} parent=5 // pred_region
      %s6343 = ssub.s32 %s12, 2
      // Predicated region
      $region53: #{double_conv_forward.1} parent=51 // pred_check
        %p6344 = pneg %p172
      $region54: #{double_conv_forward.1} parent=51 // pred_check_branch
        %6346 = sbr.rel (%p6344) target = $region56
      $region55: #{double_conv_forward.1} parent=51 // pred_region
        %p6347 = scmp.lt.s32.totalorder %s18, 1
        %s6348 = scalar_select %p6347, %s18, 1
        %s6349 = smul.addr %s6348, 32
        %s6350 = smul.addr %s6349, 8
        %s6351 = scalar_lea.vmem %s6, %s6350
      $region56: #{double_conv_forward.1} parent=51 // pred_fallthru
        _
    $region52: #{double_conv_forward.1} parent=5 // pred_fallthru
      _
  $region6: #{double_conv_forward.1} parent=0 // loop_footer
    %s16 = sadd.s32 1, %s12
  $region7: #{double_conv_forward.1} parent=0 // loop_footer_branch
    %11 = sbr.rel target = $region3
  $region8: #{double_conv_forward.1} parent=0 // loop_exit
    _

</llo_original>
